<compile_context>
chip_gen: v7x
topology: tpu7x:2x2x1
jax: 0.10.0
libtpu: 0.0.40
codegen_flags: <defaults>
</compile_context>

<pallas_src>
import functools
from collections import namedtuple

import jax
import jax.numpy as jnp
from jax.experimental import pallas as pl
from jax.experimental.pallas import tpu as pltpu

SPATIAL_FEAT_DIM = 32
NHID = 128
KERNEL_SIZE = 7
LEVELS = 8
NUM_OUT = 4

# Static (hashable) packing metadata -> passed to jit as a static arg.
LevelMeta = namedtuple("LevelMeta",
                       ["offsets", "w1_off", "w2_off", "wd_off",
                        "b1_row", "b2_row", "bd_row"])
Meta = namedtuple("Meta", ["seq_len", "levels", "eng_w_off",
                           "feat_b_row", "eng_b_row"])


def _active_taps(dilation, seq_len):
    """Static list of (tap index, causal left offset) with offset < seq_len."""
    taps = [(k, (KERNEL_SIZE - 1 - k) * dilation) for k in range(KERNEL_SIZE)]
    return [(k, off) for k, off in taps if off < seq_len]


# ---------------------------------------------------------------------------
# Fused kernel: per-frame features + 8 TCN temporal blocks + head.
# Bblk batch elements per grid step; grid axis is "parallel" (megacore on v7x).
# ---------------------------------------------------------------------------
def _shift_time(h, off):
    """Causal time shift on a (Bblk, T, C) block: row t becomes row t-off of the
    same batch element (zeros for t < off)."""
    if off == 0:
        return h
    bb, t, c = h.shape
    return jnp.concatenate(
        [jnp.zeros((bb, off, c), h.dtype), h[:, : t - off, :]], axis=1)


def _conv_relu(h, w_ref, b_ref, offsets, w_off, b_row):
    """Dilated causal conv over statically-active taps + bias + ReLU.

    h:      (Bblk, T, 128) bf16
    return: (Bblk*T, 128) f32
    Per-tap (M,128)@(128,128) dots accumulated in f32 (no wide im2col temp).
    """
    bb, t, c = h.shape
    acc = None
    for i, off in enumerate(offsets):
        xs = _shift_time(h, off).reshape(bb * t, c)
        w = w_ref[w_off + i * c:w_off + (i + 1) * c, :]
        term = jnp.dot(xs, w, preferred_element_type=jnp.float32)
        acc = term if acc is None else acc + term
    return jnp.maximum(acc + b_ref[b_row:b_row + 1, :], 0.0)


def _fused_kernel(x_ref, fw_ref, w_ref, b_ref, o_ref, *, meta):
    bblk, t, chw = x_ref.shape
    c = NHID

    # 1) Per-frame features: H*W mean-pool folded into the Linear, ReLU.
    #    Output is zero-padded 32 -> 128 columns at prepare time.
    x = x_ref[...].reshape(bblk * t, chw)                              # bf16
    h_f32 = jnp.maximum(
        jnp.dot(x, fw_ref[...], preferred_element_type=jnp.float32)
        + b_ref[meta.feat_b_row:meta.feat_b_row + 1, :], 0.0)          # (M, 128)
    h = h_f32.astype(jnp.bfloat16).reshape(bblk, t, c)

    # 2) TCN temporal blocks; activations stay in VMEM/vregs across all levels.
    for lm in meta.levels:
        h_in = h
        h1 = _conv_relu(h_in, w_ref, b_ref, lm.offsets, lm.w1_off, lm.b1_row)
        h1 = h1.astype(jnp.bfloat16).reshape(bblk, t, c)
        h2 = _conv_relu(h1, w_ref, b_ref, lm.offsets, lm.w2_off, lm.b2_row)
        if lm.wd_off >= 0:  # 1x1 downsample on the residual (level 0 only)
            res = (jnp.dot(h_in.reshape(bblk * t, c),
                           w_ref[lm.wd_off:lm.wd_off + c, :],
                           preferred_element_type=jnp.float32)
                   + b_ref[lm.bd_row:lm.bd_row + 1, :])
        else:
            res = h_in.reshape(bblk * t, c).astype(jnp.float32)
        h_f32 = jnp.maximum(h2 + res, 0.0)                             # (M, 128)
        h = h_f32.astype(jnp.bfloat16).reshape(bblk, t, c)

    # 3) Head: sum over time, Linear(128 -> 4) zero-padded to 128 output lanes
    #    so the store is lane-dense (wrapper slices [:, :4]).
    s = jnp.sum(h_f32.reshape(bblk, t, c), axis=1)                     # (Bblk, 128)
    out = (jnp.dot(s.astype(jnp.bfloat16),
                   w_ref[meta.eng_w_off:meta.eng_w_off + c, :],
                   preferred_element_type=jnp.float32)
           + b_ref[meta.eng_b_row:meta.eng_b_row + 1, :])
    o_ref[...] = out.reshape(bblk, 1, c)


# ---------------------------------------------------------------------------
# Parameters (deterministic synthetic init), weight pre-packing, forward.
# ---------------------------------------------------------------------------
def init_params(key, cimg):
    keys = jax.random.split(key, 4 + 4 * LEVELS)
    ki = iter(keys)
    scale = 0.02
    params = {
        "feat_w": jax.random.normal(next(ki), (cimg, SPATIAL_FEAT_DIM), jnp.float32) * scale,
        "feat_b": jnp.zeros((1, SPATIAL_FEAT_DIM), jnp.float32),
        "eng_w": jax.random.normal(next(ki), (NHID, NUM_OUT), jnp.float32) * scale,
        "eng_b": jnp.zeros((1, NUM_OUT), jnp.float32),
        "blocks": [],
    }
    for lvl in range(LEVELS):
        cin = SPATIAL_FEAT_DIM if lvl == 0 else NHID
        cout = NHID
        blk = {
            "w1": jax.random.normal(next(ki), (KERNEL_SIZE, cin, cout), jnp.float32) * scale,
            "b1": jnp.full((1, cout), 0.01, jnp.float32),
            "w2": jax.random.normal(next(ki), (KERNEL_SIZE, cout, cout), jnp.float32) * scale,
            "b2": jnp.full((1, cout), 0.01, jnp.float32),
        }
        if cin != cout:  # downsample 1x1 conv only where channels change (level 0)
            blk["wd"] = jax.random.normal(next(ki), (cin, cout), jnp.float32) * scale
            blk["bd"] = jnp.zeros((1, cout), jnp.float32)
        params["blocks"].append(blk)
    return params


def prepare_params(params, seq_len, hw):
    """One-time (outside jit) weight packing for the fused kernel:
       - fold the H*W mean-pool into the feature Linear; zero-pad its 32 output
         columns (and level-0 conv/downsample input rows) to 128,
       - keep only causally-active conv taps (offset < seq_len),
       - pack ALL conv/downsample/head weights into one (R, 128) bf16 slab and
         all biases into one (Rb, 128) f32 slab, recording static offsets,
       - zero-pad the 4-wide head weight to 128 columns (lane-dense output)."""
    c = NHID
    pad_feat = c - SPATIAL_FEAT_DIM

    fw = jnp.repeat(params["feat_w"] / float(hw), hw, axis=0)          # (CHW, 32)
    feat_w = jnp.pad(fw, ((0, 0), (0, pad_feat))).astype(jnp.bfloat16)

    w_pieces, b_pieces, level_meta = [], [], []
    w_rows = 0

    def add_w(arr):
        nonlocal w_rows
        off = w_rows
        w_pieces.append(arr.astype(jnp.bfloat16))
        w_rows += arr.shape[0]
        return off

    def add_b(arr):
        b_pieces.append(arr.astype(jnp.float32))
        return len(b_pieces) - 1

    feat_b_row = add_b(jnp.pad(params["feat_b"], ((0, 0), (0, pad_feat))))

    for lvl, blk in enumerate(params["blocks"]):
        taps = _active_taps(2 ** lvl, seq_len)
        offsets = tuple(off for _, off in taps)

        def pack_conv(w, taps=taps):
            pieces = []
            for k, _ in taps:
                wk = w[k]                                              # (cin, 128)
                if wk.shape[0] < c:                                    # pad 32 -> 128
                    wk = jnp.pad(wk, ((0, c - wk.shape[0]), (0, 0)))
                pieces.append(wk)
            return jnp.concatenate(pieces, axis=0)

        w1_off = add_w(pack_conv(blk["w1"]))
        w2_off = add_w(pack_conv(blk["w2"]))
        b1_row = add_b(blk["b1"])
        b2_row = add_b(blk["b2"])
        if "wd" in blk:
            wd = blk["wd"]
            if wd.shape[0] < c:
                wd = jnp.pad(wd, ((0, c - wd.shape[0]), (0, 0)))
            wd_off = add_w(wd)
            bd_row = add_b(blk["bd"])
        else:
            wd_off, bd_row = -1, -1
        level_meta.append(LevelMeta(offsets, w1_off, w2_off, wd_off,
                                    b1_row, b2_row, bd_row))

    eng_w_off = add_w(jnp.pad(params["eng_w"], ((0, 0), (0, c - NUM_OUT))))
    eng_b_row = add_b(jnp.pad(params["eng_b"], ((0, 0), (0, c - NUM_OUT))))

    meta = Meta(seq_len=int(seq_len), levels=tuple(level_meta),
                eng_w_off=eng_w_off, feat_b_row=feat_b_row, eng_b_row=eng_b_row)
    return {
        "feat_w": feat_w,
        "w_slab": jnp.concatenate(w_pieces, axis=0),
        "b_slab": jnp.concatenate(b_pieces, axis=0),
        "meta": meta,
    }


@functools.partial(jax.jit, static_argnames=("meta",))
def _forward_impl(x, feat_w, w_slab, b_slab, *, meta):
    b, t, cimg, hh, ww = x.shape
    chw = cimg * hh * ww
    # bf16 input: halves the input DMA bytes (matters on v5e HBM / v7x VMEM).
    x_flat = x.reshape(b, t, chw).astype(jnp.bfloat16)

    # Batch-block the grid so every matmul runs at M ~ Bblk*T rows, while keeping
    # >= 2 grid steps when possible so v7x's two TensorCores both get work.
    bblk = max(1, min(b, 256 // max(t, 1)))
    while b % bblk:
        bblk -= 1
    if b // bblk == 1 and b >= 2 and b % 2 == 0:
        bblk = b // 2
    grid = (b // bblk,)

    bytes_x_blk = bblk * t * chw * 2
    bytes_out_blk = bblk * NHID * 4
    bytes_w = feat_w.size * 2 + w_slab.size * 2 + b_slab.size * 4
    vmem_limit = int(min(48 << 20,
                         max(16 << 20,
                             2 * (bytes_x_blk + bytes_out_blk + bytes_w) + (8 << 20))))

    flops = 2 * b * t * chw * NHID + 2 * b * NHID * NHID
    for lm in meta.levels:
        flops += 2 * 2 * b * t * len(lm.offsets) * NHID * NHID
        if lm.wd_off >= 0:
            flops += 2 * b * t * NHID * NHID
    cost = pl.CostEstimate(flops=flops, transcendentals=0,
                           bytes_accessed=x_flat.size * 2 + bytes_w + b * NHID * 4)

    out = pl.pallas_call(
        functools.partial(_fused_kernel, meta=meta),
        out_shape=jax.ShapeDtypeStruct((b, 1, NHID), jnp.float32),
        grid=grid,
        in_specs=[
            pl.BlockSpec((bblk, t, chw), lambda i: (i, 0, 0)),
            pl.BlockSpec(feat_w.shape, lambda i: (0, 0)),
            pl.BlockSpec(w_slab.shape, lambda i: (0, 0)),
            pl.BlockSpec(b_slab.shape, lambda i: (0, 0)),
        ],
        out_specs=pl.BlockSpec((bblk, 1, NHID), lambda i: (i, 0, 0)),
        compiler_params=pltpu.CompilerParams(
            dimension_semantics=("parallel",),   # batch blocks across v7x TCs
            vmem_limit_bytes=vmem_limit,
        ),
        cost_estimate=cost,
    )(x_flat, feat_w, w_slab, b_slab)
    # Lane-dense (128-wide) output block; real head is the first 4 columns.
    return out.reshape(b, NHID)[:, :NUM_OUT]


def emonet_tcn_forward(x, prep):
    """x: (B, T, Cimg, H, W) float32 -> (B, 4) float32."""
    meta = prep["meta"]
    assert x.shape[1] == meta.seq_len, (
        f"prepare_params packed active taps for seq_len={meta.seq_len}, "
        f"got T={x.shape[1]}")
    assert x.shape[2] * x.shape[3] * x.shape[4] == prep["feat_w"].shape[0], \
        "feature weight was packed for a different Cimg*H*W"
    return _forward_impl(x, prep["feat_w"], prep["w_slab"], prep["b_slab"],
                         meta=meta)


if __name__ == "__main__":
    B, T, CIMG, H, W = 2, 8, 4, 16, 16
    key = jax.random.PRNGKey(0)
    kx, kp = jax.random.split(key)
    x = jax.random.normal(kx, (B, T, CIMG, H, W), jnp.float32)
    params = init_params(kp, CIMG)
    prep = prepare_params(params, T, H * W)
    out = emonet_tcn_forward(x, prep)
    out = jax.block_until_ready(out)
    assert out.shape == (B, NUM_OUT)
    assert bool(jnp.all(jnp.isfinite(out)))
    print("KERNEL_OK")
</pallas_src>

<mosaic_0001>
module attributes {stable_mosaic.version = 11 : i64} {
  func.func @_fused_kernel(%arg0: i32, %arg1: memref<1x8x1024xbf16, #tpu.memory_space<vmem>>, %arg2: memref<1024x128xbf16, #tpu.memory_space<vmem>>, %arg3: memref<4864x128xbf16, #tpu.memory_space<vmem>>, %arg4: memref<19x128xf32, #tpu.memory_space<vmem>>, %arg5: memref<1x1x128xf32, #tpu.memory_space<vmem>>) attributes {dimension_semantics = [#tpu.dimension_semantics<parallel>], iteration_bounds = array<i64: 2>, scalar_prefetch = 0 : i64, scratch_operands = 0 : i64, tpu.core_type = #tpu.core_type<tc>, window_params = [{transform_indices = @transform_0, window_bounds = array<i64: 1, 8, 1024>}, {pipeline_mode = #tpu.pipeline_mode<synchronous>, transform_indices = @transform_1, window_bounds = array<i64: 1024, 128>}, {pipeline_mode = #tpu.pipeline_mode<synchronous>, transform_indices = @transform_2, window_bounds = array<i64: 4864, 128>}, {pipeline_mode = #tpu.pipeline_mode<synchronous>, transform_indices = @transform_3, window_bounds = array<i64: 19, 128>}, {transform_indices = @transform_4, window_bounds = array<i64: 1, 1, 128>}]} {
    %c0 = arith.constant 0 : index
    %c0_0 = arith.constant 0 : index
    %c0_1 = arith.constant 0 : index
    %0 = vector.load %arg1[%c0, %c0_0, %c0_1] : memref<1x8x1024xbf16, #tpu.memory_space<vmem>>, vector<1x8x1024xbf16>
    %1 = vector.shape_cast %0 : vector<1x8x1024xbf16> to vector<8x1024xbf16>
    %c0_2 = arith.constant 0 : index
    %c0_3 = arith.constant 0 : index
    %2 = vector.load %arg2[%c0_2, %c0_3] : memref<1024x128xbf16, #tpu.memory_space<vmem>>, vector<1024x128xbf16>
    %cst = arith.constant dense<0.000000e+00> : vector<8x128xf32>
    %3 = tpu.matmul %1, %2, %cst {dimension_numbers = #tpu.dot_dimension_numbers<[1], [0], [0], [1], [0, 0, 1, 1], [], []>} : vector<8x1024xbf16>, vector<1024x128xbf16>, vector<8x128xf32> -> vector<8x128xf32>
    %c0_4 = arith.constant 0 : index
    %c0_5 = arith.constant 0 : index
    %4 = vector.load %arg4[%c0_4, %c0_5] : memref<19x128xf32, #tpu.memory_space<vmem>>, vector<1x128xf32>
    %5 = vector.broadcast %4 : vector<1x128xf32> to vector<8x128xf32>
    %6 = arith.addf %3, %5 : vector<8x128xf32>
    %cst_6 = arith.constant 0.000000e+00 : f32
    %7 = vector.broadcast %cst_6 : f32 to vector<8x128xf32>
    %8 = arith.maximumf %6, %7 : vector<8x128xf32>
    %9 = arith.truncf %8 : vector<8x128xf32> to vector<8x128xbf16>
    %10 = vector.shape_cast %9 : vector<8x128xbf16> to vector<1x8x128xbf16>
    %cst_7 = arith.constant 0.000000e+00 : bf16
    %11 = vector.broadcast %cst_7 : bf16 to vector<1x6x128xbf16>
    %12 = vector.extract_strided_slice %10 {offsets = [0, 0, 0], sizes = [1, 2, 128], strides = [1, 1, 1]} : vector<1x8x128xbf16> to vector<1x2x128xbf16>
    %13 = tpu.concatenate %11, %12 in 1 : vector<1x6x128xbf16>, vector<1x2x128xbf16> -> vector<1x8x128xbf16>
    %14 = vector.shape_cast %13 : vector<1x8x128xbf16> to vector<8x128xbf16>
    %c0_8 = arith.constant 0 : index
    %c0_9 = arith.constant 0 : index
    %15 = vector.load %arg3[%c0_8, %c0_9] : memref<4864x128xbf16, #tpu.memory_space<vmem>>, vector<128x128xbf16>
    %cst_10 = arith.constant dense<0.000000e+00> : vector<8x128xf32>
    %16 = tpu.matmul %14, %15, %cst_10 {dimension_numbers = #tpu.dot_dimension_numbers<[1], [0], [0], [1], [0, 0, 1, 1], [], []>} : vector<8x128xbf16>, vector<128x128xbf16>, vector<8x128xf32> -> vector<8x128xf32>
    %cst_11 = arith.constant 0.000000e+00 : bf16
    %17 = vector.broadcast %cst_11 : bf16 to vector<1x5x128xbf16>
    %18 = vector.extract_strided_slice %10 {offsets = [0, 0, 0], sizes = [1, 3, 128], strides = [1, 1, 1]} : vector<1x8x128xbf16> to vector<1x3x128xbf16>
    %19 = tpu.concatenate %17, %18 in 1 : vector<1x5x128xbf16>, vector<1x3x128xbf16> -> vector<1x8x128xbf16>
    %20 = vector.shape_cast %19 : vector<1x8x128xbf16> to vector<8x128xbf16>
    %c128 = arith.constant 128 : index
    %c0_12 = arith.constant 0 : index
    %21 = vector.load %arg3[%c128, %c0_12] : memref<4864x128xbf16, #tpu.memory_space<vmem>>, vector<128x128xbf16>
    %cst_13 = arith.constant dense<0.000000e+00> : vector<8x128xf32>
    %22 = tpu.matmul %20, %21, %cst_13 {dimension_numbers = #tpu.dot_dimension_numbers<[1], [0], [0], [1], [0, 0, 1, 1], [], []>} : vector<8x128xbf16>, vector<128x128xbf16>, vector<8x128xf32> -> vector<8x128xf32>
    %23 = arith.addf %16, %22 : vector<8x128xf32>
    %cst_14 = arith.constant 0.000000e+00 : bf16
    %24 = vector.broadcast %cst_14 : bf16 to vector<1x4x128xbf16>
    %25 = vector.extract_strided_slice %10 {offsets = [0, 0, 0], sizes = [1, 4, 128], strides = [1, 1, 1]} : vector<1x8x128xbf16> to vector<1x4x128xbf16>
    %26 = tpu.concatenate %24, %25 in 1 : vector<1x4x128xbf16>, vector<1x4x128xbf16> -> vector<1x8x128xbf16>
    %27 = vector.shape_cast %26 : vector<1x8x128xbf16> to vector<8x128xbf16>
    %c256 = arith.constant 256 : index
    %c0_15 = arith.constant 0 : index
    %28 = vector.load %arg3[%c256, %c0_15] : memref<4864x128xbf16, #tpu.memory_space<vmem>>, vector<128x128xbf16>
    %cst_16 = arith.constant dense<0.000000e+00> : vector<8x128xf32>
    %29 = tpu.matmul %27, %28, %cst_16 {dimension_numbers = #tpu.dot_dimension_numbers<[1], [0], [0], [1], [0, 0, 1, 1], [], []>} : vector<8x128xbf16>, vector<128x128xbf16>, vector<8x128xf32> -> vector<8x128xf32>
    %30 = arith.addf %23, %29 : vector<8x128xf32>
    %cst_17 = arith.constant 0.000000e+00 : bf16
    %31 = vector.broadcast %cst_17 : bf16 to vector<1x3x128xbf16>
    %32 = vector.extract_strided_slice %10 {offsets = [0, 0, 0], sizes = [1, 5, 128], strides = [1, 1, 1]} : vector<1x8x128xbf16> to vector<1x5x128xbf16>
    %33 = tpu.concatenate %31, %32 in 1 : vector<1x3x128xbf16>, vector<1x5x128xbf16> -> vector<1x8x128xbf16>
    %34 = vector.shape_cast %33 : vector<1x8x128xbf16> to vector<8x128xbf16>
    %c384 = arith.constant 384 : index
    %c0_18 = arith.constant 0 : index
    %35 = vector.load %arg3[%c384, %c0_18] : memref<4864x128xbf16, #tpu.memory_space<vmem>>, vector<128x128xbf16>
    %cst_19 = arith.constant dense<0.000000e+00> : vector<8x128xf32>
    %36 = tpu.matmul %34, %35, %cst_19 {dimension_numbers = #tpu.dot_dimension_numbers<[1], [0], [0], [1], [0, 0, 1, 1], [], []>} : vector<8x128xbf16>, vector<128x128xbf16>, vector<8x128xf32> -> vector<8x128xf32>
    %37 = arith.addf %30, %36 : vector<8x128xf32>
    %cst_20 = arith.constant 0.000000e+00 : bf16
    %38 = vector.broadcast %cst_20 : bf16 to vector<1x2x128xbf16>
    %39 = vector.extract_strided_slice %10 {offsets = [0, 0, 0], sizes = [1, 6, 128], strides = [1, 1, 1]} : vector<1x8x128xbf16> to vector<1x6x128xbf16>
    %40 = tpu.concatenate %38, %39 in 1 : vector<1x2x128xbf16>, vector<1x6x128xbf16> -> vector<1x8x128xbf16>
    %41 = vector.shape_cast %40 : vector<1x8x128xbf16> to vector<8x128xbf16>
    %c512 = arith.constant 512 : index
    %c0_21 = arith.constant 0 : index
    %42 = vector.load %arg3[%c512, %c0_21] : memref<4864x128xbf16, #tpu.memory_space<vmem>>, vector<128x128xbf16>
    %cst_22 = arith.constant dense<0.000000e+00> : vector<8x128xf32>
    %43 = tpu.matmul %41, %42, %cst_22 {dimension_numbers = #tpu.dot_dimension_numbers<[1], [0], [0], [1], [0, 0, 1, 1], [], []>} : vector<8x128xbf16>, vector<128x128xbf16>, vector<8x128xf32> -> vector<8x128xf32>
    %44 = arith.addf %37, %43 : vector<8x128xf32>
    %cst_23 = arith.constant 0.000000e+00 : bf16
    %45 = vector.broadcast %cst_23 : bf16 to vector<1x1x128xbf16>
    %46 = vector.extract_strided_slice %10 {offsets = [0, 0, 0], sizes = [1, 7, 128], strides = [1, 1, 1]} : vector<1x8x128xbf16> to vector<1x7x128xbf16>
    %47 = tpu.concatenate %45, %46 in 1 : vector<1x1x128xbf16>, vector<1x7x128xbf16> -> vector<1x8x128xbf16>
    %48 = vector.shape_cast %47 : vector<1x8x128xbf16> to vector<8x128xbf16>
    %c640 = arith.constant 640 : index
    %c0_24 = arith.constant 0 : index
    %49 = vector.load %arg3[%c640, %c0_24] : memref<4864x128xbf16, #tpu.memory_space<vmem>>, vector<128x128xbf16>
    %cst_25 = arith.constant dense<0.000000e+00> : vector<8x128xf32>
    %50 = tpu.matmul %48, %49, %cst_25 {dimension_numbers = #tpu.dot_dimension_numbers<[1], [0], [0], [1], [0, 0, 1, 1], [], []>} : vector<8x128xbf16>, vector<128x128xbf16>, vector<8x128xf32> -> vector<8x128xf32>
    %51 = arith.addf %44, %50 : vector<8x128xf32>
    %52 = vector.shape_cast %10 : vector<1x8x128xbf16> to vector<8x128xbf16>
    %c768 = arith.constant 768 : index
    %c0_26 = arith.constant 0 : index
    %53 = vector.load %arg3[%c768, %c0_26] : memref<4864x128xbf16, #tpu.memory_space<vmem>>, vector<128x128xbf16>
    %cst_27 = arith.constant dense<0.000000e+00> : vector<8x128xf32>
    %54 = tpu.matmul %52, %53, %cst_27 {dimension_numbers = #tpu.dot_dimension_numbers<[1], [0], [0], [1], [0, 0, 1, 1], [], []>} : vector<8x128xbf16>, vector<128x128xbf16>, vector<8x128xf32> -> vector<8x128xf32>
    %55 = arith.addf %51, %54 : vector<8x128xf32>
    %c1 = arith.constant 1 : index
    %c0_28 = arith.constant 0 : index
    %56 = vector.load %arg4[%c1, %c0_28] : memref<19x128xf32, #tpu.memory_space<vmem>>, vector<1x128xf32>
    %57 = vector.broadcast %56 : vector<1x128xf32> to vector<8x128xf32>
    %58 = arith.addf %55, %57 : vector<8x128xf32>
    %cst_29 = arith.constant 0.000000e+00 : f32
    %59 = vector.broadcast %cst_29 : f32 to vector<8x128xf32>
    %60 = arith.maximumf %58, %59 : vector<8x128xf32>
    %61 = arith.truncf %60 : vector<8x128xf32> to vector<8x128xbf16>
    %62 = vector.shape_cast %61 : vector<8x128xbf16> to vector<1x8x128xbf16>
    %cst_30 = arith.constant 0.000000e+00 : bf16
    %63 = vector.broadcast %cst_30 : bf16 to vector<1x6x128xbf16>
    %64 = vector.extract_strided_slice %62 {offsets = [0, 0, 0], sizes = [1, 2, 128], strides = [1, 1, 1]} : vector<1x8x128xbf16> to vector<1x2x128xbf16>
    %65 = tpu.concatenate %63, %64 in 1 : vector<1x6x128xbf16>, vector<1x2x128xbf16> -> vector<1x8x128xbf16>
    %66 = vector.shape_cast %65 : vector<1x8x128xbf16> to vector<8x128xbf16>
    %c896 = arith.constant 896 : index
    %c0_31 = arith.constant 0 : index
    %67 = vector.load %arg3[%c896, %c0_31] : memref<4864x128xbf16, #tpu.memory_space<vmem>>, vector<128x128xbf16>
    %cst_32 = arith.constant dense<0.000000e+00> : vector<8x128xf32>
    %68 = tpu.matmul %66, %67, %cst_32 {dimension_numbers = #tpu.dot_dimension_numbers<[1], [0], [0], [1], [0, 0, 1, 1], [], []>} : vector<8x128xbf16>, vector<128x128xbf16>, vector<8x128xf32> -> vector<8x128xf32>
    %cst_33 = arith.constant 0.000000e+00 : bf16
    %69 = vector.broadcast %cst_33 : bf16 to vector<1x5x128xbf16>
    %70 = vector.extract_strided_slice %62 {offsets = [0, 0, 0], sizes = [1, 3, 128], strides = [1, 1, 1]} : vector<1x8x128xbf16> to vector<1x3x128xbf16>
    %71 = tpu.concatenate %69, %70 in 1 : vector<1x5x128xbf16>, vector<1x3x128xbf16> -> vector<1x8x128xbf16>
    %72 = vector.shape_cast %71 : vector<1x8x128xbf16> to vector<8x128xbf16>
    %c1024 = arith.constant 1024 : index
    %c0_34 = arith.constant 0 : index
    %73 = vector.load %arg3[%c1024, %c0_34] : memref<4864x128xbf16, #tpu.memory_space<vmem>>, vector<128x128xbf16>
    %cst_35 = arith.constant dense<0.000000e+00> : vector<8x128xf32>
    %74 = tpu.matmul %72, %73, %cst_35 {dimension_numbers = #tpu.dot_dimension_numbers<[1], [0], [0], [1], [0, 0, 1, 1], [], []>} : vector<8x128xbf16>, vector<128x128xbf16>, vector<8x128xf32> -> vector<8x128xf32>
    %75 = arith.addf %68, %74 : vector<8x128xf32>
    %cst_36 = arith.constant 0.000000e+00 : bf16
    %76 = vector.broadcast %cst_36 : bf16 to vector<1x4x128xbf16>
    %77 = vector.extract_strided_slice %62 {offsets = [0, 0, 0], sizes = [1, 4, 128], strides = [1, 1, 1]} : vector<1x8x128xbf16> to vector<1x4x128xbf16>
    %78 = tpu.concatenate %76, %77 in 1 : vector<1x4x128xbf16>, vector<1x4x128xbf16> -> vector<1x8x128xbf16>
    %79 = vector.shape_cast %78 : vector<1x8x128xbf16> to vector<8x128xbf16>
    %c1152 = arith.constant 1152 : index
    %c0_37 = arith.constant 0 : index
    %80 = vector.load %arg3[%c1152, %c0_37] : memref<4864x128xbf16, #tpu.memory_space<vmem>>, vector<128x128xbf16>
    %cst_38 = arith.constant dense<0.000000e+00> : vector<8x128xf32>
    %81 = tpu.matmul %79, %80, %cst_38 {dimension_numbers = #tpu.dot_dimension_numbers<[1], [0], [0], [1], [0, 0, 1, 1], [], []>} : vector<8x128xbf16>, vector<128x128xbf16>, vector<8x128xf32> -> vector<8x128xf32>
    %82 = arith.addf %75, %81 : vector<8x128xf32>
    %cst_39 = arith.constant 0.000000e+00 : bf16
    %83 = vector.broadcast %cst_39 : bf16 to vector<1x3x128xbf16>
    %84 = vector.extract_strided_slice %62 {offsets = [0, 0, 0], sizes = [1, 5, 128], strides = [1, 1, 1]} : vector<1x8x128xbf16> to vector<1x5x128xbf16>
    %85 = tpu.concatenate %83, %84 in 1 : vector<1x3x128xbf16>, vector<1x5x128xbf16> -> vector<1x8x128xbf16>
    %86 = vector.shape_cast %85 : vector<1x8x128xbf16> to vector<8x128xbf16>
    %c1280 = arith.constant 1280 : index
    %c0_40 = arith.constant 0 : index
    %87 = vector.load %arg3[%c1280, %c0_40] : memref<4864x128xbf16, #tpu.memory_space<vmem>>, vector<128x128xbf16>
    %cst_41 = arith.constant dense<0.000000e+00> : vector<8x128xf32>
    %88 = tpu.matmul %86, %87, %cst_41 {dimension_numbers = #tpu.dot_dimension_numbers<[1], [0], [0], [1], [0, 0, 1, 1], [], []>} : vector<8x128xbf16>, vector<128x128xbf16>, vector<8x128xf32> -> vector<8x128xf32>
    %89 = arith.addf %82, %88 : vector<8x128xf32>
    %cst_42 = arith.constant 0.000000e+00 : bf16
    %90 = vector.broadcast %cst_42 : bf16 to vector<1x2x128xbf16>
    %91 = vector.extract_strided_slice %62 {offsets = [0, 0, 0], sizes = [1, 6, 128], strides = [1, 1, 1]} : vector<1x8x128xbf16> to vector<1x6x128xbf16>
    %92 = tpu.concatenate %90, %91 in 1 : vector<1x2x128xbf16>, vector<1x6x128xbf16> -> vector<1x8x128xbf16>
    %93 = vector.shape_cast %92 : vector<1x8x128xbf16> to vector<8x128xbf16>
    %c1408 = arith.constant 1408 : index
    %c0_43 = arith.constant 0 : index
    %94 = vector.load %arg3[%c1408, %c0_43] : memref<4864x128xbf16, #tpu.memory_space<vmem>>, vector<128x128xbf16>
    %cst_44 = arith.constant dense<0.000000e+00> : vector<8x128xf32>
    %95 = tpu.matmul %93, %94, %cst_44 {dimension_numbers = #tpu.dot_dimension_numbers<[1], [0], [0], [1], [0, 0, 1, 1], [], []>} : vector<8x128xbf16>, vector<128x128xbf16>, vector<8x128xf32> -> vector<8x128xf32>
    %96 = arith.addf %89, %95 : vector<8x128xf32>
    %cst_45 = arith.constant 0.000000e+00 : bf16
    %97 = vector.broadcast %cst_45 : bf16 to vector<1x1x128xbf16>
    %98 = vector.extract_strided_slice %62 {offsets = [0, 0, 0], sizes = [1, 7, 128], strides = [1, 1, 1]} : vector<1x8x128xbf16> to vector<1x7x128xbf16>
    %99 = tpu.concatenate %97, %98 in 1 : vector<1x1x128xbf16>, vector<1x7x128xbf16> -> vector<1x8x128xbf16>
    %100 = vector.shape_cast %99 : vector<1x8x128xbf16> to vector<8x128xbf16>
    %c1536 = arith.constant 1536 : index
    %c0_46 = arith.constant 0 : index
    %101 = vector.load %arg3[%c1536, %c0_46] : memref<4864x128xbf16, #tpu.memory_space<vmem>>, vector<128x128xbf16>
    %cst_47 = arith.constant dense<0.000000e+00> : vector<8x128xf32>
    %102 = tpu.matmul %100, %101, %cst_47 {dimension_numbers = #tpu.dot_dimension_numbers<[1], [0], [0], [1], [0, 0, 1, 1], [], []>} : vector<8x128xbf16>, vector<128x128xbf16>, vector<8x128xf32> -> vector<8x128xf32>
    %103 = arith.addf %96, %102 : vector<8x128xf32>
    %104 = vector.shape_cast %62 : vector<1x8x128xbf16> to vector<8x128xbf16>
    %c1664 = arith.constant 1664 : index
    %c0_48 = arith.constant 0 : index
    %105 = vector.load %arg3[%c1664, %c0_48] : memref<4864x128xbf16, #tpu.memory_space<vmem>>, vector<128x128xbf16>
    %cst_49 = arith.constant dense<0.000000e+00> : vector<8x128xf32>
    %106 = tpu.matmul %104, %105, %cst_49 {dimension_numbers = #tpu.dot_dimension_numbers<[1], [0], [0], [1], [0, 0, 1, 1], [], []>} : vector<8x128xbf16>, vector<128x128xbf16>, vector<8x128xf32> -> vector<8x128xf32>
    %107 = arith.addf %103, %106 : vector<8x128xf32>
    %c2 = arith.constant 2 : index
    %c0_50 = arith.constant 0 : index
    %108 = vector.load %arg4[%c2, %c0_50] : memref<19x128xf32, #tpu.memory_space<vmem>>, vector<1x128xf32>
    %109 = vector.broadcast %108 : vector<1x128xf32> to vector<8x128xf32>
    %110 = arith.addf %107, %109 : vector<8x128xf32>
    %cst_51 = arith.constant 0.000000e+00 : f32
    %111 = vector.broadcast %cst_51 : f32 to vector<8x128xf32>
    %112 = arith.maximumf %110, %111 : vector<8x128xf32>
    %113 = vector.shape_cast %10 : vector<1x8x128xbf16> to vector<8x128xbf16>
    %c1792 = arith.constant 1792 : index
    %c0_52 = arith.constant 0 : index
    %114 = vector.load %arg3[%c1792, %c0_52] : memref<4864x128xbf16, #tpu.memory_space<vmem>>, vector<128x128xbf16>
    %cst_53 = arith.constant dense<0.000000e+00> : vector<8x128xf32>
    %115 = tpu.matmul %113, %114, %cst_53 {dimension_numbers = #tpu.dot_dimension_numbers<[1], [0], [0], [1], [0, 0, 1, 1], [], []>} : vector<8x128xbf16>, vector<128x128xbf16>, vector<8x128xf32> -> vector<8x128xf32>
    %c3 = arith.constant 3 : index
    %c0_54 = arith.constant 0 : index
    %116 = vector.load %arg4[%c3, %c0_54] : memref<19x128xf32, #tpu.memory_space<vmem>>, vector<1x128xf32>
    %117 = vector.broadcast %116 : vector<1x128xf32> to vector<8x128xf32>
    %118 = arith.addf %115, %117 : vector<8x128xf32>
    %119 = arith.addf %112, %118 : vector<8x128xf32>
    %cst_55 = arith.constant 0.000000e+00 : f32
    %120 = vector.broadcast %cst_55 : f32 to vector<8x128xf32>
    %121 = arith.maximumf %119, %120 : vector<8x128xf32>
    %122 = arith.truncf %121 : vector<8x128xf32> to vector<8x128xbf16>
    %123 = vector.shape_cast %122 : vector<8x128xbf16> to vector<1x8x128xbf16>
    %cst_56 = arith.constant 0.000000e+00 : bf16
    %124 = vector.broadcast %cst_56 : bf16 to vector<1x6x128xbf16>
    %125 = vector.extract_strided_slice %123 {offsets = [0, 0, 0], sizes = [1, 2, 128], strides = [1, 1, 1]} : vector<1x8x128xbf16> to vector<1x2x128xbf16>
    %126 = tpu.concatenate %124, %125 in 1 : vector<1x6x128xbf16>, vector<1x2x128xbf16> -> vector<1x8x128xbf16>
    %127 = vector.shape_cast %126 : vector<1x8x128xbf16> to vector<8x128xbf16>
    %c1920 = arith.constant 1920 : index
    %c0_57 = arith.constant 0 : index
    %128 = vector.load %arg3[%c1920, %c0_57] : memref<4864x128xbf16, #tpu.memory_space<vmem>>, vector<128x128xbf16>
    %cst_58 = arith.constant dense<0.000000e+00> : vector<8x128xf32>
    %129 = tpu.matmul %127, %128, %cst_58 {dimension_numbers = #tpu.dot_dimension_numbers<[1], [0], [0], [1], [0, 0, 1, 1], [], []>} : vector<8x128xbf16>, vector<128x128xbf16>, vector<8x128xf32> -> vector<8x128xf32>
    %cst_59 = arith.constant 0.000000e+00 : bf16
    %130 = vector.broadcast %cst_59 : bf16 to vector<1x4x128xbf16>
    %131 = vector.extract_strided_slice %123 {offsets = [0, 0, 0], sizes = [1, 4, 128], strides = [1, 1, 1]} : vector<1x8x128xbf16> to vector<1x4x128xbf16>
    %132 = tpu.concatenate %130, %131 in 1 : vector<1x4x128xbf16>, vector<1x4x128xbf16> -> vector<1x8x128xbf16>
    %133 = vector.shape_cast %132 : vector<1x8x128xbf16> to vector<8x128xbf16>
    %c2048 = arith.constant 2048 : index
    %c0_60 = arith.constant 0 : index
    %134 = vector.load %arg3[%c2048, %c0_60] : memref<4864x128xbf16, #tpu.memory_space<vmem>>, vector<128x128xbf16>
    %cst_61 = arith.constant dense<0.000000e+00> : vector<8x128xf32>
    %135 = tpu.matmul %133, %134, %cst_61 {dimension_numbers = #tpu.dot_dimension_numbers<[1], [0], [0], [1], [0, 0, 1, 1], [], []>} : vector<8x128xbf16>, vector<128x128xbf16>, vector<8x128xf32> -> vector<8x128xf32>
    %136 = arith.addf %129, %135 : vector<8x128xf32>
    %cst_62 = arith.constant 0.000000e+00 : bf16
    %137 = vector.broadcast %cst_62 : bf16 to vector<1x2x128xbf16>
    %138 = vector.extract_strided_slice %123 {offsets = [0, 0, 0], sizes = [1, 6, 128], strides = [1, 1, 1]} : vector<1x8x128xbf16> to vector<1x6x128xbf16>
    %139 = tpu.concatenate %137, %138 in 1 : vector<1x2x128xbf16>, vector<1x6x128xbf16> -> vector<1x8x128xbf16>
    %140 = vector.shape_cast %139 : vector<1x8x128xbf16> to vector<8x128xbf16>
    %c2176 = arith.constant 2176 : index
    %c0_63 = arith.constant 0 : index
    %141 = vector.load %arg3[%c2176, %c0_63] : memref<4864x128xbf16, #tpu.memory_space<vmem>>, vector<128x128xbf16>
    %cst_64 = arith.constant dense<0.000000e+00> : vector<8x128xf32>
    %142 = tpu.matmul %140, %141, %cst_64 {dimension_numbers = #tpu.dot_dimension_numbers<[1], [0], [0], [1], [0, 0, 1, 1], [], []>} : vector<8x128xbf16>, vector<128x128xbf16>, vector<8x128xf32> -> vector<8x128xf32>
    %143 = arith.addf %136, %142 : vector<8x128xf32>
    %144 = vector.shape_cast %123 : vector<1x8x128xbf16> to vector<8x128xbf16>
    %c2304 = arith.constant 2304 : index
    %c0_65 = arith.constant 0 : index
    %145 = vector.load %arg3[%c2304, %c0_65] : memref<4864x128xbf16, #tpu.memory_space<vmem>>, vector<128x128xbf16>
    %cst_66 = arith.constant dense<0.000000e+00> : vector<8x128xf32>
    %146 = tpu.matmul %144, %145, %cst_66 {dimension_numbers = #tpu.dot_dimension_numbers<[1], [0], [0], [1], [0, 0, 1, 1], [], []>} : vector<8x128xbf16>, vector<128x128xbf16>, vector<8x128xf32> -> vector<8x128xf32>
    %147 = arith.addf %143, %146 : vector<8x128xf32>
    %c4 = arith.constant 4 : index
    %c0_67 = arith.constant 0 : index
    %148 = vector.load %arg4[%c4, %c0_67] : memref<19x128xf32, #tpu.memory_space<vmem>>, vector<1x128xf32>
    %149 = vector.broadcast %148 : vector<1x128xf32> to vector<8x128xf32>
    %150 = arith.addf %147, %149 : vector<8x128xf32>
    %cst_68 = arith.constant 0.000000e+00 : f32
    %151 = vector.broadcast %cst_68 : f32 to vector<8x128xf32>
    %152 = arith.maximumf %150, %151 : vector<8x128xf32>
    %153 = arith.truncf %152 : vector<8x128xf32> to vector<8x128xbf16>
    %154 = vector.shape_cast %153 : vector<8x128xbf16> to vector<1x8x128xbf16>
    %cst_69 = arith.constant 0.000000e+00 : bf16
    %155 = vector.broadcast %cst_69 : bf16 to vector<1x6x128xbf16>
    %156 = vector.extract_strided_slice %154 {offsets = [0, 0, 0], sizes = [1, 2, 128], strides = [1, 1, 1]} : vector<1x8x128xbf16> to vector<1x2x128xbf16>
    %157 = tpu.concatenate %155, %156 in 1 : vector<1x6x128xbf16>, vector<1x2x128xbf16> -> vector<1x8x128xbf16>
    %158 = vector.shape_cast %157 : vector<1x8x128xbf16> to vector<8x128xbf16>
    %c2432 = arith.constant 2432 : index
    %c0_70 = arith.constant 0 : index
    %159 = vector.load %arg3[%c2432, %c0_70] : memref<4864x128xbf16, #tpu.memory_space<vmem>>, vector<128x128xbf16>
    %cst_71 = arith.constant dense<0.000000e+00> : vector<8x128xf32>
    %160 = tpu.matmul %158, %159, %cst_71 {dimension_numbers = #tpu.dot_dimension_numbers<[1], [0], [0], [1], [0, 0, 1, 1], [], []>} : vector<8x128xbf16>, vector<128x128xbf16>, vector<8x128xf32> -> vector<8x128xf32>
    %cst_72 = arith.constant 0.000000e+00 : bf16
    %161 = vector.broadcast %cst_72 : bf16 to vector<1x4x128xbf16>
    %162 = vector.extract_strided_slice %154 {offsets = [0, 0, 0], sizes = [1, 4, 128], strides = [1, 1, 1]} : vector<1x8x128xbf16> to vector<1x4x128xbf16>
    %163 = tpu.concatenate %161, %162 in 1 : vector<1x4x128xbf16>, vector<1x4x128xbf16> -> vector<1x8x128xbf16>
    %164 = vector.shape_cast %163 : vector<1x8x128xbf16> to vector<8x128xbf16>
    %c2560 = arith.constant 2560 : index
    %c0_73 = arith.constant 0 : index
    %165 = vector.load %arg3[%c2560, %c0_73] : memref<4864x128xbf16, #tpu.memory_space<vmem>>, vector<128x128xbf16>
    %cst_74 = arith.constant dense<0.000000e+00> : vector<8x128xf32>
    %166 = tpu.matmul %164, %165, %cst_74 {dimension_numbers = #tpu.dot_dimension_numbers<[1], [0], [0], [1], [0, 0, 1, 1], [], []>} : vector<8x128xbf16>, vector<128x128xbf16>, vector<8x128xf32> -> vector<8x128xf32>
    %167 = arith.addf %160, %166 : vector<8x128xf32>
    %cst_75 = arith.constant 0.000000e+00 : bf16
    %168 = vector.broadcast %cst_75 : bf16 to vector<1x2x128xbf16>
    %169 = vector.extract_strided_slice %154 {offsets = [0, 0, 0], sizes = [1, 6, 128], strides = [1, 1, 1]} : vector<1x8x128xbf16> to vector<1x6x128xbf16>
    %170 = tpu.concatenate %168, %169 in 1 : vector<1x2x128xbf16>, vector<1x6x128xbf16> -> vector<1x8x128xbf16>
    %171 = vector.shape_cast %170 : vector<1x8x128xbf16> to vector<8x128xbf16>
    %c2688 = arith.constant 2688 : index
    %c0_76 = arith.constant 0 : index
    %172 = vector.load %arg3[%c2688, %c0_76] : memref<4864x128xbf16, #tpu.memory_space<vmem>>, vector<128x128xbf16>
    %cst_77 = arith.constant dense<0.000000e+00> : vector<8x128xf32>
    %173 = tpu.matmul %171, %172, %cst_77 {dimension_numbers = #tpu.dot_dimension_numbers<[1], [0], [0], [1], [0, 0, 1, 1], [], []>} : vector<8x128xbf16>, vector<128x128xbf16>, vector<8x128xf32> -> vector<8x128xf32>
    %174 = arith.addf %167, %173 : vector<8x128xf32>
    %175 = vector.shape_cast %154 : vector<1x8x128xbf16> to vector<8x128xbf16>
    %c2816 = arith.constant 2816 : index
    %c0_78 = arith.constant 0 : index
    %176 = vector.load %arg3[%c2816, %c0_78] : memref<4864x128xbf16, #tpu.memory_space<vmem>>, vector<128x128xbf16>
    %cst_79 = arith.constant dense<0.000000e+00> : vector<8x128xf32>
    %177 = tpu.matmul %175, %176, %cst_79 {dimension_numbers = #tpu.dot_dimension_numbers<[1], [0], [0], [1], [0, 0, 1, 1], [], []>} : vector<8x128xbf16>, vector<128x128xbf16>, vector<8x128xf32> -> vector<8x128xf32>
    %178 = arith.addf %174, %177 : vector<8x128xf32>
    %c5 = arith.constant 5 : index
    %c0_80 = arith.constant 0 : index
    %179 = vector.load %arg4[%c5, %c0_80] : memref<19x128xf32, #tpu.memory_space<vmem>>, vector<1x128xf32>
    %180 = vector.broadcast %179 : vector<1x128xf32> to vector<8x128xf32>
    %181 = arith.addf %178, %180 : vector<8x128xf32>
    %cst_81 = arith.constant 0.000000e+00 : f32
    %182 = vector.broadcast %cst_81 : f32 to vector<8x128xf32>
    %183 = arith.maximumf %181, %182 : vector<8x128xf32>
    %184 = vector.shape_cast %123 : vector<1x8x128xbf16> to vector<8x128xbf16>
    %185 = arith.extf %184 : vector<8x128xbf16> to vector<8x128xf32>
    %186 = arith.addf %183, %185 : vector<8x128xf32>
    %cst_82 = arith.constant 0.000000e+00 : f32
    %187 = vector.broadcast %cst_82 : f32 to vector<8x128xf32>
    %188 = arith.maximumf %186, %187 : vector<8x128xf32>
    %189 = arith.truncf %188 : vector<8x128xf32> to vector<8x128xbf16>
    %190 = vector.shape_cast %189 : vector<8x128xbf16> to vector<1x8x128xbf16>
    %cst_83 = arith.constant 0.000000e+00 : bf16
    %191 = vector.broadcast %cst_83 : bf16 to vector<1x4x128xbf16>
    %192 = vector.extract_strided_slice %190 {offsets = [0, 0, 0], sizes = [1, 4, 128], strides = [1, 1, 1]} : vector<1x8x128xbf16> to vector<1x4x128xbf16>
    %193 = tpu.concatenate %191, %192 in 1 : vector<1x4x128xbf16>, vector<1x4x128xbf16> -> vector<1x8x128xbf16>
    %194 = vector.shape_cast %193 : vector<1x8x128xbf16> to vector<8x128xbf16>
    %c2944 = arith.constant 2944 : index
    %c0_84 = arith.constant 0 : index
    %195 = vector.load %arg3[%c2944, %c0_84] : memref<4864x128xbf16, #tpu.memory_space<vmem>>, vector<128x128xbf16>
    %cst_85 = arith.constant dense<0.000000e+00> : vector<8x128xf32>
    %196 = tpu.matmul %194, %195, %cst_85 {dimension_numbers = #tpu.dot_dimension_numbers<[1], [0], [0], [1], [0, 0, 1, 1], [], []>} : vector<8x128xbf16>, vector<128x128xbf16>, vector<8x128xf32> -> vector<8x128xf32>
    %197 = vector.shape_cast %190 : vector<1x8x128xbf16> to vector<8x128xbf16>
    %c3072 = arith.constant 3072 : index
    %c0_86 = arith.constant 0 : index
    %198 = vector.load %arg3[%c3072, %c0_86] : memref<4864x128xbf16, #tpu.memory_space<vmem>>, vector<128x128xbf16>
    %cst_87 = arith.constant dense<0.000000e+00> : vector<8x128xf32>
    %199 = tpu.matmul %197, %198, %cst_87 {dimension_numbers = #tpu.dot_dimension_numbers<[1], [0], [0], [1], [0, 0, 1, 1], [], []>} : vector<8x128xbf16>, vector<128x128xbf16>, vector<8x128xf32> -> vector<8x128xf32>
    %200 = arith.addf %196, %199 : vector<8x128xf32>
    %c6 = arith.constant 6 : index
    %c0_88 = arith.constant 0 : index
    %201 = vector.load %arg4[%c6, %c0_88] : memref<19x128xf32, #tpu.memory_space<vmem>>, vector<1x128xf32>
    %202 = vector.broadcast %201 : vector<1x128xf32> to vector<8x128xf32>
    %203 = arith.addf %200, %202 : vector<8x128xf32>
    %cst_89 = arith.constant 0.000000e+00 : f32
    %204 = vector.broadcast %cst_89 : f32 to vector<8x128xf32>
    %205 = arith.maximumf %203, %204 : vector<8x128xf32>
    %206 = arith.truncf %205 : vector<8x128xf32> to vector<8x128xbf16>
    %207 = vector.shape_cast %206 : vector<8x128xbf16> to vector<1x8x128xbf16>
    %cst_90 = arith.constant 0.000000e+00 : bf16
    %208 = vector.broadcast %cst_90 : bf16 to vector<1x4x128xbf16>
    %209 = vector.extract_strided_slice %207 {offsets = [0, 0, 0], sizes = [1, 4, 128], strides = [1, 1, 1]} : vector<1x8x128xbf16> to vector<1x4x128xbf16>
    %210 = tpu.concatenate %208, %209 in 1 : vector<1x4x128xbf16>, vector<1x4x128xbf16> -> vector<1x8x128xbf16>
    %211 = vector.shape_cast %210 : vector<1x8x128xbf16> to vector<8x128xbf16>
    %c3200 = arith.constant 3200 : index
    %c0_91 = arith.constant 0 : index
    %212 = vector.load %arg3[%c3200, %c0_91] : memref<4864x128xbf16, #tpu.memory_space<vmem>>, vector<128x128xbf16>
    %cst_92 = arith.constant dense<0.000000e+00> : vector<8x128xf32>
    %213 = tpu.matmul %211, %212, %cst_92 {dimension_numbers = #tpu.dot_dimension_numbers<[1], [0], [0], [1], [0, 0, 1, 1], [], []>} : vector<8x128xbf16>, vector<128x128xbf16>, vector<8x128xf32> -> vector<8x128xf32>
    %214 = vector.shape_cast %207 : vector<1x8x128xbf16> to vector<8x128xbf16>
    %c3328 = arith.constant 3328 : index
    %c0_93 = arith.constant 0 : index
    %215 = vector.load %arg3[%c3328, %c0_93] : memref<4864x128xbf16, #tpu.memory_space<vmem>>, vector<128x128xbf16>
    %cst_94 = arith.constant dense<0.000000e+00> : vector<8x128xf32>
    %216 = tpu.matmul %214, %215, %cst_94 {dimension_numbers = #tpu.dot_dimension_numbers<[1], [0], [0], [1], [0, 0, 1, 1], [], []>} : vector<8x128xbf16>, vector<128x128xbf16>, vector<8x128xf32> -> vector<8x128xf32>
    %217 = arith.addf %213, %216 : vector<8x128xf32>
    %c7 = arith.constant 7 : index
    %c0_95 = arith.constant 0 : index
    %218 = vector.load %arg4[%c7, %c0_95] : memref<19x128xf32, #tpu.memory_space<vmem>>, vector<1x128xf32>
    %219 = vector.broadcast %218 : vector<1x128xf32> to vector<8x128xf32>
    %220 = arith.addf %217, %219 : vector<8x128xf32>
    %cst_96 = arith.constant 0.000000e+00 : f32
    %221 = vector.broadcast %cst_96 : f32 to vector<8x128xf32>
    %222 = arith.maximumf %220, %221 : vector<8x128xf32>
    %223 = vector.shape_cast %190 : vector<1x8x128xbf16> to vector<8x128xbf16>
    %224 = arith.extf %223 : vector<8x128xbf16> to vector<8x128xf32>
    %225 = arith.addf %222, %224 : vector<8x128xf32>
    %cst_97 = arith.constant 0.000000e+00 : f32
    %226 = vector.broadcast %cst_97 : f32 to vector<8x128xf32>
    %227 = arith.maximumf %225, %226 : vector<8x128xf32>
    %228 = arith.truncf %227 : vector<8x128xf32> to vector<8x128xbf16>
    %229 = vector.shape_cast %228 : vector<8x128xbf16> to vector<1x8x128xbf16>
    %230 = vector.shape_cast %229 : vector<1x8x128xbf16> to vector<8x128xbf16>
    %c3456 = arith.constant 3456 : index
    %c0_98 = arith.constant 0 : index
    %231 = vector.load %arg3[%c3456, %c0_98] : memref<4864x128xbf16, #tpu.memory_space<vmem>>, vector<128x128xbf16>
    %cst_99 = arith.constant dense<0.000000e+00> : vector<8x128xf32>
    %232 = tpu.matmul %230, %231, %cst_99 {dimension_numbers = #tpu.dot_dimension_numbers<[1], [0], [0], [1], [0, 0, 1, 1], [], []>} : vector<8x128xbf16>, vector<128x128xbf16>, vector<8x128xf32> -> vector<8x128xf32>
    %c8 = arith.constant 8 : index
    %c0_100 = arith.constant 0 : index
    %233 = vector.load %arg4[%c8, %c0_100] : memref<19x128xf32, #tpu.memory_space<vmem>>, vector<1x128xf32>
    %234 = vector.broadcast %233 : vector<1x128xf32> to vector<8x128xf32>
    %235 = arith.addf %232, %234 : vector<8x128xf32>
    %cst_101 = arith.constant 0.000000e+00 : f32
    %236 = vector.broadcast %cst_101 : f32 to vector<8x128xf32>
    %237 = arith.maximumf %235, %236 : vector<8x128xf32>
    %238 = arith.truncf %237 : vector<8x128xf32> to vector<8x128xbf16>
    %239 = vector.shape_cast %238 : vector<8x128xbf16> to vector<1x8x128xbf16>
    %240 = vector.shape_cast %239 : vector<1x8x128xbf16> to vector<8x128xbf16>
    %c3584 = arith.constant 3584 : index
    %c0_102 = arith.constant 0 : index
    %241 = vector.load %arg3[%c3584, %c0_102] : memref<4864x128xbf16, #tpu.memory_space<vmem>>, vector<128x128xbf16>
    %cst_103 = arith.constant dense<0.000000e+00> : vector<8x128xf32>
    %242 = tpu.matmul %240, %241, %cst_103 {dimension_numbers = #tpu.dot_dimension_numbers<[1], [0], [0], [1], [0, 0, 1, 1], [], []>} : vector<8x128xbf16>, vector<128x128xbf16>, vector<8x128xf32> -> vector<8x128xf32>
    %c9 = arith.constant 9 : index
    %c0_104 = arith.constant 0 : index
    %243 = vector.load %arg4[%c9, %c0_104] : memref<19x128xf32, #tpu.memory_space<vmem>>, vector<1x128xf32>
    %244 = vector.broadcast %243 : vector<1x128xf32> to vector<8x128xf32>
    %245 = arith.addf %242, %244 : vector<8x128xf32>
    %cst_105 = arith.constant 0.000000e+00 : f32
    %246 = vector.broadcast %cst_105 : f32 to vector<8x128xf32>
    %247 = arith.maximumf %245, %246 : vector<8x128xf32>
    %248 = vector.shape_cast %229 : vector<1x8x128xbf16> to vector<8x128xbf16>
    %249 = arith.extf %248 : vector<8x128xbf16> to vector<8x128xf32>
    %250 = arith.addf %247, %249 : vector<8x128xf32>
    %cst_106 = arith.constant 0.000000e+00 : f32
    %251 = vector.broadcast %cst_106 : f32 to vector<8x128xf32>
    %252 = arith.maximumf %250, %251 : vector<8x128xf32>
    %253 = arith.truncf %252 : vector<8x128xf32> to vector<8x128xbf16>
    %254 = vector.shape_cast %253 : vector<8x128xbf16> to vector<1x8x128xbf16>
    %255 = vector.shape_cast %254 : vector<1x8x128xbf16> to vector<8x128xbf16>
    %c3712 = arith.constant 3712 : index
    %c0_107 = arith.constant 0 : index
    %256 = vector.load %arg3[%c3712, %c0_107] : memref<4864x128xbf16, #tpu.memory_space<vmem>>, vector<128x128xbf16>
    %cst_108 = arith.constant dense<0.000000e+00> : vector<8x128xf32>
    %257 = tpu.matmul %255, %256, %cst_108 {dimension_numbers = #tpu.dot_dimension_numbers<[1], [0], [0], [1], [0, 0, 1, 1], [], []>} : vector<8x128xbf16>, vector<128x128xbf16>, vector<8x128xf32> -> vector<8x128xf32>
    %c10 = arith.constant 10 : index
    %c0_109 = arith.constant 0 : index
    %258 = vector.load %arg4[%c10, %c0_109] : memref<19x128xf32, #tpu.memory_space<vmem>>, vector<1x128xf32>
    %259 = vector.broadcast %258 : vector<1x128xf32> to vector<8x128xf32>
    %260 = arith.addf %257, %259 : vector<8x128xf32>
    %cst_110 = arith.constant 0.000000e+00 : f32
    %261 = vector.broadcast %cst_110 : f32 to vector<8x128xf32>
    %262 = arith.maximumf %260, %261 : vector<8x128xf32>
    %263 = arith.truncf %262 : vector<8x128xf32> to vector<8x128xbf16>
    %264 = vector.shape_cast %263 : vector<8x128xbf16> to vector<1x8x128xbf16>
    %265 = vector.shape_cast %264 : vector<1x8x128xbf16> to vector<8x128xbf16>
    %c3840 = arith.constant 3840 : index
    %c0_111 = arith.constant 0 : index
    %266 = vector.load %arg3[%c3840, %c0_111] : memref<4864x128xbf16, #tpu.memory_space<vmem>>, vector<128x128xbf16>
    %cst_112 = arith.constant dense<0.000000e+00> : vector<8x128xf32>
    %267 = tpu.matmul %265, %266, %cst_112 {dimension_numbers = #tpu.dot_dimension_numbers<[1], [0], [0], [1], [0, 0, 1, 1], [], []>} : vector<8x128xbf16>, vector<128x128xbf16>, vector<8x128xf32> -> vector<8x128xf32>
    %c11 = arith.constant 11 : index
    %c0_113 = arith.constant 0 : index
    %268 = vector.load %arg4[%c11, %c0_113] : memref<19x128xf32, #tpu.memory_space<vmem>>, vector<1x128xf32>
    %269 = vector.broadcast %268 : vector<1x128xf32> to vector<8x128xf32>
    %270 = arith.addf %267, %269 : vector<8x128xf32>
    %cst_114 = arith.constant 0.000000e+00 : f32
    %271 = vector.broadcast %cst_114 : f32 to vector<8x128xf32>
    %272 = arith.maximumf %270, %271 : vector<8x128xf32>
    %273 = vector.shape_cast %254 : vector<1x8x128xbf16> to vector<8x128xbf16>
    %274 = arith.extf %273 : vector<8x128xbf16> to vector<8x128xf32>
    %275 = arith.addf %272, %274 : vector<8x128xf32>
    %cst_115 = arith.constant 0.000000e+00 : f32
    %276 = vector.broadcast %cst_115 : f32 to vector<8x128xf32>
    %277 = arith.maximumf %275, %276 : vector<8x128xf32>
    %278 = arith.truncf %277 : vector<8x128xf32> to vector<8x128xbf16>
    %279 = vector.shape_cast %278 : vector<8x128xbf16> to vector<1x8x128xbf16>
    %280 = vector.shape_cast %279 : vector<1x8x128xbf16> to vector<8x128xbf16>
    %c3968 = arith.constant 3968 : index
    %c0_116 = arith.constant 0 : index
    %281 = vector.load %arg3[%c3968, %c0_116] : memref<4864x128xbf16, #tpu.memory_space<vmem>>, vector<128x128xbf16>
    %cst_117 = arith.constant dense<0.000000e+00> : vector<8x128xf32>
    %282 = tpu.matmul %280, %281, %cst_117 {dimension_numbers = #tpu.dot_dimension_numbers<[1], [0], [0], [1], [0, 0, 1, 1], [], []>} : vector<8x128xbf16>, vector<128x128xbf16>, vector<8x128xf32> -> vector<8x128xf32>
    %c12 = arith.constant 12 : index
    %c0_118 = arith.constant 0 : index
    %283 = vector.load %arg4[%c12, %c0_118] : memref<19x128xf32, #tpu.memory_space<vmem>>, vector<1x128xf32>
    %284 = vector.broadcast %283 : vector<1x128xf32> to vector<8x128xf32>
    %285 = arith.addf %282, %284 : vector<8x128xf32>
    %cst_119 = arith.constant 0.000000e+00 : f32
    %286 = vector.broadcast %cst_119 : f32 to vector<8x128xf32>
    %287 = arith.maximumf %285, %286 : vector<8x128xf32>
    %288 = arith.truncf %287 : vector<8x128xf32> to vector<8x128xbf16>
    %289 = vector.shape_cast %288 : vector<8x128xbf16> to vector<1x8x128xbf16>
    %290 = vector.shape_cast %289 : vector<1x8x128xbf16> to vector<8x128xbf16>
    %c4096 = arith.constant 4096 : index
    %c0_120 = arith.constant 0 : index
    %291 = vector.load %arg3[%c4096, %c0_120] : memref<4864x128xbf16, #tpu.memory_space<vmem>>, vector<128x128xbf16>
    %cst_121 = arith.constant dense<0.000000e+00> : vector<8x128xf32>
    %292 = tpu.matmul %290, %291, %cst_121 {dimension_numbers = #tpu.dot_dimension_numbers<[1], [0], [0], [1], [0, 0, 1, 1], [], []>} : vector<8x128xbf16>, vector<128x128xbf16>, vector<8x128xf32> -> vector<8x128xf32>
    %c13 = arith.constant 13 : index
    %c0_122 = arith.constant 0 : index
    %293 = vector.load %arg4[%c13, %c0_122] : memref<19x128xf32, #tpu.memory_space<vmem>>, vector<1x128xf32>
    %294 = vector.broadcast %293 : vector<1x128xf32> to vector<8x128xf32>
    %295 = arith.addf %292, %294 : vector<8x128xf32>
    %cst_123 = arith.constant 0.000000e+00 : f32
    %296 = vector.broadcast %cst_123 : f32 to vector<8x128xf32>
    %297 = arith.maximumf %295, %296 : vector<8x128xf32>
    %298 = vector.shape_cast %279 : vector<1x8x128xbf16> to vector<8x128xbf16>
    %299 = arith.extf %298 : vector<8x128xbf16> to vector<8x128xf32>
    %300 = arith.addf %297, %299 : vector<8x128xf32>
    %cst_124 = arith.constant 0.000000e+00 : f32
    %301 = vector.broadcast %cst_124 : f32 to vector<8x128xf32>
    %302 = arith.maximumf %300, %301 : vector<8x128xf32>
    %303 = arith.truncf %302 : vector<8x128xf32> to vector<8x128xbf16>
    %304 = vector.shape_cast %303 : vector<8x128xbf16> to vector<1x8x128xbf16>
    %305 = vector.shape_cast %304 : vector<1x8x128xbf16> to vector<8x128xbf16>
    %c4224 = arith.constant 4224 : index
    %c0_125 = arith.constant 0 : index
    %306 = vector.load %arg3[%c4224, %c0_125] : memref<4864x128xbf16, #tpu.memory_space<vmem>>, vector<128x128xbf16>
    %cst_126 = arith.constant dense<0.000000e+00> : vector<8x128xf32>
    %307 = tpu.matmul %305, %306, %cst_126 {dimension_numbers = #tpu.dot_dimension_numbers<[1], [0], [0], [1], [0, 0, 1, 1], [], []>} : vector<8x128xbf16>, vector<128x128xbf16>, vector<8x128xf32> -> vector<8x128xf32>
    %c14 = arith.constant 14 : index
    %c0_127 = arith.constant 0 : index
    %308 = vector.load %arg4[%c14, %c0_127] : memref<19x128xf32, #tpu.memory_space<vmem>>, vector<1x128xf32>
    %309 = vector.broadcast %308 : vector<1x128xf32> to vector<8x128xf32>
    %310 = arith.addf %307, %309 : vector<8x128xf32>
    %cst_128 = arith.constant 0.000000e+00 : f32
    %311 = vector.broadcast %cst_128 : f32 to vector<8x128xf32>
    %312 = arith.maximumf %310, %311 : vector<8x128xf32>
    %313 = arith.truncf %312 : vector<8x128xf32> to vector<8x128xbf16>
    %314 = vector.shape_cast %313 : vector<8x128xbf16> to vector<1x8x128xbf16>
    %315 = vector.shape_cast %314 : vector<1x8x128xbf16> to vector<8x128xbf16>
    %c4352 = arith.constant 4352 : index
    %c0_129 = arith.constant 0 : index
    %316 = vector.load %arg3[%c4352, %c0_129] : memref<4864x128xbf16, #tpu.memory_space<vmem>>, vector<128x128xbf16>
    %cst_130 = arith.constant dense<0.000000e+00> : vector<8x128xf32>
    %317 = tpu.matmul %315, %316, %cst_130 {dimension_numbers = #tpu.dot_dimension_numbers<[1], [0], [0], [1], [0, 0, 1, 1], [], []>} : vector<8x128xbf16>, vector<128x128xbf16>, vector<8x128xf32> -> vector<8x128xf32>
    %c15 = arith.constant 15 : index
    %c0_131 = arith.constant 0 : index
    %318 = vector.load %arg4[%c15, %c0_131] : memref<19x128xf32, #tpu.memory_space<vmem>>, vector<1x128xf32>
    %319 = vector.broadcast %318 : vector<1x128xf32> to vector<8x128xf32>
    %320 = arith.addf %317, %319 : vector<8x128xf32>
    %cst_132 = arith.constant 0.000000e+00 : f32
    %321 = vector.broadcast %cst_132 : f32 to vector<8x128xf32>
    %322 = arith.maximumf %320, %321 : vector<8x128xf32>
    %323 = vector.shape_cast %304 : vector<1x8x128xbf16> to vector<8x128xbf16>
    %324 = arith.extf %323 : vector<8x128xbf16> to vector<8x128xf32>
    %325 = arith.addf %322, %324 : vector<8x128xf32>
    %cst_133 = arith.constant 0.000000e+00 : f32
    %326 = vector.broadcast %cst_133 : f32 to vector<8x128xf32>
    %327 = arith.maximumf %325, %326 : vector<8x128xf32>
    %328 = arith.truncf %327 : vector<8x128xf32> to vector<8x128xbf16>
    %329 = vector.shape_cast %328 : vector<8x128xbf16> to vector<1x8x128xbf16>
    %330 = vector.shape_cast %329 : vector<1x8x128xbf16> to vector<8x128xbf16>
    %c4480 = arith.constant 4480 : index
    %c0_134 = arith.constant 0 : index
    %331 = vector.load %arg3[%c4480, %c0_134] : memref<4864x128xbf16, #tpu.memory_space<vmem>>, vector<128x128xbf16>
    %cst_135 = arith.constant dense<0.000000e+00> : vector<8x128xf32>
    %332 = tpu.matmul %330, %331, %cst_135 {dimension_numbers = #tpu.dot_dimension_numbers<[1], [0], [0], [1], [0, 0, 1, 1], [], []>} : vector<8x128xbf16>, vector<128x128xbf16>, vector<8x128xf32> -> vector<8x128xf32>
    %c16 = arith.constant 16 : index
    %c0_136 = arith.constant 0 : index
    %333 = vector.load %arg4[%c16, %c0_136] : memref<19x128xf32, #tpu.memory_space<vmem>>, vector<1x128xf32>
    %334 = vector.broadcast %333 : vector<1x128xf32> to vector<8x128xf32>
    %335 = arith.addf %332, %334 : vector<8x128xf32>
    %cst_137 = arith.constant 0.000000e+00 : f32
    %336 = vector.broadcast %cst_137 : f32 to vector<8x128xf32>
    %337 = arith.maximumf %335, %336 : vector<8x128xf32>
    %338 = arith.truncf %337 : vector<8x128xf32> to vector<8x128xbf16>
    %339 = vector.shape_cast %338 : vector<8x128xbf16> to vector<1x8x128xbf16>
    %340 = vector.shape_cast %339 : vector<1x8x128xbf16> to vector<8x128xbf16>
    %c4608 = arith.constant 4608 : index
    %c0_138 = arith.constant 0 : index
    %341 = vector.load %arg3[%c4608, %c0_138] : memref<4864x128xbf16, #tpu.memory_space<vmem>>, vector<128x128xbf16>
    %cst_139 = arith.constant dense<0.000000e+00> : vector<8x128xf32>
    %342 = tpu.matmul %340, %341, %cst_139 {dimension_numbers = #tpu.dot_dimension_numbers<[1], [0], [0], [1], [0, 0, 1, 1], [], []>} : vector<8x128xbf16>, vector<128x128xbf16>, vector<8x128xf32> -> vector<8x128xf32>
    %c17 = arith.constant 17 : index
    %c0_140 = arith.constant 0 : index
    %343 = vector.load %arg4[%c17, %c0_140] : memref<19x128xf32, #tpu.memory_space<vmem>>, vector<1x128xf32>
    %344 = vector.broadcast %343 : vector<1x128xf32> to vector<8x128xf32>
    %345 = arith.addf %342, %344 : vector<8x128xf32>
    %cst_141 = arith.constant 0.000000e+00 : f32
    %346 = vector.broadcast %cst_141 : f32 to vector<8x128xf32>
    %347 = arith.maximumf %345, %346 : vector<8x128xf32>
    %348 = vector.shape_cast %329 : vector<1x8x128xbf16> to vector<8x128xbf16>
    %349 = arith.extf %348 : vector<8x128xbf16> to vector<8x128xf32>
    %350 = arith.addf %347, %349 : vector<8x128xf32>
    %cst_142 = arith.constant 0.000000e+00 : f32
    %351 = vector.broadcast %cst_142 : f32 to vector<8x128xf32>
    %352 = arith.maximumf %350, %351 : vector<8x128xf32>
    %353 = vector.shape_cast %352 : vector<8x128xf32> to vector<1x8x128xf32>
    %cst_143 = arith.constant dense<0.000000e+00> : vector<1x128xf32>
    %354 = vector.multi_reduction <add>, %353, %cst_143 [1] : vector<1x8x128xf32> to vector<1x128xf32>
    %355 = arith.truncf %354 : vector<1x128xf32> to vector<1x128xbf16>
    %c4736 = arith.constant 4736 : index
    %c0_144 = arith.constant 0 : index
    %356 = vector.load %arg3[%c4736, %c0_144] : memref<4864x128xbf16, #tpu.memory_space<vmem>>, vector<128x128xbf16>
    %cst_145 = arith.constant dense<0.000000e+00> : vector<1x128xf32>
    %357 = tpu.matmul %355, %356, %cst_145 {dimension_numbers = #tpu.dot_dimension_numbers<[1], [0], [0], [1], [0, 0, 1, 1], [], []>} : vector<1x128xbf16>, vector<128x128xbf16>, vector<1x128xf32> -> vector<1x128xf32>
    %c18 = arith.constant 18 : index
    %c0_146 = arith.constant 0 : index
    %358 = vector.load %arg4[%c18, %c0_146] : memref<19x128xf32, #tpu.memory_space<vmem>>, vector<1x128xf32>
    %359 = arith.addf %357, %358 : vector<1x128xf32>
    %360 = vector.shape_cast %359 : vector<1x128xf32> to vector<1x1x128xf32>
    %c0_147 = arith.constant 0 : index
    %c0_148 = arith.constant 0 : index
    %c0_149 = arith.constant 0 : index
    %361 = vector.load %arg5[%c0_147, %c0_148, %c0_149] : memref<1x1x128xf32, #tpu.memory_space<vmem>>, vector<1x1x128xf32>
    tpu.vector_store %arg5[%c0_147, %c0_148, %c0_149], %360 {strides = array<i32>} : memref<1x1x128xf32, #tpu.memory_space<vmem>>, vector<1x1x128xf32>,
    return
  }
  func.func @transform_0(%arg0: i32) -> (i32, i32, i32) {
    %c0_i32 = arith.constant 0 : i32
    %c0_i32_0 = arith.constant 0 : i32
    %c0_i32_1 = arith.constant 0 : i32
    return %arg0, %c0_i32, %c0_i32_0 : i32, i32, i32
  }
  func.func @transform_1(%arg0: i32) -> (i32, i32) {
    %c0_i32 = arith.constant 0 : i32
    %c0_i32_0 = arith.constant 0 : i32
    %c0_i32_1 = arith.constant 0 : i32
    return %c0_i32, %c0_i32_0 : i32, i32
  }
  func.func @transform_2(%arg0: i32) -> (i32, i32) {
    %c0_i32 = arith.constant 0 : i32
    %c0_i32_0 = arith.constant 0 : i32
    %c0_i32_1 = arith.constant 0 : i32
    return %c0_i32, %c0_i32_0 : i32, i32
  }
  func.func @transform_3(%arg0: i32) -> (i32, i32) {
    %c0_i32 = arith.constant 0 : i32
    %c0_i32_0 = arith.constant 0 : i32
    %c0_i32_1 = arith.constant 0 : i32
    return %c0_i32, %c0_i32_0 : i32, i32
  }
  func.func @transform_4(%arg0: i32) -> (i32, i32, i32) {
    %c0_i32 = arith.constant 0 : i32
    %c0_i32_0 = arith.constant 0 : i32
    %c0_i32_1 = arith.constant 0 : i32
    return %arg0, %c0_i32, %c0_i32_0 : i32, i32, i32
  }
}

</mosaic_0001>

<llo_original>
// kernel: _forward_impl.1
$region0: #{_forward_impl.1}
  #allocation0 [shape = 'u32[]', space=smem, size = 0x4, offset = 0x4, fixed_abs, tag = 'smem constant byte address 0x4 - core index']
  #allocation1 [shape = 'u32[144,128]{1,0:T(1,128)}', space=vmem, size = 0x12000, scoped, tag = 'internal scratch']
  %s0 = inlined_call_operand.vmem [shape: bf16[2,8,1024], index: 0, kind: input, shape index: {}]
  %s1 = inlined_call_operand.vmem [shape: bf16[1024,128], index: 1, kind: input, shape index: {}]
  %s2 = inlined_call_operand.hbm [shape: bf16[4864,128], index: 2, kind: input, shape index: {}]
  %s3 = inlined_call_operand.hbm [shape: f32[19,128], index: 3, kind: input, shape index: {}]
  %s4 = inlined_call_operand.hbm [shape: f32[2,1,128], index: 4, kind: output, shape index: {}]
  %s5 = sld [smem:[#allocation0]]
  $region57: #{_forward_impl.1} parent=0
    _
  %s7 = ssub.s32 1, %s5
  %s8 = scalar_select 0, %s7, %s5
  $region1: #{_forward_impl.1} parent=0
    #allocation2 [shape = 'u8[1245184]{0}', space=vmem, size = 0x130000, scoped, tag = 'input window, operand 2, single buffered']
    #allocation3 [shape = 's32[2]{0}', space=sflag, size = 0x8, scoped, tag = 'scoped memory for _forward_impl.1']
    #allocation4 [shape = 's32[2]{0}', space=sflag, size = 0x8, scoped, tag = 'scoped memory for _forward_impl.1']
    #allocation5 [shape = 'u8[12288]{0}', space=vmem, size = 0x3000, scoped, tag = 'input window, operand 3, single buffered']
    #allocation6 [shape = 's32[1]{0}', space=sflag, size = 0x4, scoped, tag = 'scoped memory for _forward_impl.1']
    #allocation7 [shape = 'u8[1024]{0}', space=vmem, size = 0x400, scoped, tag = 'output window, operand 0']
    %9 = vsyncpa [#allocation3], 0
    %10 = vsyncpa [#allocation6], 0
    %11 = vsyncpa [#allocation4], 0
    %s12 = scalar_lea.sflag [#allocation4], 1
    %13 = vsyncpa %s12, 0
    loop: start=0, step=1, limit=4
    $region2: #{_forward_impl.1} parent=1 // loop_pre_header
      _
    $region3: #{_forward_impl.1} parent=1 // loop_header
      %s15 = sphi 0, %s19
      %p16 = scmp.ge.s32.totalorder %s15, 4
      %s25 = sphi 0, %s27
      %s28 = sphi 0, %s25
      %s29 = sphi 0, %s28
      %s45 = sphi 0, %s29
      %s49 = sphi 0, %s49
      %s51 = sphi 0, %s49
      %s52 = sphi 0, %s51
      %s66 = sphi 0, %s52
      %s70 = sphi 0, %s70
      %s72 = sphi 0, %s70
      %s73 = sphi 0, %s72
      %s87 = sphi 0, %s73
      %s91 = sphi 0, %s91
      %s93 = sphi 0, %s91
      %s94 = sphi 0, %s93
      %s108 = sphi 0, %s94
      %s114 = sphi 0, %s116
      %s117 = sphi 0, %s114
      %s118 = sphi 0, %s117
      %s134 = sphi 0, %s118
    $region4: #{_forward_impl.1} parent=1 // loop_header_branch
      %18 = sbr.rel (%p16) target = $region8
    $region5: #{_forward_impl.1} parent=1 // loop_body
      %s20 = ssub.s32 %s15, 1
      %s21 = ssub.s32 %s15, 2
      %s22 = sadd.s32 %s15, 1
      %s23 = ssub.s32 %s15, %s22
      %p24 = scmp.eq.s32.totalorder %s23, 0
      %s26 = sadd.s32 %s25, 1
      %s27 = scalar_select %p24, %s25, %s26
      %p30 = pneg %p24
      %p31 = scmp.eq.s32.totalorder %s15, 1
      %p32 = por %p30, %p31
      %p33 = scmp.ne.s32.totalorder %s25, %s28
      %p34 = scmp.eq.s32.totalorder %s15, 0
      %p35 = por %p33, %p34
      %p36 = scmp.ne.s32.totalorder %s25, %s28
      %p37 = scmp.eq.s32.totalorder %s20, 1
      %p38 = por %p36, %p37
      %p39 = scmp.ne.s32.totalorder %s28, %s29
      %p40 = scmp.eq.s32.totalorder %s20, 0
      %p41 = por %p39, %p40
      %p42 = scmp.ne.s32.totalorder %s28, %s29
      %p43 = scmp.eq.s32.totalorder %s21, 1
      %p44 = por %p42, %p43
      %p46 = scmp.ne.s32.totalorder %s29, %s45
      %p47 = scmp.eq.s32.totalorder %s21, 0
      %p48 = por %p46, %p47
      %s50 = sadd.s32 %s49, 1
      %p53 = scmp.eq.s32.totalorder %s15, 1
      %p54 = scmp.ne.s32.totalorder %s49, %s51
      %p55 = scmp.eq.s32.totalorder %s15, 0
      %p56 = por %p54, %p55
      %p57 = scmp.ne.s32.totalorder %s49, %s51
      %p58 = scmp.eq.s32.totalorder %s20, 1
      %p59 = por %p57, %p58
      %p60 = scmp.ne.s32.totalorder %s51, %s52
      %p61 = scmp.eq.s32.totalorder %s20, 0
      %p62 = por %p60, %p61
      %p63 = scmp.ne.s32.totalorder %s51, %s52
      %p64 = scmp.eq.s32.totalorder %s21, 1
      %p65 = por %p63, %p64
      %p67 = scmp.ne.s32.totalorder %s52, %s66
      %p68 = scmp.eq.s32.totalorder %s21, 0
      %p69 = por %p67, %p68
      %s71 = sadd.s32 %s70, 1
      %p74 = scmp.eq.s32.totalorder %s15, 1
      %p75 = scmp.ne.s32.totalorder %s70, %s72
      %p76 = scmp.eq.s32.totalorder %s15, 0
      %p77 = por %p75, %p76
      %p78 = scmp.ne.s32.totalorder %s70, %s72
      %p79 = scmp.eq.s32.totalorder %s20, 1
      %p80 = por %p78, %p79
      %p81 = scmp.ne.s32.totalorder %s72, %s73
      %p82 = scmp.eq.s32.totalorder %s20, 0
      %p83 = por %p81, %p82
      %p84 = scmp.ne.s32.totalorder %s72, %s73
      %p85 = scmp.eq.s32.totalorder %s21, 1
      %p86 = por %p84, %p85
      %p88 = scmp.ne.s32.totalorder %s73, %s87
      %p89 = scmp.eq.s32.totalorder %s21, 0
      %p90 = por %p88, %p89
      %s92 = sadd.s32 %s91, 1
      %p95 = scmp.eq.s32.totalorder %s15, 1
      %p96 = scmp.ne.s32.totalorder %s91, %s93
      %p97 = scmp.eq.s32.totalorder %s15, 0
      %p98 = por %p96, %p97
      %p99 = scmp.ne.s32.totalorder %s91, %s93
      %p100 = scmp.eq.s32.totalorder %s20, 1
      %p101 = por %p99, %p100
      %p102 = scmp.ne.s32.totalorder %s93, %s94
      %p103 = scmp.eq.s32.totalorder %s20, 0
      %p104 = por %p102, %p103
      %p105 = scmp.ne.s32.totalorder %s93, %s94
      %p106 = scmp.eq.s32.totalorder %s21, 1
      %p107 = por %p105, %p106
      %p109 = scmp.ne.s32.totalorder %s94, %s108
      %p110 = scmp.eq.s32.totalorder %s21, 0
      %p111 = por %p109, %p110
      %s112 = ssub.s32 %s15, %s22
      %p113 = scmp.eq.s32.totalorder %s112, 0
      %s115 = sadd.s32 %s114, 1
      %s116 = scalar_select %p113, %s114, %s115
      %p119 = pneg %p113
      %p120 = scmp.eq.s32.totalorder %s15, 1
      %p121 = por %p119, %p120
      %p122 = scmp.ne.s32.totalorder %s114, %s117
      %p123 = scmp.eq.s32.totalorder %s15, 0
      %p124 = por %p122, %p123
      %p125 = scmp.ne.s32.totalorder %s114, %s117
      %p126 = scmp.eq.s32.totalorder %s20, 1
      %p127 = por %p125, %p126
      %p128 = scmp.ne.s32.totalorder %s117, %s118
      %p129 = scmp.eq.s32.totalorder %s20, 0
      %p130 = por %p128, %p129
      %p131 = scmp.ne.s32.totalorder %s117, %s118
      %p132 = scmp.eq.s32.totalorder %s21, 1
      %p133 = por %p131, %p132
      %p135 = scmp.ne.s32.totalorder %s118, %s134
      %p136 = scmp.eq.s32.totalorder %s21, 0
      %p137 = por %p135, %p136
      %p138 = scmp.le.s32.totalorder 1, %s15
      %p139 = scmp.lt.s32.totalorder %s15, 3
      %p140 = pnand %p138, %p139
      %p141 = pneg %p140
      // Predicated region
      $region9: #{_forward_impl.1} parent=5 // pred_check
        _
      $region10: #{_forward_impl.1} parent=5 // pred_check_branch
        %143 = sbr.rel (%p140) target = $region12
      $region11: #{_forward_impl.1} parent=5 // pred_region
        %s144 = ssub.s32 %s15, 1
        // Predicated region
        $region13: #{_forward_impl.1} parent=11 // pred_check
          %p145 = pneg %p62
        $region14: #{_forward_impl.1} parent=11 // pred_check_branch
          %147 = sbr.rel (%p145) target = $region16
        $region15: #{_forward_impl.1} parent=11 // pred_region
          _
        $region16: #{_forward_impl.1} parent=11 // pred_fallthru
          _
        // Predicated region
        $region17: #{_forward_impl.1} parent=11 // pred_check
          %p148 = pneg %p83
        $region18: #{_forward_impl.1} parent=11 // pred_check_branch
          %150 = sbr.rel (%p148) target = $region20
        $region19: #{_forward_impl.1} parent=11 // pred_region
          %s152 = ssub.s32 38912, 38912
          %153 = vsyncadd [#allocation3], %s152
          %s154 = sshll.u32 [#allocation2], 4
          %s155 = int_to_ptr.vmem [resolvable:$true] %s154
          %160 = dma.hbm_to_vmem [thread:$0]  %s2, 38912, %s155, [#allocation3], 64, 64, 4
        $region20: #{_forward_impl.1} parent=11 // pred_fallthru
          _
        // Predicated region
        $region21: #{_forward_impl.1} parent=11 // pred_check
          %p161 = pneg %p104
        $region22: #{_forward_impl.1} parent=11 // pred_check_branch
          %163 = sbr.rel (%p161) target = $region24
        $region23: #{_forward_impl.1} parent=11 // pred_region
          %s165 = ssub.s32 384, 384
          %166 = vsyncadd [#allocation6], %s165
          %s167 = sshll.u32 [#allocation5], 4
          %s168 = int_to_ptr.vmem [resolvable:$true] %s167
          %173 = dma.hbm_to_vmem [thread:$0]  %s3, 384, %s168, [#allocation6], 128, 128, 8
        $region24: #{_forward_impl.1} parent=11 // pred_fallthru
          _
      $region12: #{_forward_impl.1} parent=5 // pred_fallthru
        _
      %p174 = scmp.lt.s32.totalorder %s15, 2
      // Predicated region
      $region25: #{_forward_impl.1} parent=5 // pred_check
        %p175 = pneg %p174
      $region26: #{_forward_impl.1} parent=5 // pred_check_branch
        %177 = sbr.rel (%p175) target = $region28
      $region27: #{_forward_impl.1} parent=5 // pred_region
        // Predicated region
        $region29: #{_forward_impl.1} parent=27 // pred_check
          %p178 = pneg %p35
        $region30: #{_forward_impl.1} parent=27 // pred_check_branch
          %180 = sbr.rel (%p178) target = $region32
        $region31: #{_forward_impl.1} parent=27 // pred_region
          %p181 = scmp.lt.s32.totalorder %s15, 1
          %s182 = scalar_select %p181, %s15, 1
          %s183 = smul.addr %s182, 8
          %s184 = smul.addr %s183, 4
          %s185 = scalar_lea.vmem %s0, %s184
        $region32: #{_forward_impl.1} parent=27 // pred_fallthru
          _
      $region28: #{_forward_impl.1} parent=5 // pred_fallthru
        _
      %p186 = scmp.le.s32.totalorder 1, %s15
      %p187 = scmp.lt.s32.totalorder %s15, 3
      %p188 = pnand %p186, %p187
      %p189 = pneg %p188
      // Predicated region
      $region33: #{_forward_impl.1} parent=5 // pred_check
        _
      $region34: #{_forward_impl.1} parent=5 // pred_check_branch
        %191 = sbr.rel (%p188) target = $region36
      $region35: #{_forward_impl.1} parent=5 // pred_region
        %s192 = ssub.s32 %s15, 1
        // Predicated region
        $region37: #{_forward_impl.1} parent=35 // pred_check
          %p193 = pneg %p83
        $region38: #{_forward_impl.1} parent=35 // pred_check_branch
          %195 = sbr.rel (%p193) target = $region40
        $region39: #{_forward_impl.1} parent=35 // pred_region
          %196 = dma.done [#allocation3], 38912
        $region40: #{_forward_impl.1} parent=35 // pred_fallthru
          _
        // Predicated region
        $region41: #{_forward_impl.1} parent=35 // pred_check
          %p197 = pneg %p104
        $region42: #{_forward_impl.1} parent=35 // pred_check_branch
          %199 = sbr.rel (%p197) target = $region44
        $region43: #{_forward_impl.1} parent=35 // pred_region
          %200 = dma.done [#allocation6], 384
        $region44: #{_forward_impl.1} parent=35 // pred_fallthru
          _
        %p201 = scmp.lt.s32.totalorder %s20, 1
        %s202 = scalar_select %p201, %s20, 1
        %s203 = smul.addr %s202, 8
        %s204 = smul.addr %s203, 4
        %s205 = scalar_lea.vmem %s0, %s204
        %p206 = pneg %p41
        %p207 = pneg %p38
        %p208 = pneg %p62
        %p209 = pneg %p59
        %p210 = pneg %p83
        %p211 = pneg %p80
        %p212 = pneg %p104
        %p213 = pneg %p101
        %p214 = pneg %p130
        %p215 = pneg %p127
        %s216 = sand.u32 %s117, 1
        %s217 = scalar_lea.sflag [#allocation4], %s216
        %s218 = sand.u32 %s117, 1
        %s219 = scalar_lea.vmem [#allocation7], %s218
        %p220 = scmp.lt.s32.totalorder %s20, 1
        %s221 = scalar_select %p220, %s20, 1
        %s222 = smul.addr %s221, 8
        %s223 = smul.addr %s222, 4
        %s224 = scalar_lea.vmem %s0, %s223
        %v226 = vld [vmem:[%s224] sm:$0xff]
        %v227 = vld [vmem:[%s224 + $0x8] sm:$0xff]
        %v228 = vld [vmem:[%s224 + $0x10] sm:$0xff]
        %v229 = vld [vmem:[%s224 + $0x18] sm:$0xff]
        %v230 = vld [vmem:[%s1] sm:$0xf]
        %v231 = vld [vmem:[%s1 + $0x4] sm:$0xf]
        %v232 = vld [vmem:[%s1 + $0x8] sm:$0xf]
        %v233 = vld [vmem:[%s1 + $0xc] sm:$0xf]
        %v234 = vld [vmem:[%s1 + $0x10] sm:$0xf]
        %v235 = vld [vmem:[%s1 + $0x14] sm:$0xf]
        %v236 = vld [vmem:[%s1 + $0x18] sm:$0xf]
        %v237 = vld [vmem:[%s1 + $0x1c] sm:$0xf]
        %v238 = vld [vmem:[%s1 + $0x20] sm:$0xf]
        %v239 = vld [vmem:[%s1 + $0x24] sm:$0xf]
        %v240 = vld [vmem:[%s1 + $0x28] sm:$0xf]
        %v241 = vld [vmem:[%s1 + $0x2c] sm:$0xf]
        %v242 = vld [vmem:[%s1 + $0x30] sm:$0xf]
        %v243 = vld [vmem:[%s1 + $0x34] sm:$0xf]
        %v244 = vld [vmem:[%s1 + $0x38] sm:$0xf]
        %v245 = vld [vmem:[%s1 + $0x3c] sm:$0xf]
        %v246 = vld [vmem:[%s1 + $0x40] sm:$0xf]
        %v247 = vld [vmem:[%s1 + $0x44] sm:$0xf]
        %v248 = vld [vmem:[%s1 + $0x48] sm:$0xf]
        %v249 = vld [vmem:[%s1 + $0x4c] sm:$0xf]
        %v250 = vld [vmem:[%s1 + $0x50] sm:$0xf]
        %v251 = vld [vmem:[%s1 + $0x54] sm:$0xf]
        %v252 = vld [vmem:[%s1 + $0x58] sm:$0xf]
        %v253 = vld [vmem:[%s1 + $0x5c] sm:$0xf]
        %v254 = vld [vmem:[%s1 + $0x60] sm:$0xf]
        %v255 = vld [vmem:[%s1 + $0x64] sm:$0xf]
        %v256 = vld [vmem:[%s1 + $0x68] sm:$0xf]
        %v257 = vld [vmem:[%s1 + $0x6c] sm:$0xf]
        %v258 = vld [vmem:[%s1 + $0x70] sm:$0xf]
        %v259 = vld [vmem:[%s1 + $0x74] sm:$0xf]
        %v260 = vld [vmem:[%s1 + $0x78] sm:$0xf]
        %v261 = vld [vmem:[%s1 + $0x7c] sm:$0xf]
        %v262 = vld [vmem:[%s1 + $0x80] sm:$0xf]
        %v263 = vld [vmem:[%s1 + $0x84] sm:$0xf]
        %v264 = vld [vmem:[%s1 + $0x88] sm:$0xf]
        %v265 = vld [vmem:[%s1 + $0x8c] sm:$0xf]
        %v266 = vld [vmem:[%s1 + $0x90] sm:$0xf]
        %v267 = vld [vmem:[%s1 + $0x94] sm:$0xf]
        %v268 = vld [vmem:[%s1 + $0x98] sm:$0xf]
        %v269 = vld [vmem:[%s1 + $0x9c] sm:$0xf]
        %v270 = vld [vmem:[%s1 + $0xa0] sm:$0xf]
        %v271 = vld [vmem:[%s1 + $0xa4] sm:$0xf]
        %v272 = vld [vmem:[%s1 + $0xa8] sm:$0xf]
        %v273 = vld [vmem:[%s1 + $0xac] sm:$0xf]
        %v274 = vld [vmem:[%s1 + $0xb0] sm:$0xf]
        %v275 = vld [vmem:[%s1 + $0xb4] sm:$0xf]
        %v276 = vld [vmem:[%s1 + $0xb8] sm:$0xf]
        %v277 = vld [vmem:[%s1 + $0xbc] sm:$0xf]
        %v278 = vld [vmem:[%s1 + $0xc0] sm:$0xf]
        %v279 = vld [vmem:[%s1 + $0xc4] sm:$0xf]
        %v280 = vld [vmem:[%s1 + $0xc8] sm:$0xf]
        %v281 = vld [vmem:[%s1 + $0xcc] sm:$0xf]
        %v282 = vld [vmem:[%s1 + $0xd0] sm:$0xf]
        %v283 = vld [vmem:[%s1 + $0xd4] sm:$0xf]
        %v284 = vld [vmem:[%s1 + $0xd8] sm:$0xf]
        %v285 = vld [vmem:[%s1 + $0xdc] sm:$0xf]
        %v286 = vld [vmem:[%s1 + $0xe0] sm:$0xf]
        %v287 = vld [vmem:[%s1 + $0xe4] sm:$0xf]
        %v288 = vld [vmem:[%s1 + $0xe8] sm:$0xf]
        %v289 = vld [vmem:[%s1 + $0xec] sm:$0xf]
        %v290 = vld [vmem:[%s1 + $0xf0] sm:$0xf]
        %v291 = vld [vmem:[%s1 + $0xf4] sm:$0xf]
        %v292 = vld [vmem:[%s1 + $0xf8] sm:$0xf]
        %v293 = vld [vmem:[%s1 + $0xfc] sm:$0xf]
        %v294 = vld [vmem:[%s1 + $0x100] sm:$0xf]
        %v295 = vld [vmem:[%s1 + $0x104] sm:$0xf]
        %v296 = vld [vmem:[%s1 + $0x108] sm:$0xf]
        %v297 = vld [vmem:[%s1 + $0x10c] sm:$0xf]
        %v298 = vld [vmem:[%s1 + $0x110] sm:$0xf]
        %v299 = vld [vmem:[%s1 + $0x114] sm:$0xf]
        %v300 = vld [vmem:[%s1 + $0x118] sm:$0xf]
        %v301 = vld [vmem:[%s1 + $0x11c] sm:$0xf]
        %v302 = vld [vmem:[%s1 + $0x120] sm:$0xf]
        %v303 = vld [vmem:[%s1 + $0x124] sm:$0xf]
        %v304 = vld [vmem:[%s1 + $0x128] sm:$0xf]
        %v305 = vld [vmem:[%s1 + $0x12c] sm:$0xf]
        %v306 = vld [vmem:[%s1 + $0x130] sm:$0xf]
        %v307 = vld [vmem:[%s1 + $0x134] sm:$0xf]
        %v308 = vld [vmem:[%s1 + $0x138] sm:$0xf]
        %v309 = vld [vmem:[%s1 + $0x13c] sm:$0xf]
        %v310 = vld [vmem:[%s1 + $0x140] sm:$0xf]
        %v311 = vld [vmem:[%s1 + $0x144] sm:$0xf]
        %v312 = vld [vmem:[%s1 + $0x148] sm:$0xf]
        %v313 = vld [vmem:[%s1 + $0x14c] sm:$0xf]
        %v314 = vld [vmem:[%s1 + $0x150] sm:$0xf]
        %v315 = vld [vmem:[%s1 + $0x154] sm:$0xf]
        %v316 = vld [vmem:[%s1 + $0x158] sm:$0xf]
        %v317 = vld [vmem:[%s1 + $0x15c] sm:$0xf]
        %v318 = vld [vmem:[%s1 + $0x160] sm:$0xf]
        %v319 = vld [vmem:[%s1 + $0x164] sm:$0xf]
        %v320 = vld [vmem:[%s1 + $0x168] sm:$0xf]
        %v321 = vld [vmem:[%s1 + $0x16c] sm:$0xf]
        %v322 = vld [vmem:[%s1 + $0x170] sm:$0xf]
        %v323 = vld [vmem:[%s1 + $0x174] sm:$0xf]
        %v324 = vld [vmem:[%s1 + $0x178] sm:$0xf]
        %v325 = vld [vmem:[%s1 + $0x17c] sm:$0xf]
        %v326 = vld [vmem:[%s1 + $0x180] sm:$0xf]
        %v327 = vld [vmem:[%s1 + $0x184] sm:$0xf]
        %v328 = vld [vmem:[%s1 + $0x188] sm:$0xf]
        %v329 = vld [vmem:[%s1 + $0x18c] sm:$0xf]
        %v330 = vld [vmem:[%s1 + $0x190] sm:$0xf]
        %v331 = vld [vmem:[%s1 + $0x194] sm:$0xf]
        %v332 = vld [vmem:[%s1 + $0x198] sm:$0xf]
        %v333 = vld [vmem:[%s1 + $0x19c] sm:$0xf]
        %v334 = vld [vmem:[%s1 + $0x1a0] sm:$0xf]
        %v335 = vld [vmem:[%s1 + $0x1a4] sm:$0xf]
        %v336 = vld [vmem:[%s1 + $0x1a8] sm:$0xf]
        %v337 = vld [vmem:[%s1 + $0x1ac] sm:$0xf]
        %v338 = vld [vmem:[%s1 + $0x1b0] sm:$0xf]
        %v339 = vld [vmem:[%s1 + $0x1b4] sm:$0xf]
        %v340 = vld [vmem:[%s1 + $0x1b8] sm:$0xf]
        %v341 = vld [vmem:[%s1 + $0x1bc] sm:$0xf]
        %v342 = vld [vmem:[%s1 + $0x1c0] sm:$0xf]
        %v343 = vld [vmem:[%s1 + $0x1c4] sm:$0xf]
        %v344 = vld [vmem:[%s1 + $0x1c8] sm:$0xf]
        %v345 = vld [vmem:[%s1 + $0x1cc] sm:$0xf]
        %v346 = vld [vmem:[%s1 + $0x1d0] sm:$0xf]
        %v347 = vld [vmem:[%s1 + $0x1d4] sm:$0xf]
        %v348 = vld [vmem:[%s1 + $0x1d8] sm:$0xf]
        %v349 = vld [vmem:[%s1 + $0x1dc] sm:$0xf]
        %v350 = vld [vmem:[%s1 + $0x1e0] sm:$0xf]
        %v351 = vld [vmem:[%s1 + $0x1e4] sm:$0xf]
        %v352 = vld [vmem:[%s1 + $0x1e8] sm:$0xf]
        %v353 = vld [vmem:[%s1 + $0x1ec] sm:$0xf]
        %v354 = vld [vmem:[%s1 + $0x1f0] sm:$0xf]
        %v355 = vld [vmem:[%s1 + $0x1f4] sm:$0xf]
        %v356 = vld [vmem:[%s1 + $0x1f8] sm:$0xf]
        %v357 = vld [vmem:[%s1 + $0x1fc] sm:$0xf]
        %v358 = vld [vmem:[#allocation5] sm:$0x1]
        %v359 = vlaneseq
        %v360 = vshrl.u32 %v359, 7
        %v361 = vsub.s32 0, %v360
        %v362 = vrot.slane %v358, %v361
        %v367 = vunpack.c.l.b16 %v226
        %v368 = vunpack.c.h.b16 %v226
        %v369 = vunpack.c.l.b16 %v227
        %v370 = vunpack.c.h.b16 %v227
        %v371 = vunpack.c.l.b16 %v228
        %v372 = vunpack.c.h.b16 %v228
        %v373 = vunpack.c.l.b16 %v229
        %v374 = vunpack.c.h.b16 %v229
        %v375 = vpack.c.b16 %v367, %v367
        %v376 = vpack.c.b16 %v368, %v368
        %v377 = vpack.c.b16 %v369, %v369
        %v378 = vpack.c.b16 %v370, %v370
        %v379 = vpack.c.b16 %v371, %v371
        %v380 = vpack.c.b16 %v372, %v372
        %v381 = vpack.c.b16 %v373, %v373
        %v382 = vpack.c.b16 %v374, %v374
        %v519 = vunpack.c.l.b16 %v230
        %v520 = vunpack.c.l.b16 %v231
        %v521 = vunpack.c.l.b16 %v232
        %v522 = vunpack.c.l.b16 %v233
        %v523 = vunpack.c.l.b16 %v234
        %v524 = vunpack.c.l.b16 %v235
        %v525 = vunpack.c.l.b16 %v236
        %v526 = vunpack.c.l.b16 %v237
        %v527 = vunpack.c.l.b16 %v238
        %v528 = vunpack.c.l.b16 %v239
        %v529 = vunpack.c.l.b16 %v240
        %v530 = vunpack.c.l.b16 %v241
        %v531 = vunpack.c.l.b16 %v242
        %v532 = vunpack.c.l.b16 %v243
        %v533 = vunpack.c.l.b16 %v244
        %v534 = vunpack.c.l.b16 %v245
        %v535 = vunpack.c.l.b16 %v246
        %v536 = vunpack.c.l.b16 %v247
        %v537 = vunpack.c.l.b16 %v248
        %v538 = vunpack.c.l.b16 %v249
        %v539 = vunpack.c.l.b16 %v250
        %v540 = vunpack.c.l.b16 %v251
        %v541 = vunpack.c.l.b16 %v252
        %v542 = vunpack.c.l.b16 %v253
        %v543 = vunpack.c.l.b16 %v254
        %v544 = vunpack.c.l.b16 %v255
        %v545 = vunpack.c.l.b16 %v256
        %v546 = vunpack.c.l.b16 %v257
        %v547 = vunpack.c.l.b16 %v258
        %v548 = vunpack.c.l.b16 %v259
        %v549 = vunpack.c.l.b16 %v260
        %v550 = vunpack.c.l.b16 %v261
        %v551 = vunpack.c.l.b16 %v262
        %v552 = vunpack.c.l.b16 %v263
        %v553 = vunpack.c.l.b16 %v264
        %v554 = vunpack.c.l.b16 %v265
        %v555 = vunpack.c.l.b16 %v266
        %v556 = vunpack.c.l.b16 %v267
        %v557 = vunpack.c.l.b16 %v268
        %v558 = vunpack.c.l.b16 %v269
        %v559 = vunpack.c.l.b16 %v270
        %v560 = vunpack.c.l.b16 %v271
        %v561 = vunpack.c.l.b16 %v272
        %v562 = vunpack.c.l.b16 %v273
        %v563 = vunpack.c.l.b16 %v274
        %v564 = vunpack.c.l.b16 %v275
        %v565 = vunpack.c.l.b16 %v276
        %v566 = vunpack.c.l.b16 %v277
        %v567 = vunpack.c.l.b16 %v278
        %v568 = vunpack.c.l.b16 %v279
        %v569 = vunpack.c.l.b16 %v280
        %v570 = vunpack.c.l.b16 %v281
        %v571 = vunpack.c.l.b16 %v282
        %v572 = vunpack.c.l.b16 %v283
        %v573 = vunpack.c.l.b16 %v284
        %v574 = vunpack.c.l.b16 %v285
        %v575 = vunpack.c.l.b16 %v286
        %v576 = vunpack.c.l.b16 %v287
        %v577 = vunpack.c.l.b16 %v288
        %v578 = vunpack.c.l.b16 %v289
        %v579 = vunpack.c.l.b16 %v290
        %v580 = vunpack.c.l.b16 %v291
        %v581 = vunpack.c.l.b16 %v292
        %v582 = vunpack.c.l.b16 %v293
        %v583 = vunpack.c.l.b16 %v294
        %v584 = vunpack.c.l.b16 %v295
        %v585 = vunpack.c.l.b16 %v296
        %v586 = vunpack.c.l.b16 %v297
        %v587 = vunpack.c.l.b16 %v298
        %v588 = vunpack.c.l.b16 %v299
        %v589 = vunpack.c.l.b16 %v300
        %v590 = vunpack.c.l.b16 %v301
        %v591 = vunpack.c.l.b16 %v302
        %v592 = vunpack.c.l.b16 %v303
        %v593 = vunpack.c.l.b16 %v304
        %v594 = vunpack.c.l.b16 %v305
        %v595 = vunpack.c.l.b16 %v306
        %v596 = vunpack.c.l.b16 %v307
        %v597 = vunpack.c.l.b16 %v308
        %v598 = vunpack.c.l.b16 %v309
        %v599 = vunpack.c.l.b16 %v310
        %v600 = vunpack.c.l.b16 %v311
        %v601 = vunpack.c.l.b16 %v312
        %v602 = vunpack.c.l.b16 %v313
        %v603 = vunpack.c.l.b16 %v314
        %v604 = vunpack.c.l.b16 %v315
        %v605 = vunpack.c.l.b16 %v316
        %v606 = vunpack.c.l.b16 %v317
        %v607 = vunpack.c.l.b16 %v318
        %v608 = vunpack.c.l.b16 %v319
        %v609 = vunpack.c.l.b16 %v320
        %v610 = vunpack.c.l.b16 %v321
        %v611 = vunpack.c.l.b16 %v322
        %v612 = vunpack.c.l.b16 %v323
        %v613 = vunpack.c.l.b16 %v324
        %v614 = vunpack.c.l.b16 %v325
        %v615 = vunpack.c.l.b16 %v326
        %v616 = vunpack.c.l.b16 %v327
        %v617 = vunpack.c.l.b16 %v328
        %v618 = vunpack.c.l.b16 %v329
        %v619 = vunpack.c.l.b16 %v330
        %v620 = vunpack.c.l.b16 %v331
        %v621 = vunpack.c.l.b16 %v332
        %v622 = vunpack.c.l.b16 %v333
        %v623 = vunpack.c.l.b16 %v334
        %v624 = vunpack.c.l.b16 %v335
        %v625 = vunpack.c.l.b16 %v336
        %v626 = vunpack.c.l.b16 %v337
        %v627 = vunpack.c.l.b16 %v338
        %v628 = vunpack.c.l.b16 %v339
        %v629 = vunpack.c.l.b16 %v340
        %v630 = vunpack.c.l.b16 %v341
        %v631 = vunpack.c.l.b16 %v342
        %v632 = vunpack.c.l.b16 %v343
        %v633 = vunpack.c.l.b16 %v344
        %v634 = vunpack.c.l.b16 %v345
        %v635 = vunpack.c.l.b16 %v346
        %v636 = vunpack.c.l.b16 %v347
        %v637 = vunpack.c.l.b16 %v348
        %v638 = vunpack.c.l.b16 %v349
        %v639 = vunpack.c.l.b16 %v350
        %v640 = vunpack.c.l.b16 %v351
        %v641 = vunpack.c.l.b16 %v352
        %v642 = vunpack.c.l.b16 %v353
        %v643 = vunpack.c.l.b16 %v354
        %v644 = vunpack.c.l.b16 %v355
        %v645 = vunpack.c.l.b16 %v356
        %v646 = vunpack.c.l.b16 %v357
        %v647 = vpack.c.b16 %v520, %v519
        %v648 = vpack.c.b16 %v522, %v521
        %v649 = vpack.c.b16 %v524, %v523
        %v650 = vpack.c.b16 %v526, %v525
        %v651 = vpack.c.b16 %v528, %v527
        %v652 = vpack.c.b16 %v530, %v529
        %v653 = vpack.c.b16 %v532, %v531
        %v654 = vpack.c.b16 %v534, %v533
        %v655 = vpack.c.b16 %v536, %v535
        %v656 = vpack.c.b16 %v538, %v537
        %v657 = vpack.c.b16 %v540, %v539
        %v658 = vpack.c.b16 %v542, %v541
        %v659 = vpack.c.b16 %v544, %v543
        %v660 = vpack.c.b16 %v546, %v545
        %v661 = vpack.c.b16 %v548, %v547
        %v662 = vpack.c.b16 %v550, %v549
        %v663 = vpack.c.b16 %v552, %v551
        %v664 = vpack.c.b16 %v554, %v553
        %v665 = vpack.c.b16 %v556, %v555
        %v666 = vpack.c.b16 %v558, %v557
        %v667 = vpack.c.b16 %v560, %v559
        %v668 = vpack.c.b16 %v562, %v561
        %v669 = vpack.c.b16 %v564, %v563
        %v670 = vpack.c.b16 %v566, %v565
        %v671 = vpack.c.b16 %v568, %v567
        %v672 = vpack.c.b16 %v570, %v569
        %v673 = vpack.c.b16 %v572, %v571
        %v674 = vpack.c.b16 %v574, %v573
        %v675 = vpack.c.b16 %v576, %v575
        %v676 = vpack.c.b16 %v578, %v577
        %v677 = vpack.c.b16 %v580, %v579
        %v678 = vpack.c.b16 %v582, %v581
        %v679 = vpack.c.b16 %v584, %v583
        %v680 = vpack.c.b16 %v586, %v585
        %v681 = vpack.c.b16 %v588, %v587
        %v682 = vpack.c.b16 %v590, %v589
        %v683 = vpack.c.b16 %v592, %v591
        %v684 = vpack.c.b16 %v594, %v593
        %v685 = vpack.c.b16 %v596, %v595
        %v686 = vpack.c.b16 %v598, %v597
        %v687 = vpack.c.b16 %v600, %v599
        %v688 = vpack.c.b16 %v602, %v601
        %v689 = vpack.c.b16 %v604, %v603
        %v690 = vpack.c.b16 %v606, %v605
        %v691 = vpack.c.b16 %v608, %v607
        %v692 = vpack.c.b16 %v610, %v609
        %v693 = vpack.c.b16 %v612, %v611
        %v694 = vpack.c.b16 %v614, %v613
        %v695 = vpack.c.b16 %v616, %v615
        %v696 = vpack.c.b16 %v618, %v617
        %v697 = vpack.c.b16 %v620, %v619
        %v698 = vpack.c.b16 %v622, %v621
        %v699 = vpack.c.b16 %v624, %v623
        %v700 = vpack.c.b16 %v626, %v625
        %v701 = vpack.c.b16 %v628, %v627
        %v702 = vpack.c.b16 %v630, %v629
        %v703 = vpack.c.b16 %v632, %v631
        %v704 = vpack.c.b16 %v634, %v633
        %v705 = vpack.c.b16 %v636, %v635
        %v706 = vpack.c.b16 %v638, %v637
        %v707 = vpack.c.b16 %v640, %v639
        %v708 = vpack.c.b16 %v642, %v641
        %v709 = vpack.c.b16 %v644, %v643
        %v710 = vpack.c.b16 %v646, %v645
        %775 = vmatprep.subr.bf16.mxu0 0
        %776 = vmatpush1.bf16.msra.mxu0 %v647
        %777 = vmatprep.subr.bf16.mxu0 0
        %778 = vmatpush1.bf16.msra.mxu0 %v648
        %779 = vmatprep.subr.bf16.mxu0 0
        %780 = vmatpush1.bf16.msra.mxu0 %v649
        %781 = vmatprep.subr.bf16.mxu0 0
        %782 = vmatpush1.bf16.msra.mxu0 %v650
        %783 = vmatprep.subr.bf16.mxu0 0
        %784 = vmatpush1.bf16.msra.mxu0 %v651
        %785 = vmatprep.subr.bf16.mxu0 0
        %786 = vmatpush1.bf16.msra.mxu0 %v652
        %787 = vmatprep.subr.bf16.mxu0 0
        %788 = vmatpush1.bf16.msra.mxu0 %v653
        %789 = vmatprep.subr.bf16.mxu0 0
        %790 = vmatpush1.bf16.msra.mxu0 %v654
        %791 = vmatprep.subr.bf16.mxu0 0
        %792 = vmatpush1.bf16.msra.mxu0 %v655
        %793 = vmatprep.subr.bf16.mxu0 0
        %794 = vmatpush1.bf16.msra.mxu0 %v656
        %795 = vmatprep.subr.bf16.mxu0 0
        %796 = vmatpush1.bf16.msra.mxu0 %v657
        %797 = vmatprep.subr.bf16.mxu0 0
        %798 = vmatpush1.bf16.msra.mxu0 %v658
        %799 = vmatprep.subr.bf16.mxu0 0
        %800 = vmatpush1.bf16.msra.mxu0 %v659
        %801 = vmatprep.subr.bf16.mxu0 0
        %802 = vmatpush1.bf16.msra.mxu0 %v660
        %803 = vmatprep.subr.bf16.mxu0 0
        %804 = vmatpush1.bf16.msra.mxu0 %v661
        %805 = vmatprep.subr.bf16.mxu0 0
        %806 = vmatpush1.bf16.msra.mxu0 %v662
        %807 = vmatprep.mubr.bf16.mxu0 %v376
        %808 = vmatmul.mubr.bf16.gmra.mrb[0].mxu0 %v375
        %v809 = vpop.f32.mrb[0].mxu0
        %v810 = vadd.f32 %v362, %v809
        %v811 = vpop.f32.mrb[0].mxu0
        %v812 = vpop.f32.mrb[0].mxu0
        %v813 = vpop.f32.mrb[0].mxu0
        %814 = vdwg.mxu0
        %815 = vmatprep.subr.bf16.mxu0 0
        %816 = vmatpush1.bf16.msra.mxu0 %v663
        %817 = vmatprep.subr.bf16.mxu0 0
        %818 = vmatpush1.bf16.msra.mxu0 %v664
        %819 = vmatprep.subr.bf16.mxu0 0
        %820 = vmatpush1.bf16.msra.mxu0 %v665
        %821 = vmatprep.subr.bf16.mxu0 0
        %822 = vmatpush1.bf16.msra.mxu0 %v666
        %823 = vmatprep.subr.bf16.mxu0 0
        %824 = vmatpush1.bf16.msra.mxu0 %v667
        %825 = vmatprep.subr.bf16.mxu0 0
        %826 = vmatpush1.bf16.msra.mxu0 %v668
        %827 = vmatprep.subr.bf16.mxu0 0
        %828 = vmatpush1.bf16.msra.mxu0 %v669
        %829 = vmatprep.subr.bf16.mxu0 0
        %830 = vmatpush1.bf16.msra.mxu0 %v670
        %831 = vmatprep.subr.bf16.mxu0 0
        %832 = vmatpush1.bf16.msra.mxu0 %v671
        %833 = vmatprep.subr.bf16.mxu0 0
        %834 = vmatpush1.bf16.msra.mxu0 %v672
        %835 = vmatprep.subr.bf16.mxu0 0
        %836 = vmatpush1.bf16.msra.mxu0 %v673
        %837 = vmatprep.subr.bf16.mxu0 0
        %838 = vmatpush1.bf16.msra.mxu0 %v674
        %839 = vmatprep.subr.bf16.mxu0 0
        %840 = vmatpush1.bf16.msra.mxu0 %v675
        %841 = vmatprep.subr.bf16.mxu0 0
        %842 = vmatpush1.bf16.msra.mxu0 %v676
        %843 = vmatprep.subr.bf16.mxu0 0
        %844 = vmatpush1.bf16.msra.mxu0 %v677
        %845 = vmatprep.subr.bf16.mxu0 0
        %846 = vmatpush1.bf16.msra.mxu0 %v678
        %847 = vmatprep.mubr.bf16.mxu0 %v378
        %848 = vmatmul.mubr.bf16.gmra.mrb[0].mxu0 %v377
        %v849 = vpop.f32.mrb[0].mxu0
        %v850 = vadd.f32 %v810, %v849
        %v851 = vpop.f32.mrb[0].mxu0
        %v852 = vpop.f32.mrb[0].mxu0
        %v853 = vpop.f32.mrb[0].mxu0
        %854 = vdwg.mxu0
        %855 = vmatprep.subr.bf16.mxu0 0
        %856 = vmatpush1.bf16.msra.mxu0 %v679
        %857 = vmatprep.subr.bf16.mxu0 0
        %858 = vmatpush1.bf16.msra.mxu0 %v680
        %859 = vmatprep.subr.bf16.mxu0 0
        %860 = vmatpush1.bf16.msra.mxu0 %v681
        %861 = vmatprep.subr.bf16.mxu0 0
        %862 = vmatpush1.bf16.msra.mxu0 %v682
        %863 = vmatprep.subr.bf16.mxu0 0
        %864 = vmatpush1.bf16.msra.mxu0 %v683
        %865 = vmatprep.subr.bf16.mxu0 0
        %866 = vmatpush1.bf16.msra.mxu0 %v684
        %867 = vmatprep.subr.bf16.mxu0 0
        %868 = vmatpush1.bf16.msra.mxu0 %v685
        %869 = vmatprep.subr.bf16.mxu0 0
        %870 = vmatpush1.bf16.msra.mxu0 %v686
        %871 = vmatprep.subr.bf16.mxu0 0
        %872 = vmatpush1.bf16.msra.mxu0 %v687
        %873 = vmatprep.subr.bf16.mxu0 0
        %874 = vmatpush1.bf16.msra.mxu0 %v688
        %875 = vmatprep.subr.bf16.mxu0 0
        %876 = vmatpush1.bf16.msra.mxu0 %v689
        %877 = vmatprep.subr.bf16.mxu0 0
        %878 = vmatpush1.bf16.msra.mxu0 %v690
        %879 = vmatprep.subr.bf16.mxu0 0
        %880 = vmatpush1.bf16.msra.mxu0 %v691
        %881 = vmatprep.subr.bf16.mxu0 0
        %882 = vmatpush1.bf16.msra.mxu0 %v692
        %883 = vmatprep.subr.bf16.mxu0 0
        %884 = vmatpush1.bf16.msra.mxu0 %v693
        %885 = vmatprep.subr.bf16.mxu0 0
        %886 = vmatpush1.bf16.msra.mxu0 %v694
        %887 = vmatprep.mubr.bf16.mxu0 %v380
        %888 = vmatmul.mubr.bf16.gmra.mrb[0].mxu0 %v379
        %v889 = vpop.f32.mrb[0].mxu0
        %v890 = vadd.f32 %v850, %v889
        %v891 = vpop.f32.mrb[0].mxu0
        %v892 = vpop.f32.mrb[0].mxu0
        %v893 = vpop.f32.mrb[0].mxu0
        %894 = vdwg.mxu0
        %895 = vmatprep.subr.bf16.mxu0 0
        %896 = vmatpush1.bf16.msra.mxu0 %v695
        %897 = vmatprep.subr.bf16.mxu0 0
        %898 = vmatpush1.bf16.msra.mxu0 %v696
        %899 = vmatprep.subr.bf16.mxu0 0
        %900 = vmatpush1.bf16.msra.mxu0 %v697
        %901 = vmatprep.subr.bf16.mxu0 0
        %902 = vmatpush1.bf16.msra.mxu0 %v698
        %903 = vmatprep.subr.bf16.mxu0 0
        %904 = vmatpush1.bf16.msra.mxu0 %v699
        %905 = vmatprep.subr.bf16.mxu0 0
        %906 = vmatpush1.bf16.msra.mxu0 %v700
        %907 = vmatprep.subr.bf16.mxu0 0
        %908 = vmatpush1.bf16.msra.mxu0 %v701
        %909 = vmatprep.subr.bf16.mxu0 0
        %910 = vmatpush1.bf16.msra.mxu0 %v702
        %911 = vmatprep.subr.bf16.mxu0 0
        %912 = vmatpush1.bf16.msra.mxu0 %v703
        %913 = vmatprep.subr.bf16.mxu0 0
        %914 = vmatpush1.bf16.msra.mxu0 %v704
        %915 = vmatprep.subr.bf16.mxu0 0
        %916 = vmatpush1.bf16.msra.mxu0 %v705
        %917 = vmatprep.subr.bf16.mxu0 0
        %918 = vmatpush1.bf16.msra.mxu0 %v706
        %919 = vmatprep.subr.bf16.mxu0 0
        %920 = vmatpush1.bf16.msra.mxu0 %v707
        %921 = vmatprep.subr.bf16.mxu0 0
        %922 = vmatpush1.bf16.msra.mxu0 %v708
        %923 = vmatprep.subr.bf16.mxu0 0
        %924 = vmatpush1.bf16.msra.mxu0 %v709
        %925 = vmatprep.subr.bf16.mxu0 0
        %926 = vmatpush1.bf16.msra.mxu0 %v710
        %927 = vmatprep.mubr.bf16.mxu0 %v382
        %928 = vmatmul.mubr.bf16.gmra.mrb[0].mxu0 %v381
        %v929 = vpop.f32.mrb[0].mxu0
        %v930 = vadd.f32 %v890, %v929
        %v931 = vpop.f32.mrb[0].mxu0
        %v932 = vpop.f32.mrb[0].mxu0
        %v933 = vpop.f32.mrb[0].mxu0
        %934 = vdwg.mxu0
        %v935 = vmax.f32 %v930, 0.0
        %v936 = vpack.c.bf16 %v935, %v935
        %v938 = vrot.slane %v936, 5
        %vm939 = vcmask 1042432
        %v942 = vsel %vm939, 0, %v938
        %v944 = vld [vmem:[#allocation2] sm:$0xf]
        %v945 = vld [vmem:[#allocation2 + $0x4] sm:$0xf]
        %v946 = vld [vmem:[#allocation2 + $0x8] sm:$0xf]
        %v947 = vld [vmem:[#allocation2 + $0xc] sm:$0xf]
        %v948 = vld [vmem:[#allocation2 + $0x10] sm:$0xf]
        %v949 = vld [vmem:[#allocation2 + $0x14] sm:$0xf]
        %v950 = vld [vmem:[#allocation2 + $0x18] sm:$0xf]
        %v951 = vld [vmem:[#allocation2 + $0x1c] sm:$0xf]
        %v952 = vld [vmem:[#allocation2 + $0x20] sm:$0xf]
        %v953 = vld [vmem:[#allocation2 + $0x24] sm:$0xf]
        %v954 = vld [vmem:[#allocation2 + $0x28] sm:$0xf]
        %v955 = vld [vmem:[#allocation2 + $0x2c] sm:$0xf]
        %v956 = vld [vmem:[#allocation2 + $0x30] sm:$0xf]
        %v957 = vld [vmem:[#allocation2 + $0x34] sm:$0xf]
        %v958 = vld [vmem:[#allocation2 + $0x38] sm:$0xf]
        %v959 = vld [vmem:[#allocation2 + $0x3c] sm:$0xf]
        %v961 = vshrl.u32 %v936, 16
        %v963 = vrot.slane %v961, 5
        %v964 = vshll.u32 %v936, 16
        %v966 = vrot.slane %v964, 6
        %v967 = vor.u32 %v963, %v966
        %vm969 = vcmask 1042432
        %vm970 = vsmask.f32 2304
        %vm971 = vmand %vm969, %vm970
        %v972 = vsel %vm971, 0, %v967
        %v973 = vld [vmem:[#allocation2 + $0x40] sm:$0xf]
        %v974 = vld [vmem:[#allocation2 + $0x44] sm:$0xf]
        %v975 = vld [vmem:[#allocation2 + $0x48] sm:$0xf]
        %v976 = vld [vmem:[#allocation2 + $0x4c] sm:$0xf]
        %v977 = vld [vmem:[#allocation2 + $0x50] sm:$0xf]
        %v978 = vld [vmem:[#allocation2 + $0x54] sm:$0xf]
        %v979 = vld [vmem:[#allocation2 + $0x58] sm:$0xf]
        %v980 = vld [vmem:[#allocation2 + $0x5c] sm:$0xf]
        %v981 = vld [vmem:[#allocation2 + $0x60] sm:$0xf]
        %v982 = vld [vmem:[#allocation2 + $0x64] sm:$0xf]
        %v983 = vld [vmem:[#allocation2 + $0x68] sm:$0xf]
        %v984 = vld [vmem:[#allocation2 + $0x6c] sm:$0xf]
        %v985 = vld [vmem:[#allocation2 + $0x70] sm:$0xf]
        %v986 = vld [vmem:[#allocation2 + $0x74] sm:$0xf]
        %v987 = vld [vmem:[#allocation2 + $0x78] sm:$0xf]
        %v988 = vld [vmem:[#allocation2 + $0x7c] sm:$0xf]
        %v1005 = vunpack.c.l.b16 %v973
        %v1006 = vunpack.c.l.b16 %v974
        %v1007 = vunpack.c.l.b16 %v975
        %v1008 = vunpack.c.l.b16 %v976
        %v1009 = vunpack.c.l.b16 %v977
        %v1010 = vunpack.c.l.b16 %v978
        %v1011 = vunpack.c.l.b16 %v979
        %v1012 = vunpack.c.l.b16 %v980
        %v1013 = vunpack.c.l.b16 %v981
        %v1014 = vunpack.c.l.b16 %v982
        %v1015 = vunpack.c.l.b16 %v983
        %v1016 = vunpack.c.l.b16 %v984
        %v1017 = vunpack.c.l.b16 %v985
        %v1018 = vunpack.c.l.b16 %v986
        %v1019 = vunpack.c.l.b16 %v987
        %v1020 = vunpack.c.l.b16 %v988
        %v1021 = vpack.c.b16 %v1006, %v1005
        %v1022 = vpack.c.b16 %v1008, %v1007
        %v1023 = vpack.c.b16 %v1010, %v1009
        %v1024 = vpack.c.b16 %v1012, %v1011
        %v1025 = vpack.c.b16 %v1014, %v1013
        %v1026 = vpack.c.b16 %v1016, %v1015
        %v1027 = vpack.c.b16 %v1018, %v1017
        %v1028 = vpack.c.b16 %v1020, %v1019
        %1037 = vmatprep.subr.bf16.mxu0 0
        %1038 = vmatpush1.bf16.msra.mxu0 %v1021
        %1039 = vmatprep.subr.bf16.mxu0 0
        %1040 = vmatpush1.bf16.msra.mxu0 %v1022
        %1041 = vmatprep.subr.bf16.mxu0 0
        %1042 = vmatpush1.bf16.msra.mxu0 %v1023
        %1043 = vmatprep.subr.bf16.mxu0 0
        %1044 = vmatpush1.bf16.msra.mxu0 %v1024
        %1045 = vmatprep.subr.bf16.mxu0 0
        %1046 = vmatpush1.bf16.msra.mxu0 %v1025
        %1047 = vmatprep.subr.bf16.mxu0 0
        %1048 = vmatpush1.bf16.msra.mxu0 %v1026
        %1049 = vmatprep.subr.bf16.mxu0 0
        %1050 = vmatpush1.bf16.msra.mxu0 %v1027
        %1051 = vmatprep.subr.bf16.mxu0 0
        %1052 = vmatpush1.bf16.msra.mxu0 %v1028
        %1053 = vmatprep.subr.bf16.mxu0 0
        %1054 = vmatpush1.bf16.msra.mxu0 0
        %1055 = vmatprep.subr.bf16.mxu0 0
        %1056 = vmatpush1.bf16.msra.mxu0 0
        %1057 = vmatprep.subr.bf16.mxu0 0
        %1058 = vmatpush1.bf16.msra.mxu0 0
        %1059 = vmatprep.subr.bf16.mxu0 0
        %1060 = vmatpush1.bf16.msra.mxu0 0
        %1061 = vmatprep.subr.bf16.mxu0 0
        %1062 = vmatpush1.bf16.msra.mxu0 0
        %1063 = vmatprep.subr.bf16.mxu0 0
        %1064 = vmatpush1.bf16.msra.mxu0 0
        %1065 = vmatprep.subr.bf16.mxu0 0
        %1066 = vmatpush1.bf16.msra.mxu0 0
        %1067 = vmatprep.subr.bf16.mxu0 0
        %1068 = vmatpush1.bf16.msra.mxu0 0
        %1069 = vmatprep.mubr.bf16.mxu0 0
        %1070 = vmatmul.mubr.bf16.gmra.mrb[0].mxu0 %v972
        %v1071 = vpop.f32.mrb[0].mxu0
        %v1072 = vadd.f32 0.0, %v1071
        %v1073 = vpop.f32.mrb[0].mxu0
        %v1074 = vpop.f32.mrb[0].mxu0
        %v1075 = vpop.f32.mrb[0].mxu0
        %1076 = vdwg.mxu0
        %v1093 = vunpack.c.l.b16 %v944
        %v1094 = vunpack.c.l.b16 %v945
        %v1095 = vunpack.c.l.b16 %v946
        %v1096 = vunpack.c.l.b16 %v947
        %v1097 = vunpack.c.l.b16 %v948
        %v1098 = vunpack.c.l.b16 %v949
        %v1099 = vunpack.c.l.b16 %v950
        %v1100 = vunpack.c.l.b16 %v951
        %v1101 = vunpack.c.l.b16 %v952
        %v1102 = vunpack.c.l.b16 %v953
        %v1103 = vunpack.c.l.b16 %v954
        %v1104 = vunpack.c.l.b16 %v955
        %v1105 = vunpack.c.l.b16 %v956
        %v1106 = vunpack.c.l.b16 %v957
        %v1107 = vunpack.c.l.b16 %v958
        %v1108 = vunpack.c.l.b16 %v959
        %v1109 = vpack.c.b16 %v1094, %v1093
        %v1110 = vpack.c.b16 %v1096, %v1095
        %v1111 = vpack.c.b16 %v1098, %v1097
        %v1112 = vpack.c.b16 %v1100, %v1099
        %v1113 = vpack.c.b16 %v1102, %v1101
        %v1114 = vpack.c.b16 %v1104, %v1103
        %v1115 = vpack.c.b16 %v1106, %v1105
        %v1116 = vpack.c.b16 %v1108, %v1107
        %1125 = vmatprep.subr.bf16.mxu0 0
        %1126 = vmatpush1.bf16.msra.mxu0 %v1109
        %1127 = vmatprep.subr.bf16.mxu0 0
        %1128 = vmatpush1.bf16.msra.mxu0 %v1110
        %1129 = vmatprep.subr.bf16.mxu0 0
        %1130 = vmatpush1.bf16.msra.mxu0 %v1111
        %1131 = vmatprep.subr.bf16.mxu0 0
        %1132 = vmatpush1.bf16.msra.mxu0 %v1112
        %1133 = vmatprep.subr.bf16.mxu0 0
        %1134 = vmatpush1.bf16.msra.mxu0 %v1113
        %1135 = vmatprep.subr.bf16.mxu0 0
        %1136 = vmatpush1.bf16.msra.mxu0 %v1114
        %1137 = vmatprep.subr.bf16.mxu0 0
        %1138 = vmatpush1.bf16.msra.mxu0 %v1115
        %1139 = vmatprep.subr.bf16.mxu0 0
        %1140 = vmatpush1.bf16.msra.mxu0 %v1116
        %1141 = vmatprep.subr.bf16.mxu0 0
        %1142 = vmatpush1.bf16.msra.mxu0 0
        %1143 = vmatprep.subr.bf16.mxu0 0
        %1144 = vmatpush1.bf16.msra.mxu0 0
        %1145 = vmatprep.subr.bf16.mxu0 0
        %1146 = vmatpush1.bf16.msra.mxu0 0
        %1147 = vmatprep.subr.bf16.mxu0 0
        %1148 = vmatpush1.bf16.msra.mxu0 0
        %1149 = vmatprep.subr.bf16.mxu0 0
        %1150 = vmatpush1.bf16.msra.mxu0 0
        %1151 = vmatprep.subr.bf16.mxu0 0
        %1152 = vmatpush1.bf16.msra.mxu0 0
        %1153 = vmatprep.subr.bf16.mxu0 0
        %1154 = vmatpush1.bf16.msra.mxu0 0
        %1155 = vmatprep.subr.bf16.mxu0 0
        %1156 = vmatpush1.bf16.msra.mxu0 0
        %1157 = vmatprep.mubr.bf16.mxu0 0
        %1158 = vmatmul.mubr.bf16.gmra.mrb[0].mxu0 %v942
        %v1159 = vpop.f32.mrb[0].mxu0
        %v1160 = vadd.f32 %v1072, %v1159
        %v1161 = vpop.f32.mrb[0].mxu0
        %v1162 = vpop.f32.mrb[0].mxu0
        %v1163 = vpop.f32.mrb[0].mxu0
        %1164 = vdwg.mxu0
        %v1165 = vrot.slane %v936, 6
        %vm1166 = vcmask 1041408
        %v1168 = vsel %vm1166, 0, %v1165
        %v1170 = vld [vmem:[#allocation2 + $0x80] sm:$0xf]
        %v1171 = vld [vmem:[#allocation2 + $0x84] sm:$0xf]
        %v1172 = vld [vmem:[#allocation2 + $0x88] sm:$0xf]
        %v1173 = vld [vmem:[#allocation2 + $0x8c] sm:$0xf]
        %v1174 = vld [vmem:[#allocation2 + $0x90] sm:$0xf]
        %v1175 = vld [vmem:[#allocation2 + $0x94] sm:$0xf]
        %v1176 = vld [vmem:[#allocation2 + $0x98] sm:$0xf]
        %v1177 = vld [vmem:[#allocation2 + $0x9c] sm:$0xf]
        %v1178 = vld [vmem:[#allocation2 + $0xa0] sm:$0xf]
        %v1179 = vld [vmem:[#allocation2 + $0xa4] sm:$0xf]
        %v1180 = vld [vmem:[#allocation2 + $0xa8] sm:$0xf]
        %v1181 = vld [vmem:[#allocation2 + $0xac] sm:$0xf]
        %v1182 = vld [vmem:[#allocation2 + $0xb0] sm:$0xf]
        %v1183 = vld [vmem:[#allocation2 + $0xb4] sm:$0xf]
        %v1184 = vld [vmem:[#allocation2 + $0xb8] sm:$0xf]
        %v1185 = vld [vmem:[#allocation2 + $0xbc] sm:$0xf]
        %v1202 = vunpack.c.l.b16 %v1170
        %v1203 = vunpack.c.l.b16 %v1171
        %v1204 = vunpack.c.l.b16 %v1172
        %v1205 = vunpack.c.l.b16 %v1173
        %v1206 = vunpack.c.l.b16 %v1174
        %v1207 = vunpack.c.l.b16 %v1175
        %v1208 = vunpack.c.l.b16 %v1176
        %v1209 = vunpack.c.l.b16 %v1177
        %v1210 = vunpack.c.l.b16 %v1178
        %v1211 = vunpack.c.l.b16 %v1179
        %v1212 = vunpack.c.l.b16 %v1180
        %v1213 = vunpack.c.l.b16 %v1181
        %v1214 = vunpack.c.l.b16 %v1182
        %v1215 = vunpack.c.l.b16 %v1183
        %v1216 = vunpack.c.l.b16 %v1184
        %v1217 = vunpack.c.l.b16 %v1185
        %v1218 = vpack.c.b16 %v1203, %v1202
        %v1219 = vpack.c.b16 %v1205, %v1204
        %v1220 = vpack.c.b16 %v1207, %v1206
        %v1221 = vpack.c.b16 %v1209, %v1208
        %v1222 = vpack.c.b16 %v1211, %v1210
        %v1223 = vpack.c.b16 %v1213, %v1212
        %v1224 = vpack.c.b16 %v1215, %v1214
        %v1225 = vpack.c.b16 %v1217, %v1216
        %1234 = vmatprep.subr.bf16.mxu0 0
        %1235 = vmatpush1.bf16.msra.mxu0 %v1218
        %1236 = vmatprep.subr.bf16.mxu0 0
        %1237 = vmatpush1.bf16.msra.mxu0 %v1219
        %1238 = vmatprep.subr.bf16.mxu0 0
        %1239 = vmatpush1.bf16.msra.mxu0 %v1220
        %1240 = vmatprep.subr.bf16.mxu0 0
        %1241 = vmatpush1.bf16.msra.mxu0 %v1221
        %1242 = vmatprep.subr.bf16.mxu0 0
        %1243 = vmatpush1.bf16.msra.mxu0 %v1222
        %1244 = vmatprep.subr.bf16.mxu0 0
        %1245 = vmatpush1.bf16.msra.mxu0 %v1223
        %1246 = vmatprep.subr.bf16.mxu0 0
        %1247 = vmatpush1.bf16.msra.mxu0 %v1224
        %1248 = vmatprep.subr.bf16.mxu0 0
        %1249 = vmatpush1.bf16.msra.mxu0 %v1225
        %1250 = vmatprep.subr.bf16.mxu0 0
        %1251 = vmatpush1.bf16.msra.mxu0 0
        %1252 = vmatprep.subr.bf16.mxu0 0
        %1253 = vmatpush1.bf16.msra.mxu0 0
        %1254 = vmatprep.subr.bf16.mxu0 0
        %1255 = vmatpush1.bf16.msra.mxu0 0
        %1256 = vmatprep.subr.bf16.mxu0 0
        %1257 = vmatpush1.bf16.msra.mxu0 0
        %1258 = vmatprep.subr.bf16.mxu0 0
        %1259 = vmatpush1.bf16.msra.mxu0 0
        %1260 = vmatprep.subr.bf16.mxu0 0
        %1261 = vmatpush1.bf16.msra.mxu0 0
        %1262 = vmatprep.subr.bf16.mxu0 0
        %1263 = vmatpush1.bf16.msra.mxu0 0
        %1264 = vmatprep.subr.bf16.mxu0 0
        %1265 = vmatpush1.bf16.msra.mxu0 0
        %1266 = vmatprep.mubr.bf16.mxu0 0
        %1267 = vmatmul.mubr.bf16.gmra.mrb[0].mxu0 %v1168
        %v1268 = vpop.f32.mrb[0].mxu0
        %v1269 = vadd.f32 0.0, %v1268
        %v1270 = vpop.f32.mrb[0].mxu0
        %v1271 = vpop.f32.mrb[0].mxu0
        %v1272 = vpop.f32.mrb[0].mxu0
        %1273 = vdwg.mxu0
        %v1274 = vadd.f32 %v1160, %v1269
        %v1275 = vrot.slane %v961, 6
        %v1276 = vrot.slane %v964, 7
        %v1277 = vor.u32 %v1275, %v1276
        %vm1279 = vcmask 1041408
        %vm1280 = vsmask.f32 1280
        %vm1281 = vmand %vm1279, %vm1280
        %v1282 = vsel %vm1281, 0, %v1277
        %v1283 = vld [vmem:[#allocation2 + $0xc0] sm:$0xf]
        %v1284 = vld [vmem:[#allocation2 + $0xc4] sm:$0xf]
        %v1285 = vld [vmem:[#allocation2 + $0xc8] sm:$0xf]
        %v1286 = vld [vmem:[#allocation2 + $0xcc] sm:$0xf]
        %v1287 = vld [vmem:[#allocation2 + $0xd0] sm:$0xf]
        %v1288 = vld [vmem:[#allocation2 + $0xd4] sm:$0xf]
        %v1289 = vld [vmem:[#allocation2 + $0xd8] sm:$0xf]
        %v1290 = vld [vmem:[#allocation2 + $0xdc] sm:$0xf]
        %v1291 = vld [vmem:[#allocation2 + $0xe0] sm:$0xf]
        %v1292 = vld [vmem:[#allocation2 + $0xe4] sm:$0xf]
        %v1293 = vld [vmem:[#allocation2 + $0xe8] sm:$0xf]
        %v1294 = vld [vmem:[#allocation2 + $0xec] sm:$0xf]
        %v1295 = vld [vmem:[#allocation2 + $0xf0] sm:$0xf]
        %v1296 = vld [vmem:[#allocation2 + $0xf4] sm:$0xf]
        %v1297 = vld [vmem:[#allocation2 + $0xf8] sm:$0xf]
        %v1298 = vld [vmem:[#allocation2 + $0xfc] sm:$0xf]
        %v1315 = vunpack.c.l.b16 %v1283
        %v1316 = vunpack.c.l.b16 %v1284
        %v1317 = vunpack.c.l.b16 %v1285
        %v1318 = vunpack.c.l.b16 %v1286
        %v1319 = vunpack.c.l.b16 %v1287
        %v1320 = vunpack.c.l.b16 %v1288
        %v1321 = vunpack.c.l.b16 %v1289
        %v1322 = vunpack.c.l.b16 %v1290
        %v1323 = vunpack.c.l.b16 %v1291
        %v1324 = vunpack.c.l.b16 %v1292
        %v1325 = vunpack.c.l.b16 %v1293
        %v1326 = vunpack.c.l.b16 %v1294
        %v1327 = vunpack.c.l.b16 %v1295
        %v1328 = vunpack.c.l.b16 %v1296
        %v1329 = vunpack.c.l.b16 %v1297
        %v1330 = vunpack.c.l.b16 %v1298
        %v1331 = vpack.c.b16 %v1316, %v1315
        %v1332 = vpack.c.b16 %v1318, %v1317
        %v1333 = vpack.c.b16 %v1320, %v1319
        %v1334 = vpack.c.b16 %v1322, %v1321
        %v1335 = vpack.c.b16 %v1324, %v1323
        %v1336 = vpack.c.b16 %v1326, %v1325
        %v1337 = vpack.c.b16 %v1328, %v1327
        %v1338 = vpack.c.b16 %v1330, %v1329
        %1347 = vmatprep.subr.bf16.mxu0 0
        %1348 = vmatpush1.bf16.msra.mxu0 %v1331
        %1349 = vmatprep.subr.bf16.mxu0 0
        %1350 = vmatpush1.bf16.msra.mxu0 %v1332
        %1351 = vmatprep.subr.bf16.mxu0 0
        %1352 = vmatpush1.bf16.msra.mxu0 %v1333
        %1353 = vmatprep.subr.bf16.mxu0 0
        %1354 = vmatpush1.bf16.msra.mxu0 %v1334
        %1355 = vmatprep.subr.bf16.mxu0 0
        %1356 = vmatpush1.bf16.msra.mxu0 %v1335
        %1357 = vmatprep.subr.bf16.mxu0 0
        %1358 = vmatpush1.bf16.msra.mxu0 %v1336
        %1359 = vmatprep.subr.bf16.mxu0 0
        %1360 = vmatpush1.bf16.msra.mxu0 %v1337
        %1361 = vmatprep.subr.bf16.mxu0 0
        %1362 = vmatpush1.bf16.msra.mxu0 %v1338
        %1363 = vmatprep.subr.bf16.mxu0 0
        %1364 = vmatpush1.bf16.msra.mxu0 0
        %1365 = vmatprep.subr.bf16.mxu0 0
        %1366 = vmatpush1.bf16.msra.mxu0 0
        %1367 = vmatprep.subr.bf16.mxu0 0
        %1368 = vmatpush1.bf16.msra.mxu0 0
        %1369 = vmatprep.subr.bf16.mxu0 0
        %1370 = vmatpush1.bf16.msra.mxu0 0
        %1371 = vmatprep.subr.bf16.mxu0 0
        %1372 = vmatpush1.bf16.msra.mxu0 0
        %1373 = vmatprep.subr.bf16.mxu0 0
        %1374 = vmatpush1.bf16.msra.mxu0 0
        %1375 = vmatprep.subr.bf16.mxu0 0
        %1376 = vmatpush1.bf16.msra.mxu0 0
        %1377 = vmatprep.subr.bf16.mxu0 0
        %1378 = vmatpush1.bf16.msra.mxu0 0
        %1379 = vmatprep.mubr.bf16.mxu0 0
        %1380 = vmatmul.mubr.bf16.gmra.mrb[0].mxu0 %v1282
        %v1381 = vpop.f32.mrb[0].mxu0
        %v1382 = vadd.f32 0.0, %v1381
        %v1383 = vpop.f32.mrb[0].mxu0
        %v1384 = vpop.f32.mrb[0].mxu0
        %v1385 = vpop.f32.mrb[0].mxu0
        %1386 = vdwg.mxu0
        %v1387 = vadd.f32 %v1274, %v1382
        %v1388 = vrot.slane %v936, 7
        %vm1389 = vcmask 1040384
        %v1391 = vsel %vm1389, 0, %v1388
        %v1393 = vld [vmem:[#allocation2 + $0x100] sm:$0xf]
        %v1394 = vld [vmem:[#allocation2 + $0x104] sm:$0xf]
        %v1395 = vld [vmem:[#allocation2 + $0x108] sm:$0xf]
        %v1396 = vld [vmem:[#allocation2 + $0x10c] sm:$0xf]
        %v1397 = vld [vmem:[#allocation2 + $0x110] sm:$0xf]
        %v1398 = vld [vmem:[#allocation2 + $0x114] sm:$0xf]
        %v1399 = vld [vmem:[#allocation2 + $0x118] sm:$0xf]
        %v1400 = vld [vmem:[#allocation2 + $0x11c] sm:$0xf]
        %v1401 = vld [vmem:[#allocation2 + $0x120] sm:$0xf]
        %v1402 = vld [vmem:[#allocation2 + $0x124] sm:$0xf]
        %v1403 = vld [vmem:[#allocation2 + $0x128] sm:$0xf]
        %v1404 = vld [vmem:[#allocation2 + $0x12c] sm:$0xf]
        %v1405 = vld [vmem:[#allocation2 + $0x130] sm:$0xf]
        %v1406 = vld [vmem:[#allocation2 + $0x134] sm:$0xf]
        %v1407 = vld [vmem:[#allocation2 + $0x138] sm:$0xf]
        %v1408 = vld [vmem:[#allocation2 + $0x13c] sm:$0xf]
        %v1425 = vunpack.c.l.b16 %v1393
        %v1426 = vunpack.c.l.b16 %v1394
        %v1427 = vunpack.c.l.b16 %v1395
        %v1428 = vunpack.c.l.b16 %v1396
        %v1429 = vunpack.c.l.b16 %v1397
        %v1430 = vunpack.c.l.b16 %v1398
        %v1431 = vunpack.c.l.b16 %v1399
        %v1432 = vunpack.c.l.b16 %v1400
        %v1433 = vunpack.c.l.b16 %v1401
        %v1434 = vunpack.c.l.b16 %v1402
        %v1435 = vunpack.c.l.b16 %v1403
        %v1436 = vunpack.c.l.b16 %v1404
        %v1437 = vunpack.c.l.b16 %v1405
        %v1438 = vunpack.c.l.b16 %v1406
        %v1439 = vunpack.c.l.b16 %v1407
        %v1440 = vunpack.c.l.b16 %v1408
        %v1441 = vpack.c.b16 %v1426, %v1425
        %v1442 = vpack.c.b16 %v1428, %v1427
        %v1443 = vpack.c.b16 %v1430, %v1429
        %v1444 = vpack.c.b16 %v1432, %v1431
        %v1445 = vpack.c.b16 %v1434, %v1433
        %v1446 = vpack.c.b16 %v1436, %v1435
        %v1447 = vpack.c.b16 %v1438, %v1437
        %v1448 = vpack.c.b16 %v1440, %v1439
        %1457 = vmatprep.subr.bf16.mxu0 0
        %1458 = vmatpush1.bf16.msra.mxu0 %v1441
        %1459 = vmatprep.subr.bf16.mxu0 0
        %1460 = vmatpush1.bf16.msra.mxu0 %v1442
        %1461 = vmatprep.subr.bf16.mxu0 0
        %1462 = vmatpush1.bf16.msra.mxu0 %v1443
        %1463 = vmatprep.subr.bf16.mxu0 0
        %1464 = vmatpush1.bf16.msra.mxu0 %v1444
        %1465 = vmatprep.subr.bf16.mxu0 0
        %1466 = vmatpush1.bf16.msra.mxu0 %v1445
        %1467 = vmatprep.subr.bf16.mxu0 0
        %1468 = vmatpush1.bf16.msra.mxu0 %v1446
        %1469 = vmatprep.subr.bf16.mxu0 0
        %1470 = vmatpush1.bf16.msra.mxu0 %v1447
        %1471 = vmatprep.subr.bf16.mxu0 0
        %1472 = vmatpush1.bf16.msra.mxu0 %v1448
        %1473 = vmatprep.subr.bf16.mxu0 0
        %1474 = vmatpush1.bf16.msra.mxu0 0
        %1475 = vmatprep.subr.bf16.mxu0 0
        %1476 = vmatpush1.bf16.msra.mxu0 0
        %1477 = vmatprep.subr.bf16.mxu0 0
        %1478 = vmatpush1.bf16.msra.mxu0 0
        %1479 = vmatprep.subr.bf16.mxu0 0
        %1480 = vmatpush1.bf16.msra.mxu0 0
        %1481 = vmatprep.subr.bf16.mxu0 0
        %1482 = vmatpush1.bf16.msra.mxu0 0
        %1483 = vmatprep.subr.bf16.mxu0 0
        %1484 = vmatpush1.bf16.msra.mxu0 0
        %1485 = vmatprep.subr.bf16.mxu0 0
        %1486 = vmatpush1.bf16.msra.mxu0 0
        %1487 = vmatprep.subr.bf16.mxu0 0
        %1488 = vmatpush1.bf16.msra.mxu0 0
        %1489 = vmatprep.mubr.bf16.mxu0 0
        %1490 = vmatmul.mubr.bf16.gmra.mrb[0].mxu0 %v1391
        %v1491 = vpop.f32.mrb[0].mxu0
        %v1492 = vadd.f32 0.0, %v1491
        %v1493 = vpop.f32.mrb[0].mxu0
        %v1494 = vpop.f32.mrb[0].mxu0
        %v1495 = vpop.f32.mrb[0].mxu0
        %1496 = vdwg.mxu0
        %v1497 = vadd.f32 %v1387, %v1492
        %v1498 = vrot.slane %v961, 7
        %v1499 = vor.u32 %v1498, %v964
        %vm1501 = vcmask 1040384
        %vm1502 = vsmask.f32 256
        %vm1503 = vmand %vm1501, %vm1502
        %v1504 = vsel %vm1503, 0, %v1499
        %v1505 = vld [vmem:[#allocation2 + $0x140] sm:$0xf]
        %v1506 = vld [vmem:[#allocation2 + $0x144] sm:$0xf]
        %v1507 = vld [vmem:[#allocation2 + $0x148] sm:$0xf]
        %v1508 = vld [vmem:[#allocation2 + $0x14c] sm:$0xf]
        %v1509 = vld [vmem:[#allocation2 + $0x150] sm:$0xf]
        %v1510 = vld [vmem:[#allocation2 + $0x154] sm:$0xf]
        %v1511 = vld [vmem:[#allocation2 + $0x158] sm:$0xf]
        %v1512 = vld [vmem:[#allocation2 + $0x15c] sm:$0xf]
        %v1513 = vld [vmem:[#allocation2 + $0x160] sm:$0xf]
        %v1514 = vld [vmem:[#allocation2 + $0x164] sm:$0xf]
        %v1515 = vld [vmem:[#allocation2 + $0x168] sm:$0xf]
        %v1516 = vld [vmem:[#allocation2 + $0x16c] sm:$0xf]
        %v1517 = vld [vmem:[#allocation2 + $0x170] sm:$0xf]
        %v1518 = vld [vmem:[#allocation2 + $0x174] sm:$0xf]
        %v1519 = vld [vmem:[#allocation2 + $0x178] sm:$0xf]
        %v1520 = vld [vmem:[#allocation2 + $0x17c] sm:$0xf]
        %v1537 = vunpack.c.l.b16 %v1505
        %v1538 = vunpack.c.l.b16 %v1506
        %v1539 = vunpack.c.l.b16 %v1507
        %v1540 = vunpack.c.l.b16 %v1508
        %v1541 = vunpack.c.l.b16 %v1509
        %v1542 = vunpack.c.l.b16 %v1510
        %v1543 = vunpack.c.l.b16 %v1511
        %v1544 = vunpack.c.l.b16 %v1512
        %v1545 = vunpack.c.l.b16 %v1513
        %v1546 = vunpack.c.l.b16 %v1514
        %v1547 = vunpack.c.l.b16 %v1515
        %v1548 = vunpack.c.l.b16 %v1516
        %v1549 = vunpack.c.l.b16 %v1517
        %v1550 = vunpack.c.l.b16 %v1518
        %v1551 = vunpack.c.l.b16 %v1519
        %v1552 = vunpack.c.l.b16 %v1520
        %v1553 = vpack.c.b16 %v1538, %v1537
        %v1554 = vpack.c.b16 %v1540, %v1539
        %v1555 = vpack.c.b16 %v1542, %v1541
        %v1556 = vpack.c.b16 %v1544, %v1543
        %v1557 = vpack.c.b16 %v1546, %v1545
        %v1558 = vpack.c.b16 %v1548, %v1547
        %v1559 = vpack.c.b16 %v1550, %v1549
        %v1560 = vpack.c.b16 %v1552, %v1551
        %1569 = vmatprep.subr.bf16.mxu0 0
        %1570 = vmatpush1.bf16.msra.mxu0 %v1553
        %1571 = vmatprep.subr.bf16.mxu0 0
        %1572 = vmatpush1.bf16.msra.mxu0 %v1554
        %1573 = vmatprep.subr.bf16.mxu0 0
        %1574 = vmatpush1.bf16.msra.mxu0 %v1555
        %1575 = vmatprep.subr.bf16.mxu0 0
        %1576 = vmatpush1.bf16.msra.mxu0 %v1556
        %1577 = vmatprep.subr.bf16.mxu0 0
        %1578 = vmatpush1.bf16.msra.mxu0 %v1557
        %1579 = vmatprep.subr.bf16.mxu0 0
        %1580 = vmatpush1.bf16.msra.mxu0 %v1558
        %1581 = vmatprep.subr.bf16.mxu0 0
        %1582 = vmatpush1.bf16.msra.mxu0 %v1559
        %1583 = vmatprep.subr.bf16.mxu0 0
        %1584 = vmatpush1.bf16.msra.mxu0 %v1560
        %1585 = vmatprep.subr.bf16.mxu0 0
        %1586 = vmatpush1.bf16.msra.mxu0 0
        %1587 = vmatprep.subr.bf16.mxu0 0
        %1588 = vmatpush1.bf16.msra.mxu0 0
        %1589 = vmatprep.subr.bf16.mxu0 0
        %1590 = vmatpush1.bf16.msra.mxu0 0
        %1591 = vmatprep.subr.bf16.mxu0 0
        %1592 = vmatpush1.bf16.msra.mxu0 0
        %1593 = vmatprep.subr.bf16.mxu0 0
        %1594 = vmatpush1.bf16.msra.mxu0 0
        %1595 = vmatprep.subr.bf16.mxu0 0
        %1596 = vmatpush1.bf16.msra.mxu0 0
        %1597 = vmatprep.subr.bf16.mxu0 0
        %1598 = vmatpush1.bf16.msra.mxu0 0
        %1599 = vmatprep.subr.bf16.mxu0 0
        %1600 = vmatpush1.bf16.msra.mxu0 0
        %1601 = vmatprep.mubr.bf16.mxu0 0
        %1602 = vmatmul.mubr.bf16.gmra.mrb[0].mxu0 %v1504
        %v1603 = vpop.f32.mrb[0].mxu0
        %v1604 = vadd.f32 0.0, %v1603
        %v1605 = vpop.f32.mrb[0].mxu0
        %v1606 = vpop.f32.mrb[0].mxu0
        %v1607 = vpop.f32.mrb[0].mxu0
        %1608 = vdwg.mxu0
        %v1609 = vadd.f32 %v1497, %v1604
        %v1610 = vld [vmem:[#allocation2 + $0x180] sm:$0xf]
        %v1611 = vld [vmem:[#allocation2 + $0x184] sm:$0xf]
        %v1612 = vld [vmem:[#allocation2 + $0x188] sm:$0xf]
        %v1613 = vld [vmem:[#allocation2 + $0x18c] sm:$0xf]
        %v1614 = vld [vmem:[#allocation2 + $0x190] sm:$0xf]
        %v1615 = vld [vmem:[#allocation2 + $0x194] sm:$0xf]
        %v1616 = vld [vmem:[#allocation2 + $0x198] sm:$0xf]
        %v1617 = vld [vmem:[#allocation2 + $0x19c] sm:$0xf]
        %v1618 = vld [vmem:[#allocation2 + $0x1a0] sm:$0xf]
        %v1619 = vld [vmem:[#allocation2 + $0x1a4] sm:$0xf]
        %v1620 = vld [vmem:[#allocation2 + $0x1a8] sm:$0xf]
        %v1621 = vld [vmem:[#allocation2 + $0x1ac] sm:$0xf]
        %v1622 = vld [vmem:[#allocation2 + $0x1b0] sm:$0xf]
        %v1623 = vld [vmem:[#allocation2 + $0x1b4] sm:$0xf]
        %v1624 = vld [vmem:[#allocation2 + $0x1b8] sm:$0xf]
        %v1625 = vld [vmem:[#allocation2 + $0x1bc] sm:$0xf]
        %v1642 = vunpack.c.l.b16 %v1610
        %v1643 = vunpack.c.l.b16 %v1611
        %v1644 = vunpack.c.l.b16 %v1612
        %v1645 = vunpack.c.l.b16 %v1613
        %v1646 = vunpack.c.l.b16 %v1614
        %v1647 = vunpack.c.l.b16 %v1615
        %v1648 = vunpack.c.l.b16 %v1616
        %v1649 = vunpack.c.l.b16 %v1617
        %v1650 = vunpack.c.l.b16 %v1618
        %v1651 = vunpack.c.l.b16 %v1619
        %v1652 = vunpack.c.l.b16 %v1620
        %v1653 = vunpack.c.l.b16 %v1621
        %v1654 = vunpack.c.l.b16 %v1622
        %v1655 = vunpack.c.l.b16 %v1623
        %v1656 = vunpack.c.l.b16 %v1624
        %v1657 = vunpack.c.l.b16 %v1625
        %v1658 = vpack.c.b16 %v1643, %v1642
        %v1659 = vpack.c.b16 %v1645, %v1644
        %v1660 = vpack.c.b16 %v1647, %v1646
        %v1661 = vpack.c.b16 %v1649, %v1648
        %v1662 = vpack.c.b16 %v1651, %v1650
        %v1663 = vpack.c.b16 %v1653, %v1652
        %v1664 = vpack.c.b16 %v1655, %v1654
        %v1665 = vpack.c.b16 %v1657, %v1656
        %1674 = vmatprep.subr.bf16.mxu0 0
        %1675 = vmatpush1.bf16.msra.mxu0 %v1658
        %1676 = vmatprep.subr.bf16.mxu0 0
        %1677 = vmatpush1.bf16.msra.mxu0 %v1659
        %1678 = vmatprep.subr.bf16.mxu0 0
        %1679 = vmatpush1.bf16.msra.mxu0 %v1660
        %1680 = vmatprep.subr.bf16.mxu0 0
        %1681 = vmatpush1.bf16.msra.mxu0 %v1661
        %1682 = vmatprep.subr.bf16.mxu0 0
        %1683 = vmatpush1.bf16.msra.mxu0 %v1662
        %1684 = vmatprep.subr.bf16.mxu0 0
        %1685 = vmatpush1.bf16.msra.mxu0 %v1663
        %1686 = vmatprep.subr.bf16.mxu0 0
        %1687 = vmatpush1.bf16.msra.mxu0 %v1664
        %1688 = vmatprep.subr.bf16.mxu0 0
        %1689 = vmatpush1.bf16.msra.mxu0 %v1665
        %1690 = vmatprep.subr.bf16.mxu0 0
        %1691 = vmatpush1.bf16.msra.mxu0 0
        %1692 = vmatprep.subr.bf16.mxu0 0
        %1693 = vmatpush1.bf16.msra.mxu0 0
        %1694 = vmatprep.subr.bf16.mxu0 0
        %1695 = vmatpush1.bf16.msra.mxu0 0
        %1696 = vmatprep.subr.bf16.mxu0 0
        %1697 = vmatpush1.bf16.msra.mxu0 0
        %1698 = vmatprep.subr.bf16.mxu0 0
        %1699 = vmatpush1.bf16.msra.mxu0 0
        %1700 = vmatprep.subr.bf16.mxu0 0
        %1701 = vmatpush1.bf16.msra.mxu0 0
        %1702 = vmatprep.subr.bf16.mxu0 0
        %1703 = vmatpush1.bf16.msra.mxu0 0
        %1704 = vmatprep.subr.bf16.mxu0 0
        %1705 = vmatpush1.bf16.msra.mxu0 0
        %1706 = vmatprep.mubr.bf16.mxu0 0
        %1707 = vmatmul.mubr.bf16.gmra.mrb[0].mxu0 %v936
        %v1708 = vpop.f32.mrb[0].mxu0
        %v1709 = vadd.f32 0.0, %v1708
        %v1710 = vpop.f32.mrb[0].mxu0
        %v1711 = vpop.f32.mrb[0].mxu0
        %v1712 = vpop.f32.mrb[0].mxu0
        %1713 = vdwg.mxu0
        %v1714 = vadd.f32 %v1609, %v1709
        %v1715 = vld [vmem:[#allocation5 + $0x1] sm:$0x1]
        %v1716 = vlaneseq
        %v1717 = vshrl.u32 %v1716, 7
        %v1718 = vsub.s32 0, %v1717
        %v1719 = vrot.slane %v1715, %v1718
        %v1720 = vadd.f32 %v1714, %v1719
        %v1721 = vmax.f32 %v1720, 0.0
        %v1722 = vpack.c.bf16 %v1721, %v1721
        %v1724 = vrot.slane %v1722, 5
        %v1726 = vsel %vm939, 0, %v1724
        %v1728 = vld [vmem:[#allocation2 + $0x1c0] sm:$0xf]
        %v1729 = vld [vmem:[#allocation2 + $0x1c4] sm:$0xf]
        %v1730 = vld [vmem:[#allocation2 + $0x1c8] sm:$0xf]
        %v1731 = vld [vmem:[#allocation2 + $0x1cc] sm:$0xf]
        %v1732 = vld [vmem:[#allocation2 + $0x1d0] sm:$0xf]
        %v1733 = vld [vmem:[#allocation2 + $0x1d4] sm:$0xf]
        %v1734 = vld [vmem:[#allocation2 + $0x1d8] sm:$0xf]
        %v1735 = vld [vmem:[#allocation2 + $0x1dc] sm:$0xf]
        %v1736 = vld [vmem:[#allocation2 + $0x1e0] sm:$0xf]
        %v1737 = vld [vmem:[#allocation2 + $0x1e4] sm:$0xf]
        %v1738 = vld [vmem:[#allocation2 + $0x1e8] sm:$0xf]
        %v1739 = vld [vmem:[#allocation2 + $0x1ec] sm:$0xf]
        %v1740 = vld [vmem:[#allocation2 + $0x1f0] sm:$0xf]
        %v1741 = vld [vmem:[#allocation2 + $0x1f4] sm:$0xf]
        %v1742 = vld [vmem:[#allocation2 + $0x1f8] sm:$0xf]
        %v1743 = vld [vmem:[#allocation2 + $0x1fc] sm:$0xf]
        %v1745 = vshrl.u32 %v1722, 16
        %v1747 = vrot.slane %v1745, 5
        %v1748 = vshll.u32 %v1722, 16
        %v1750 = vrot.slane %v1748, 6
        %v1751 = vor.u32 %v1747, %v1750
        %v1753 = vsel %vm971, 0, %v1751
        %v1754 = vld [vmem:[#allocation2 + $0x200] sm:$0xf]
        %v1755 = vld [vmem:[#allocation2 + $0x204] sm:$0xf]
        %v1756 = vld [vmem:[#allocation2 + $0x208] sm:$0xf]
        %v1757 = vld [vmem:[#allocation2 + $0x20c] sm:$0xf]
        %v1758 = vld [vmem:[#allocation2 + $0x210] sm:$0xf]
        %v1759 = vld [vmem:[#allocation2 + $0x214] sm:$0xf]
        %v1760 = vld [vmem:[#allocation2 + $0x218] sm:$0xf]
        %v1761 = vld [vmem:[#allocation2 + $0x21c] sm:$0xf]
        %v1762 = vld [vmem:[#allocation2 + $0x220] sm:$0xf]
        %v1763 = vld [vmem:[#allocation2 + $0x224] sm:$0xf]
        %v1764 = vld [vmem:[#allocation2 + $0x228] sm:$0xf]
        %v1765 = vld [vmem:[#allocation2 + $0x22c] sm:$0xf]
        %v1766 = vld [vmem:[#allocation2 + $0x230] sm:$0xf]
        %v1767 = vld [vmem:[#allocation2 + $0x234] sm:$0xf]
        %v1768 = vld [vmem:[#allocation2 + $0x238] sm:$0xf]
        %v1769 = vld [vmem:[#allocation2 + $0x23c] sm:$0xf]
        %v1786 = vunpack.c.l.b16 %v1754
        %v1787 = vunpack.c.l.b16 %v1755
        %v1788 = vunpack.c.l.b16 %v1756
        %v1789 = vunpack.c.l.b16 %v1757
        %v1790 = vunpack.c.l.b16 %v1758
        %v1791 = vunpack.c.l.b16 %v1759
        %v1792 = vunpack.c.l.b16 %v1760
        %v1793 = vunpack.c.l.b16 %v1761
        %v1794 = vunpack.c.l.b16 %v1762
        %v1795 = vunpack.c.l.b16 %v1763
        %v1796 = vunpack.c.l.b16 %v1764
        %v1797 = vunpack.c.l.b16 %v1765
        %v1798 = vunpack.c.l.b16 %v1766
        %v1799 = vunpack.c.l.b16 %v1767
        %v1800 = vunpack.c.l.b16 %v1768
        %v1801 = vunpack.c.l.b16 %v1769
        %v1802 = vpack.c.b16 %v1787, %v1786
        %v1803 = vpack.c.b16 %v1789, %v1788
        %v1804 = vpack.c.b16 %v1791, %v1790
        %v1805 = vpack.c.b16 %v1793, %v1792
        %v1806 = vpack.c.b16 %v1795, %v1794
        %v1807 = vpack.c.b16 %v1797, %v1796
        %v1808 = vpack.c.b16 %v1799, %v1798
        %v1809 = vpack.c.b16 %v1801, %v1800
        %1818 = vmatprep.subr.bf16.mxu0 0
        %1819 = vmatpush1.bf16.msra.mxu0 %v1802
        %1820 = vmatprep.subr.bf16.mxu0 0
        %1821 = vmatpush1.bf16.msra.mxu0 %v1803
        %1822 = vmatprep.subr.bf16.mxu0 0
        %1823 = vmatpush1.bf16.msra.mxu0 %v1804
        %1824 = vmatprep.subr.bf16.mxu0 0
        %1825 = vmatpush1.bf16.msra.mxu0 %v1805
        %1826 = vmatprep.subr.bf16.mxu0 0
        %1827 = vmatpush1.bf16.msra.mxu0 %v1806
        %1828 = vmatprep.subr.bf16.mxu0 0
        %1829 = vmatpush1.bf16.msra.mxu0 %v1807
        %1830 = vmatprep.subr.bf16.mxu0 0
        %1831 = vmatpush1.bf16.msra.mxu0 %v1808
        %1832 = vmatprep.subr.bf16.mxu0 0
        %1833 = vmatpush1.bf16.msra.mxu0 %v1809
        %1834 = vmatprep.subr.bf16.mxu0 0
        %1835 = vmatpush1.bf16.msra.mxu0 0
        %1836 = vmatprep.subr.bf16.mxu0 0
        %1837 = vmatpush1.bf16.msra.mxu0 0
        %1838 = vmatprep.subr.bf16.mxu0 0
        %1839 = vmatpush1.bf16.msra.mxu0 0
        %1840 = vmatprep.subr.bf16.mxu0 0
        %1841 = vmatpush1.bf16.msra.mxu0 0
        %1842 = vmatprep.subr.bf16.mxu0 0
        %1843 = vmatpush1.bf16.msra.mxu0 0
        %1844 = vmatprep.subr.bf16.mxu0 0
        %1845 = vmatpush1.bf16.msra.mxu0 0
        %1846 = vmatprep.subr.bf16.mxu0 0
        %1847 = vmatpush1.bf16.msra.mxu0 0
        %1848 = vmatprep.subr.bf16.mxu0 0
        %1849 = vmatpush1.bf16.msra.mxu0 0
        %1850 = vmatprep.mubr.bf16.mxu0 0
        %1851 = vmatmul.mubr.bf16.gmra.mrb[0].mxu0 %v1753
        %v1852 = vpop.f32.mrb[0].mxu0
        %v1853 = vadd.f32 0.0, %v1852
        %v1854 = vpop.f32.mrb[0].mxu0
        %v1855 = vpop.f32.mrb[0].mxu0
        %v1856 = vpop.f32.mrb[0].mxu0
        %1857 = vdwg.mxu0
        %v1874 = vunpack.c.l.b16 %v1728
        %v1875 = vunpack.c.l.b16 %v1729
        %v1876 = vunpack.c.l.b16 %v1730
        %v1877 = vunpack.c.l.b16 %v1731
        %v1878 = vunpack.c.l.b16 %v1732
        %v1879 = vunpack.c.l.b16 %v1733
        %v1880 = vunpack.c.l.b16 %v1734
        %v1881 = vunpack.c.l.b16 %v1735
        %v1882 = vunpack.c.l.b16 %v1736
        %v1883 = vunpack.c.l.b16 %v1737
        %v1884 = vunpack.c.l.b16 %v1738
        %v1885 = vunpack.c.l.b16 %v1739
        %v1886 = vunpack.c.l.b16 %v1740
        %v1887 = vunpack.c.l.b16 %v1741
        %v1888 = vunpack.c.l.b16 %v1742
        %v1889 = vunpack.c.l.b16 %v1743
        %v1890 = vpack.c.b16 %v1875, %v1874
        %v1891 = vpack.c.b16 %v1877, %v1876
        %v1892 = vpack.c.b16 %v1879, %v1878
        %v1893 = vpack.c.b16 %v1881, %v1880
        %v1894 = vpack.c.b16 %v1883, %v1882
        %v1895 = vpack.c.b16 %v1885, %v1884
        %v1896 = vpack.c.b16 %v1887, %v1886
        %v1897 = vpack.c.b16 %v1889, %v1888
        %1906 = vmatprep.subr.bf16.mxu0 0
        %1907 = vmatpush1.bf16.msra.mxu0 %v1890
        %1908 = vmatprep.subr.bf16.mxu0 0
        %1909 = vmatpush1.bf16.msra.mxu0 %v1891
        %1910 = vmatprep.subr.bf16.mxu0 0
        %1911 = vmatpush1.bf16.msra.mxu0 %v1892
        %1912 = vmatprep.subr.bf16.mxu0 0
        %1913 = vmatpush1.bf16.msra.mxu0 %v1893
        %1914 = vmatprep.subr.bf16.mxu0 0
        %1915 = vmatpush1.bf16.msra.mxu0 %v1894
        %1916 = vmatprep.subr.bf16.mxu0 0
        %1917 = vmatpush1.bf16.msra.mxu0 %v1895
        %1918 = vmatprep.subr.bf16.mxu0 0
        %1919 = vmatpush1.bf16.msra.mxu0 %v1896
        %1920 = vmatprep.subr.bf16.mxu0 0
        %1921 = vmatpush1.bf16.msra.mxu0 %v1897
        %1922 = vmatprep.subr.bf16.mxu0 0
        %1923 = vmatpush1.bf16.msra.mxu0 0
        %1924 = vmatprep.subr.bf16.mxu0 0
        %1925 = vmatpush1.bf16.msra.mxu0 0
        %1926 = vmatprep.subr.bf16.mxu0 0
        %1927 = vmatpush1.bf16.msra.mxu0 0
        %1928 = vmatprep.subr.bf16.mxu0 0
        %1929 = vmatpush1.bf16.msra.mxu0 0
        %1930 = vmatprep.subr.bf16.mxu0 0
        %1931 = vmatpush1.bf16.msra.mxu0 0
        %1932 = vmatprep.subr.bf16.mxu0 0
        %1933 = vmatpush1.bf16.msra.mxu0 0
        %1934 = vmatprep.subr.bf16.mxu0 0
        %1935 = vmatpush1.bf16.msra.mxu0 0
        %1936 = vmatprep.subr.bf16.mxu0 0
        %1937 = vmatpush1.bf16.msra.mxu0 0
        %1938 = vmatprep.mubr.bf16.mxu0 0
        %1939 = vmatmul.mubr.bf16.gmra.mrb[0].mxu0 %v1726
        %v1940 = vpop.f32.mrb[0].mxu0
        %v1941 = vadd.f32 %v1853, %v1940
        %v1942 = vpop.f32.mrb[0].mxu0
        %v1943 = vpop.f32.mrb[0].mxu0
        %v1944 = vpop.f32.mrb[0].mxu0
        %1945 = vdwg.mxu0
        %v1946 = vrot.slane %v1722, 6
        %v1948 = vsel %vm1166, 0, %v1946
        %v1950 = vld [vmem:[#allocation2 + $0x240] sm:$0xf]
        %v1951 = vld [vmem:[#allocation2 + $0x244] sm:$0xf]
        %v1952 = vld [vmem:[#allocation2 + $0x248] sm:$0xf]
        %v1953 = vld [vmem:[#allocation2 + $0x24c] sm:$0xf]
        %v1954 = vld [vmem:[#allocation2 + $0x250] sm:$0xf]
        %v1955 = vld [vmem:[#allocation2 + $0x254] sm:$0xf]
        %v1956 = vld [vmem:[#allocation2 + $0x258] sm:$0xf]
        %v1957 = vld [vmem:[#allocation2 + $0x25c] sm:$0xf]
        %v1958 = vld [vmem:[#allocation2 + $0x260] sm:$0xf]
        %v1959 = vld [vmem:[#allocation2 + $0x264] sm:$0xf]
        %v1960 = vld [vmem:[#allocation2 + $0x268] sm:$0xf]
        %v1961 = vld [vmem:[#allocation2 + $0x26c] sm:$0xf]
        %v1962 = vld [vmem:[#allocation2 + $0x270] sm:$0xf]
        %v1963 = vld [vmem:[#allocation2 + $0x274] sm:$0xf]
        %v1964 = vld [vmem:[#allocation2 + $0x278] sm:$0xf]
        %v1965 = vld [vmem:[#allocation2 + $0x27c] sm:$0xf]
        %v1982 = vunpack.c.l.b16 %v1950
        %v1983 = vunpack.c.l.b16 %v1951
        %v1984 = vunpack.c.l.b16 %v1952
        %v1985 = vunpack.c.l.b16 %v1953
        %v1986 = vunpack.c.l.b16 %v1954
        %v1987 = vunpack.c.l.b16 %v1955
        %v1988 = vunpack.c.l.b16 %v1956
        %v1989 = vunpack.c.l.b16 %v1957
        %v1990 = vunpack.c.l.b16 %v1958
        %v1991 = vunpack.c.l.b16 %v1959
        %v1992 = vunpack.c.l.b16 %v1960
        %v1993 = vunpack.c.l.b16 %v1961
        %v1994 = vunpack.c.l.b16 %v1962
        %v1995 = vunpack.c.l.b16 %v1963
        %v1996 = vunpack.c.l.b16 %v1964
        %v1997 = vunpack.c.l.b16 %v1965
        %v1998 = vpack.c.b16 %v1983, %v1982
        %v1999 = vpack.c.b16 %v1985, %v1984
        %v2000 = vpack.c.b16 %v1987, %v1986
        %v2001 = vpack.c.b16 %v1989, %v1988
        %v2002 = vpack.c.b16 %v1991, %v1990
        %v2003 = vpack.c.b16 %v1993, %v1992
        %v2004 = vpack.c.b16 %v1995, %v1994
        %v2005 = vpack.c.b16 %v1997, %v1996
        %2014 = vmatprep.subr.bf16.mxu0 0
        %2015 = vmatpush1.bf16.msra.mxu0 %v1998
        %2016 = vmatprep.subr.bf16.mxu0 0
        %2017 = vmatpush1.bf16.msra.mxu0 %v1999
        %2018 = vmatprep.subr.bf16.mxu0 0
        %2019 = vmatpush1.bf16.msra.mxu0 %v2000
        %2020 = vmatprep.subr.bf16.mxu0 0
        %2021 = vmatpush1.bf16.msra.mxu0 %v2001
        %2022 = vmatprep.subr.bf16.mxu0 0
        %2023 = vmatpush1.bf16.msra.mxu0 %v2002
        %2024 = vmatprep.subr.bf16.mxu0 0
        %2025 = vmatpush1.bf16.msra.mxu0 %v2003
        %2026 = vmatprep.subr.bf16.mxu0 0
        %2027 = vmatpush1.bf16.msra.mxu0 %v2004
        %2028 = vmatprep.subr.bf16.mxu0 0
        %2029 = vmatpush1.bf16.msra.mxu0 %v2005
        %2030 = vmatprep.subr.bf16.mxu0 0
        %2031 = vmatpush1.bf16.msra.mxu0 0
        %2032 = vmatprep.subr.bf16.mxu0 0
        %2033 = vmatpush1.bf16.msra.mxu0 0
        %2034 = vmatprep.subr.bf16.mxu0 0
        %2035 = vmatpush1.bf16.msra.mxu0 0
        %2036 = vmatprep.subr.bf16.mxu0 0
        %2037 = vmatpush1.bf16.msra.mxu0 0
        %2038 = vmatprep.subr.bf16.mxu0 0
        %2039 = vmatpush1.bf16.msra.mxu0 0
        %2040 = vmatprep.subr.bf16.mxu0 0
        %2041 = vmatpush1.bf16.msra.mxu0 0
        %2042 = vmatprep.subr.bf16.mxu0 0
        %2043 = vmatpush1.bf16.msra.mxu0 0
        %2044 = vmatprep.subr.bf16.mxu0 0
        %2045 = vmatpush1.bf16.msra.mxu0 0
        %2046 = vmatprep.mubr.bf16.mxu0 0
        %2047 = vmatmul.mubr.bf16.gmra.mrb[0].mxu0 %v1948
        %v2048 = vpop.f32.mrb[0].mxu0
        %v2049 = vadd.f32 0.0, %v2048
        %v2050 = vpop.f32.mrb[0].mxu0
        %v2051 = vpop.f32.mrb[0].mxu0
        %v2052 = vpop.f32.mrb[0].mxu0
        %2053 = vdwg.mxu0
        %v2054 = vadd.f32 %v1941, %v2049
        %v2055 = vrot.slane %v1745, 6
        %v2056 = vrot.slane %v1748, 7
        %v2057 = vor.u32 %v2055, %v2056
        %v2059 = vsel %vm1281, 0, %v2057
        %v2060 = vld [vmem:[#allocation2 + $0x280] sm:$0xf]
        %v2061 = vld [vmem:[#allocation2 + $0x284] sm:$0xf]
        %v2062 = vld [vmem:[#allocation2 + $0x288] sm:$0xf]
        %v2063 = vld [vmem:[#allocation2 + $0x28c] sm:$0xf]
        %v2064 = vld [vmem:[#allocation2 + $0x290] sm:$0xf]
        %v2065 = vld [vmem:[#allocation2 + $0x294] sm:$0xf]
        %v2066 = vld [vmem:[#allocation2 + $0x298] sm:$0xf]
        %v2067 = vld [vmem:[#allocation2 + $0x29c] sm:$0xf]
        %v2068 = vld [vmem:[#allocation2 + $0x2a0] sm:$0xf]
        %v2069 = vld [vmem:[#allocation2 + $0x2a4] sm:$0xf]
        %v2070 = vld [vmem:[#allocation2 + $0x2a8] sm:$0xf]
        %v2071 = vld [vmem:[#allocation2 + $0x2ac] sm:$0xf]
        %v2072 = vld [vmem:[#allocation2 + $0x2b0] sm:$0xf]
        %v2073 = vld [vmem:[#allocation2 + $0x2b4] sm:$0xf]
        %v2074 = vld [vmem:[#allocation2 + $0x2b8] sm:$0xf]
        %v2075 = vld [vmem:[#allocation2 + $0x2bc] sm:$0xf]
        %v2092 = vunpack.c.l.b16 %v2060
        %v2093 = vunpack.c.l.b16 %v2061
        %v2094 = vunpack.c.l.b16 %v2062
        %v2095 = vunpack.c.l.b16 %v2063
        %v2096 = vunpack.c.l.b16 %v2064
        %v2097 = vunpack.c.l.b16 %v2065
        %v2098 = vunpack.c.l.b16 %v2066
        %v2099 = vunpack.c.l.b16 %v2067
        %v2100 = vunpack.c.l.b16 %v2068
        %v2101 = vunpack.c.l.b16 %v2069
        %v2102 = vunpack.c.l.b16 %v2070
        %v2103 = vunpack.c.l.b16 %v2071
        %v2104 = vunpack.c.l.b16 %v2072
        %v2105 = vunpack.c.l.b16 %v2073
        %v2106 = vunpack.c.l.b16 %v2074
        %v2107 = vunpack.c.l.b16 %v2075
        %v2108 = vpack.c.b16 %v2093, %v2092
        %v2109 = vpack.c.b16 %v2095, %v2094
        %v2110 = vpack.c.b16 %v2097, %v2096
        %v2111 = vpack.c.b16 %v2099, %v2098
        %v2112 = vpack.c.b16 %v2101, %v2100
        %v2113 = vpack.c.b16 %v2103, %v2102
        %v2114 = vpack.c.b16 %v2105, %v2104
        %v2115 = vpack.c.b16 %v2107, %v2106
        %2124 = vmatprep.subr.bf16.mxu0 0
        %2125 = vmatpush1.bf16.msra.mxu0 %v2108
        %2126 = vmatprep.subr.bf16.mxu0 0
        %2127 = vmatpush1.bf16.msra.mxu0 %v2109
        %2128 = vmatprep.subr.bf16.mxu0 0
        %2129 = vmatpush1.bf16.msra.mxu0 %v2110
        %2130 = vmatprep.subr.bf16.mxu0 0
        %2131 = vmatpush1.bf16.msra.mxu0 %v2111
        %2132 = vmatprep.subr.bf16.mxu0 0
        %2133 = vmatpush1.bf16.msra.mxu0 %v2112
        %2134 = vmatprep.subr.bf16.mxu0 0
        %2135 = vmatpush1.bf16.msra.mxu0 %v2113
        %2136 = vmatprep.subr.bf16.mxu0 0
        %2137 = vmatpush1.bf16.msra.mxu0 %v2114
        %2138 = vmatprep.subr.bf16.mxu0 0
        %2139 = vmatpush1.bf16.msra.mxu0 %v2115
        %2140 = vmatprep.subr.bf16.mxu0 0
        %2141 = vmatpush1.bf16.msra.mxu0 0
        %2142 = vmatprep.subr.bf16.mxu0 0
        %2143 = vmatpush1.bf16.msra.mxu0 0
        %2144 = vmatprep.subr.bf16.mxu0 0
        %2145 = vmatpush1.bf16.msra.mxu0 0
        %2146 = vmatprep.subr.bf16.mxu0 0
        %2147 = vmatpush1.bf16.msra.mxu0 0
        %2148 = vmatprep.subr.bf16.mxu0 0
        %2149 = vmatpush1.bf16.msra.mxu0 0
        %2150 = vmatprep.subr.bf16.mxu0 0
        %2151 = vmatpush1.bf16.msra.mxu0 0
        %2152 = vmatprep.subr.bf16.mxu0 0
        %2153 = vmatpush1.bf16.msra.mxu0 0
        %2154 = vmatprep.subr.bf16.mxu0 0
        %2155 = vmatpush1.bf16.msra.mxu0 0
        %2156 = vmatprep.mubr.bf16.mxu0 0
        %2157 = vmatmul.mubr.bf16.gmra.mrb[0].mxu0 %v2059
        %v2158 = vpop.f32.mrb[0].mxu0
        %v2159 = vadd.f32 0.0, %v2158
        %v2160 = vpop.f32.mrb[0].mxu0
        %v2161 = vpop.f32.mrb[0].mxu0
        %v2162 = vpop.f32.mrb[0].mxu0
        %2163 = vdwg.mxu0
        %v2164 = vadd.f32 %v2054, %v2159
        %v2165 = vrot.slane %v1722, 7
        %v2167 = vsel %vm1389, 0, %v2165
        %v2169 = vld [vmem:[#allocation2 + $0x2c0] sm:$0xf]
        %v2170 = vld [vmem:[#allocation2 + $0x2c4] sm:$0xf]
        %v2171 = vld [vmem:[#allocation2 + $0x2c8] sm:$0xf]
        %v2172 = vld [vmem:[#allocation2 + $0x2cc] sm:$0xf]
        %v2173 = vld [vmem:[#allocation2 + $0x2d0] sm:$0xf]
        %v2174 = vld [vmem:[#allocation2 + $0x2d4] sm:$0xf]
        %v2175 = vld [vmem:[#allocation2 + $0x2d8] sm:$0xf]
        %v2176 = vld [vmem:[#allocation2 + $0x2dc] sm:$0xf]
        %v2177 = vld [vmem:[#allocation2 + $0x2e0] sm:$0xf]
        %v2178 = vld [vmem:[#allocation2 + $0x2e4] sm:$0xf]
        %v2179 = vld [vmem:[#allocation2 + $0x2e8] sm:$0xf]
        %v2180 = vld [vmem:[#allocation2 + $0x2ec] sm:$0xf]
        %v2181 = vld [vmem:[#allocation2 + $0x2f0] sm:$0xf]
        %v2182 = vld [vmem:[#allocation2 + $0x2f4] sm:$0xf]
        %v2183 = vld [vmem:[#allocation2 + $0x2f8] sm:$0xf]
        %v2184 = vld [vmem:[#allocation2 + $0x2fc] sm:$0xf]
        %v2201 = vunpack.c.l.b16 %v2169
        %v2202 = vunpack.c.l.b16 %v2170
        %v2203 = vunpack.c.l.b16 %v2171
        %v2204 = vunpack.c.l.b16 %v2172
        %v2205 = vunpack.c.l.b16 %v2173
        %v2206 = vunpack.c.l.b16 %v2174
        %v2207 = vunpack.c.l.b16 %v2175
        %v2208 = vunpack.c.l.b16 %v2176
        %v2209 = vunpack.c.l.b16 %v2177
        %v2210 = vunpack.c.l.b16 %v2178
        %v2211 = vunpack.c.l.b16 %v2179
        %v2212 = vunpack.c.l.b16 %v2180
        %v2213 = vunpack.c.l.b16 %v2181
        %v2214 = vunpack.c.l.b16 %v2182
        %v2215 = vunpack.c.l.b16 %v2183
        %v2216 = vunpack.c.l.b16 %v2184
        %v2217 = vpack.c.b16 %v2202, %v2201
        %v2218 = vpack.c.b16 %v2204, %v2203
        %v2219 = vpack.c.b16 %v2206, %v2205
        %v2220 = vpack.c.b16 %v2208, %v2207
        %v2221 = vpack.c.b16 %v2210, %v2209
        %v2222 = vpack.c.b16 %v2212, %v2211
        %v2223 = vpack.c.b16 %v2214, %v2213
        %v2224 = vpack.c.b16 %v2216, %v2215
        %2233 = vmatprep.subr.bf16.mxu0 0
        %2234 = vmatpush1.bf16.msra.mxu0 %v2217
        %2235 = vmatprep.subr.bf16.mxu0 0
        %2236 = vmatpush1.bf16.msra.mxu0 %v2218
        %2237 = vmatprep.subr.bf16.mxu0 0
        %2238 = vmatpush1.bf16.msra.mxu0 %v2219
        %2239 = vmatprep.subr.bf16.mxu0 0
        %2240 = vmatpush1.bf16.msra.mxu0 %v2220
        %2241 = vmatprep.subr.bf16.mxu0 0
        %2242 = vmatpush1.bf16.msra.mxu0 %v2221
        %2243 = vmatprep.subr.bf16.mxu0 0
        %2244 = vmatpush1.bf16.msra.mxu0 %v2222
        %2245 = vmatprep.subr.bf16.mxu0 0
        %2246 = vmatpush1.bf16.msra.mxu0 %v2223
        %2247 = vmatprep.subr.bf16.mxu0 0
        %2248 = vmatpush1.bf16.msra.mxu0 %v2224
        %2249 = vmatprep.subr.bf16.mxu0 0
        %2250 = vmatpush1.bf16.msra.mxu0 0
        %2251 = vmatprep.subr.bf16.mxu0 0
        %2252 = vmatpush1.bf16.msra.mxu0 0
        %2253 = vmatprep.subr.bf16.mxu0 0
        %2254 = vmatpush1.bf16.msra.mxu0 0
        %2255 = vmatprep.subr.bf16.mxu0 0
        %2256 = vmatpush1.bf16.msra.mxu0 0
        %2257 = vmatprep.subr.bf16.mxu0 0
        %2258 = vmatpush1.bf16.msra.mxu0 0
        %2259 = vmatprep.subr.bf16.mxu0 0
        %2260 = vmatpush1.bf16.msra.mxu0 0
        %2261 = vmatprep.subr.bf16.mxu0 0
        %2262 = vmatpush1.bf16.msra.mxu0 0
        %2263 = vmatprep.subr.bf16.mxu0 0
        %2264 = vmatpush1.bf16.msra.mxu0 0
        %2265 = vmatprep.mubr.bf16.mxu0 0
        %2266 = vmatmul.mubr.bf16.gmra.mrb[0].mxu0 %v2167
        %v2267 = vpop.f32.mrb[0].mxu0
        %v2268 = vadd.f32 0.0, %v2267
        %v2269 = vpop.f32.mrb[0].mxu0
        %v2270 = vpop.f32.mrb[0].mxu0
        %v2271 = vpop.f32.mrb[0].mxu0
        %2272 = vdwg.mxu0
        %v2273 = vadd.f32 %v2164, %v2268
        %v2274 = vrot.slane %v1745, 7
        %v2275 = vor.u32 %v2274, %v1748
        %v2277 = vsel %vm1503, 0, %v2275
        %v2278 = vld [vmem:[#allocation2 + $0x300] sm:$0xf]
        %v2279 = vld [vmem:[#allocation2 + $0x304] sm:$0xf]
        %v2280 = vld [vmem:[#allocation2 + $0x308] sm:$0xf]
        %v2281 = vld [vmem:[#allocation2 + $0x30c] sm:$0xf]
        %v2282 = vld [vmem:[#allocation2 + $0x310] sm:$0xf]
        %v2283 = vld [vmem:[#allocation2 + $0x314] sm:$0xf]
        %v2284 = vld [vmem:[#allocation2 + $0x318] sm:$0xf]
        %v2285 = vld [vmem:[#allocation2 + $0x31c] sm:$0xf]
        %v2286 = vld [vmem:[#allocation2 + $0x320] sm:$0xf]
        %v2287 = vld [vmem:[#allocation2 + $0x324] sm:$0xf]
        %v2288 = vld [vmem:[#allocation2 + $0x328] sm:$0xf]
        %v2289 = vld [vmem:[#allocation2 + $0x32c] sm:$0xf]
        %v2290 = vld [vmem:[#allocation2 + $0x330] sm:$0xf]
        %v2291 = vld [vmem:[#allocation2 + $0x334] sm:$0xf]
        %v2292 = vld [vmem:[#allocation2 + $0x338] sm:$0xf]
        %v2293 = vld [vmem:[#allocation2 + $0x33c] sm:$0xf]
        %v2310 = vunpack.c.l.b16 %v2278
        %v2311 = vunpack.c.l.b16 %v2279
        %v2312 = vunpack.c.l.b16 %v2280
        %v2313 = vunpack.c.l.b16 %v2281
        %v2314 = vunpack.c.l.b16 %v2282
        %v2315 = vunpack.c.l.b16 %v2283
        %v2316 = vunpack.c.l.b16 %v2284
        %v2317 = vunpack.c.l.b16 %v2285
        %v2318 = vunpack.c.l.b16 %v2286
        %v2319 = vunpack.c.l.b16 %v2287
        %v2320 = vunpack.c.l.b16 %v2288
        %v2321 = vunpack.c.l.b16 %v2289
        %v2322 = vunpack.c.l.b16 %v2290
        %v2323 = vunpack.c.l.b16 %v2291
        %v2324 = vunpack.c.l.b16 %v2292
        %v2325 = vunpack.c.l.b16 %v2293
        %v2326 = vpack.c.b16 %v2311, %v2310
        %v2327 = vpack.c.b16 %v2313, %v2312
        %v2328 = vpack.c.b16 %v2315, %v2314
        %v2329 = vpack.c.b16 %v2317, %v2316
        %v2330 = vpack.c.b16 %v2319, %v2318
        %v2331 = vpack.c.b16 %v2321, %v2320
        %v2332 = vpack.c.b16 %v2323, %v2322
        %v2333 = vpack.c.b16 %v2325, %v2324
        %2342 = vmatprep.subr.bf16.mxu0 0
        %2343 = vmatpush1.bf16.msra.mxu0 %v2326
        %2344 = vmatprep.subr.bf16.mxu0 0
        %2345 = vmatpush1.bf16.msra.mxu0 %v2327
        %2346 = vmatprep.subr.bf16.mxu0 0
        %2347 = vmatpush1.bf16.msra.mxu0 %v2328
        %2348 = vmatprep.subr.bf16.mxu0 0
        %2349 = vmatpush1.bf16.msra.mxu0 %v2329
        %2350 = vmatprep.subr.bf16.mxu0 0
        %2351 = vmatpush1.bf16.msra.mxu0 %v2330
        %2352 = vmatprep.subr.bf16.mxu0 0
        %2353 = vmatpush1.bf16.msra.mxu0 %v2331
        %2354 = vmatprep.subr.bf16.mxu0 0
        %2355 = vmatpush1.bf16.msra.mxu0 %v2332
        %2356 = vmatprep.subr.bf16.mxu0 0
        %2357 = vmatpush1.bf16.msra.mxu0 %v2333
        %2358 = vmatprep.subr.bf16.mxu0 0
        %2359 = vmatpush1.bf16.msra.mxu0 0
        %2360 = vmatprep.subr.bf16.mxu0 0
        %2361 = vmatpush1.bf16.msra.mxu0 0
        %2362 = vmatprep.subr.bf16.mxu0 0
        %2363 = vmatpush1.bf16.msra.mxu0 0
        %2364 = vmatprep.subr.bf16.mxu0 0
        %2365 = vmatpush1.bf16.msra.mxu0 0
        %2366 = vmatprep.subr.bf16.mxu0 0
        %2367 = vmatpush1.bf16.msra.mxu0 0
        %2368 = vmatprep.subr.bf16.mxu0 0
        %2369 = vmatpush1.bf16.msra.mxu0 0
        %2370 = vmatprep.subr.bf16.mxu0 0
        %2371 = vmatpush1.bf16.msra.mxu0 0
        %2372 = vmatprep.subr.bf16.mxu0 0
        %2373 = vmatpush1.bf16.msra.mxu0 0
        %2374 = vmatprep.mubr.bf16.mxu0 0
        %2375 = vmatmul.mubr.bf16.gmra.mrb[0].mxu0 %v2277
        %v2376 = vpop.f32.mrb[0].mxu0
        %v2377 = vadd.f32 0.0, %v2376
        %v2378 = vpop.f32.mrb[0].mxu0
        %v2379 = vpop.f32.mrb[0].mxu0
        %v2380 = vpop.f32.mrb[0].mxu0
        %2381 = vdwg.mxu0
        %v2382 = vadd.f32 %v2273, %v2377
        %v2383 = vld [vmem:[#allocation2 + $0x340] sm:$0xf]
        %v2384 = vld [vmem:[#allocation2 + $0x344] sm:$0xf]
        %v2385 = vld [vmem:[#allocation2 + $0x348] sm:$0xf]
        %v2386 = vld [vmem:[#allocation2 + $0x34c] sm:$0xf]
        %v2387 = vld [vmem:[#allocation2 + $0x350] sm:$0xf]
        %v2388 = vld [vmem:[#allocation2 + $0x354] sm:$0xf]
        %v2389 = vld [vmem:[#allocation2 + $0x358] sm:$0xf]
        %v2390 = vld [vmem:[#allocation2 + $0x35c] sm:$0xf]
        %v2391 = vld [vmem:[#allocation2 + $0x360] sm:$0xf]
        %v2392 = vld [vmem:[#allocation2 + $0x364] sm:$0xf]
        %v2393 = vld [vmem:[#allocation2 + $0x368] sm:$0xf]
        %v2394 = vld [vmem:[#allocation2 + $0x36c] sm:$0xf]
        %v2395 = vld [vmem:[#allocation2 + $0x370] sm:$0xf]
        %v2396 = vld [vmem:[#allocation2 + $0x374] sm:$0xf]
        %v2397 = vld [vmem:[#allocation2 + $0x378] sm:$0xf]
        %v2398 = vld [vmem:[#allocation2 + $0x37c] sm:$0xf]
        %v2415 = vunpack.c.l.b16 %v2383
        %v2416 = vunpack.c.l.b16 %v2384
        %v2417 = vunpack.c.l.b16 %v2385
        %v2418 = vunpack.c.l.b16 %v2386
        %v2419 = vunpack.c.l.b16 %v2387
        %v2420 = vunpack.c.l.b16 %v2388
        %v2421 = vunpack.c.l.b16 %v2389
        %v2422 = vunpack.c.l.b16 %v2390
        %v2423 = vunpack.c.l.b16 %v2391
        %v2424 = vunpack.c.l.b16 %v2392
        %v2425 = vunpack.c.l.b16 %v2393
        %v2426 = vunpack.c.l.b16 %v2394
        %v2427 = vunpack.c.l.b16 %v2395
        %v2428 = vunpack.c.l.b16 %v2396
        %v2429 = vunpack.c.l.b16 %v2397
        %v2430 = vunpack.c.l.b16 %v2398
        %v2431 = vpack.c.b16 %v2416, %v2415
        %v2432 = vpack.c.b16 %v2418, %v2417
        %v2433 = vpack.c.b16 %v2420, %v2419
        %v2434 = vpack.c.b16 %v2422, %v2421
        %v2435 = vpack.c.b16 %v2424, %v2423
        %v2436 = vpack.c.b16 %v2426, %v2425
        %v2437 = vpack.c.b16 %v2428, %v2427
        %v2438 = vpack.c.b16 %v2430, %v2429
        %2447 = vmatprep.subr.bf16.mxu0 0
        %2448 = vmatpush1.bf16.msra.mxu0 %v2431
        %2449 = vmatprep.subr.bf16.mxu0 0
        %2450 = vmatpush1.bf16.msra.mxu0 %v2432
        %2451 = vmatprep.subr.bf16.mxu0 0
        %2452 = vmatpush1.bf16.msra.mxu0 %v2433
        %2453 = vmatprep.subr.bf16.mxu0 0
        %2454 = vmatpush1.bf16.msra.mxu0 %v2434
        %2455 = vmatprep.subr.bf16.mxu0 0
        %2456 = vmatpush1.bf16.msra.mxu0 %v2435
        %2457 = vmatprep.subr.bf16.mxu0 0
        %2458 = vmatpush1.bf16.msra.mxu0 %v2436
        %2459 = vmatprep.subr.bf16.mxu0 0
        %2460 = vmatpush1.bf16.msra.mxu0 %v2437
        %2461 = vmatprep.subr.bf16.mxu0 0
        %2462 = vmatpush1.bf16.msra.mxu0 %v2438
        %2463 = vmatprep.subr.bf16.mxu0 0
        %2464 = vmatpush1.bf16.msra.mxu0 0
        %2465 = vmatprep.subr.bf16.mxu0 0
        %2466 = vmatpush1.bf16.msra.mxu0 0
        %2467 = vmatprep.subr.bf16.mxu0 0
        %2468 = vmatpush1.bf16.msra.mxu0 0
        %2469 = vmatprep.subr.bf16.mxu0 0
        %2470 = vmatpush1.bf16.msra.mxu0 0
        %2471 = vmatprep.subr.bf16.mxu0 0
        %2472 = vmatpush1.bf16.msra.mxu0 0
        %2473 = vmatprep.subr.bf16.mxu0 0
        %2474 = vmatpush1.bf16.msra.mxu0 0
        %2475 = vmatprep.subr.bf16.mxu0 0
        %2476 = vmatpush1.bf16.msra.mxu0 0
        %2477 = vmatprep.subr.bf16.mxu0 0
        %2478 = vmatpush1.bf16.msra.mxu0 0
        %2479 = vmatprep.mubr.bf16.mxu0 0
        %2480 = vmatmul.mubr.bf16.gmra.mrb[0].mxu0 %v1722
        %v2481 = vpop.f32.mrb[0].mxu0
        %v2482 = vadd.f32 0.0, %v2481
        %v2483 = vpop.f32.mrb[0].mxu0
        %v2484 = vpop.f32.mrb[0].mxu0
        %v2485 = vpop.f32.mrb[0].mxu0
        %2486 = vdwg.mxu0
        %v2487 = vadd.f32 %v2382, %v2482
        %v2488 = vld [vmem:[#allocation5 + $0x2] sm:$0x1]
        %v2489 = vlaneseq
        %v2490 = vshrl.u32 %v2489, 7
        %v2491 = vsub.s32 0, %v2490
        %v2492 = vrot.slane %v2488, %v2491
        %v2493 = vadd.f32 %v2487, %v2492
        %v2494 = vmax.f32 %v2493, 0.0
        %v2495 = vld [vmem:[#allocation2 + $0x380] sm:$0xf]
        %v2496 = vld [vmem:[#allocation2 + $0x384] sm:$0xf]
        %v2497 = vld [vmem:[#allocation2 + $0x388] sm:$0xf]
        %v2498 = vld [vmem:[#allocation2 + $0x38c] sm:$0xf]
        %v2499 = vld [vmem:[#allocation2 + $0x390] sm:$0xf]
        %v2500 = vld [vmem:[#allocation2 + $0x394] sm:$0xf]
        %v2501 = vld [vmem:[#allocation2 + $0x398] sm:$0xf]
        %v2502 = vld [vmem:[#allocation2 + $0x39c] sm:$0xf]
        %v2503 = vld [vmem:[#allocation2 + $0x3a0] sm:$0xf]
        %v2504 = vld [vmem:[#allocation2 + $0x3a4] sm:$0xf]
        %v2505 = vld [vmem:[#allocation2 + $0x3a8] sm:$0xf]
        %v2506 = vld [vmem:[#allocation2 + $0x3ac] sm:$0xf]
        %v2507 = vld [vmem:[#allocation2 + $0x3b0] sm:$0xf]
        %v2508 = vld [vmem:[#allocation2 + $0x3b4] sm:$0xf]
        %v2509 = vld [vmem:[#allocation2 + $0x3b8] sm:$0xf]
        %v2510 = vld [vmem:[#allocation2 + $0x3bc] sm:$0xf]
        %v2511 = vld [vmem:[#allocation5 + $0x3] sm:$0x1]
        %v2512 = vlaneseq
        %v2513 = vshrl.u32 %v2512, 7
        %v2514 = vsub.s32 0, %v2513
        %v2515 = vrot.slane %v2511, %v2514
        %v2532 = vunpack.c.l.b16 %v2495
        %v2533 = vunpack.c.l.b16 %v2496
        %v2534 = vunpack.c.l.b16 %v2497
        %v2535 = vunpack.c.l.b16 %v2498
        %v2536 = vunpack.c.l.b16 %v2499
        %v2537 = vunpack.c.l.b16 %v2500
        %v2538 = vunpack.c.l.b16 %v2501
        %v2539 = vunpack.c.l.b16 %v2502
        %v2540 = vunpack.c.l.b16 %v2503
        %v2541 = vunpack.c.l.b16 %v2504
        %v2542 = vunpack.c.l.b16 %v2505
        %v2543 = vunpack.c.l.b16 %v2506
        %v2544 = vunpack.c.l.b16 %v2507
        %v2545 = vunpack.c.l.b16 %v2508
        %v2546 = vunpack.c.l.b16 %v2509
        %v2547 = vunpack.c.l.b16 %v2510
        %v2548 = vpack.c.b16 %v2533, %v2532
        %v2549 = vpack.c.b16 %v2535, %v2534
        %v2550 = vpack.c.b16 %v2537, %v2536
        %v2551 = vpack.c.b16 %v2539, %v2538
        %v2552 = vpack.c.b16 %v2541, %v2540
        %v2553 = vpack.c.b16 %v2543, %v2542
        %v2554 = vpack.c.b16 %v2545, %v2544
        %v2555 = vpack.c.b16 %v2547, %v2546
        %2564 = vmatprep.subr.bf16.mxu0 0
        %2565 = vmatpush1.bf16.msra.mxu0 %v2548
        %2566 = vmatprep.subr.bf16.mxu0 0
        %2567 = vmatpush1.bf16.msra.mxu0 %v2549
        %2568 = vmatprep.subr.bf16.mxu0 0
        %2569 = vmatpush1.bf16.msra.mxu0 %v2550
        %2570 = vmatprep.subr.bf16.mxu0 0
        %2571 = vmatpush1.bf16.msra.mxu0 %v2551
        %2572 = vmatprep.subr.bf16.mxu0 0
        %2573 = vmatpush1.bf16.msra.mxu0 %v2552
        %2574 = vmatprep.subr.bf16.mxu0 0
        %2575 = vmatpush1.bf16.msra.mxu0 %v2553
        %2576 = vmatprep.subr.bf16.mxu0 0
        %2577 = vmatpush1.bf16.msra.mxu0 %v2554
        %2578 = vmatprep.subr.bf16.mxu0 0
        %2579 = vmatpush1.bf16.msra.mxu0 %v2555
        %2580 = vmatprep.subr.bf16.mxu0 0
        %2581 = vmatpush1.bf16.msra.mxu0 0
        %2582 = vmatprep.subr.bf16.mxu0 0
        %2583 = vmatpush1.bf16.msra.mxu0 0
        %2584 = vmatprep.subr.bf16.mxu0 0
        %2585 = vmatpush1.bf16.msra.mxu0 0
        %2586 = vmatprep.subr.bf16.mxu0 0
        %2587 = vmatpush1.bf16.msra.mxu0 0
        %2588 = vmatprep.subr.bf16.mxu0 0
        %2589 = vmatpush1.bf16.msra.mxu0 0
        %2590 = vmatprep.subr.bf16.mxu0 0
        %2591 = vmatpush1.bf16.msra.mxu0 0
        %2592 = vmatprep.subr.bf16.mxu0 0
        %2593 = vmatpush1.bf16.msra.mxu0 0
        %2594 = vmatprep.subr.bf16.mxu0 0
        %2595 = vmatpush1.bf16.msra.mxu0 0
        %2596 = vmatprep.mubr.bf16.mxu0 0
        %2597 = vmatmul.mubr.bf16.gmra.mrb[0].mxu0 %v936
        %v2598 = vpop.f32.mrb[0].mxu0
        %v2599 = vadd.f32 %v2515, %v2598
        %v2600 = vpop.f32.mrb[0].mxu0
        %v2601 = vpop.f32.mrb[0].mxu0
        %v2602 = vpop.f32.mrb[0].mxu0
        %2603 = vdwg.mxu0
        %v2604 = vadd.f32 %v2494, %v2599
        %v2605 = vmax.f32 %v2604, 0.0
        %v2606 = vpack.c.bf16 %v2605, %v2605
        %v2608 = vrot.slane %v2606, 5
        %v2610 = vsel %vm939, 0, %v2608
        %v2612 = vld [vmem:[#allocation2 + $0x3c0] sm:$0xf]
        %v2613 = vld [vmem:[#allocation2 + $0x3c4] sm:$0xf]
        %v2614 = vld [vmem:[#allocation2 + $0x3c8] sm:$0xf]
        %v2615 = vld [vmem:[#allocation2 + $0x3cc] sm:$0xf]
        %v2616 = vld [vmem:[#allocation2 + $0x3d0] sm:$0xf]
        %v2617 = vld [vmem:[#allocation2 + $0x3d4] sm:$0xf]
        %v2618 = vld [vmem:[#allocation2 + $0x3d8] sm:$0xf]
        %v2619 = vld [vmem:[#allocation2 + $0x3dc] sm:$0xf]
        %v2620 = vld [vmem:[#allocation2 + $0x3e0] sm:$0xf]
        %v2621 = vld [vmem:[#allocation2 + $0x3e4] sm:$0xf]
        %v2622 = vld [vmem:[#allocation2 + $0x3e8] sm:$0xf]
        %v2623 = vld [vmem:[#allocation2 + $0x3ec] sm:$0xf]
        %v2624 = vld [vmem:[#allocation2 + $0x3f0] sm:$0xf]
        %v2625 = vld [vmem:[#allocation2 + $0x3f4] sm:$0xf]
        %v2626 = vld [vmem:[#allocation2 + $0x3f8] sm:$0xf]
        %v2627 = vld [vmem:[#allocation2 + $0x3fc] sm:$0xf]
        %v2628 = vrot.slane %v2606, 6
        %v2630 = vsel %vm1166, 0, %v2628
        %v2632 = vld [vmem:[#allocation2 + $0x400] sm:$0xf]
        %v2633 = vld [vmem:[#allocation2 + $0x404] sm:$0xf]
        %v2634 = vld [vmem:[#allocation2 + $0x408] sm:$0xf]
        %v2635 = vld [vmem:[#allocation2 + $0x40c] sm:$0xf]
        %v2636 = vld [vmem:[#allocation2 + $0x410] sm:$0xf]
        %v2637 = vld [vmem:[#allocation2 + $0x414] sm:$0xf]
        %v2638 = vld [vmem:[#allocation2 + $0x418] sm:$0xf]
        %v2639 = vld [vmem:[#allocation2 + $0x41c] sm:$0xf]
        %v2640 = vld [vmem:[#allocation2 + $0x420] sm:$0xf]
        %v2641 = vld [vmem:[#allocation2 + $0x424] sm:$0xf]
        %v2642 = vld [vmem:[#allocation2 + $0x428] sm:$0xf]
        %v2643 = vld [vmem:[#allocation2 + $0x42c] sm:$0xf]
        %v2644 = vld [vmem:[#allocation2 + $0x430] sm:$0xf]
        %v2645 = vld [vmem:[#allocation2 + $0x434] sm:$0xf]
        %v2646 = vld [vmem:[#allocation2 + $0x438] sm:$0xf]
        %v2647 = vld [vmem:[#allocation2 + $0x43c] sm:$0xf]
        %v2664 = vunpack.c.l.b16 %v2632
        %v2665 = vunpack.c.l.b16 %v2633
        %v2666 = vunpack.c.l.b16 %v2634
        %v2667 = vunpack.c.l.b16 %v2635
        %v2668 = vunpack.c.l.b16 %v2636
        %v2669 = vunpack.c.l.b16 %v2637
        %v2670 = vunpack.c.l.b16 %v2638
        %v2671 = vunpack.c.l.b16 %v2639
        %v2672 = vunpack.c.l.b16 %v2640
        %v2673 = vunpack.c.l.b16 %v2641
        %v2674 = vunpack.c.l.b16 %v2642
        %v2675 = vunpack.c.l.b16 %v2643
        %v2676 = vunpack.c.l.b16 %v2644
        %v2677 = vunpack.c.l.b16 %v2645
        %v2678 = vunpack.c.l.b16 %v2646
        %v2679 = vunpack.c.l.b16 %v2647
        %v2680 = vpack.c.b16 %v2665, %v2664
        %v2681 = vpack.c.b16 %v2667, %v2666
        %v2682 = vpack.c.b16 %v2669, %v2668
        %v2683 = vpack.c.b16 %v2671, %v2670
        %v2684 = vpack.c.b16 %v2673, %v2672
        %v2685 = vpack.c.b16 %v2675, %v2674
        %v2686 = vpack.c.b16 %v2677, %v2676
        %v2687 = vpack.c.b16 %v2679, %v2678
        %2696 = vmatprep.subr.bf16.mxu0 0
        %2697 = vmatpush1.bf16.msra.mxu0 %v2680
        %2698 = vmatprep.subr.bf16.mxu0 0
        %2699 = vmatpush1.bf16.msra.mxu0 %v2681
        %2700 = vmatprep.subr.bf16.mxu0 0
        %2701 = vmatpush1.bf16.msra.mxu0 %v2682
        %2702 = vmatprep.subr.bf16.mxu0 0
        %2703 = vmatpush1.bf16.msra.mxu0 %v2683
        %2704 = vmatprep.subr.bf16.mxu0 0
        %2705 = vmatpush1.bf16.msra.mxu0 %v2684
        %2706 = vmatprep.subr.bf16.mxu0 0
        %2707 = vmatpush1.bf16.msra.mxu0 %v2685
        %2708 = vmatprep.subr.bf16.mxu0 0
        %2709 = vmatpush1.bf16.msra.mxu0 %v2686
        %2710 = vmatprep.subr.bf16.mxu0 0
        %2711 = vmatpush1.bf16.msra.mxu0 %v2687
        %2712 = vmatprep.subr.bf16.mxu0 0
        %2713 = vmatpush1.bf16.msra.mxu0 0
        %2714 = vmatprep.subr.bf16.mxu0 0
        %2715 = vmatpush1.bf16.msra.mxu0 0
        %2716 = vmatprep.subr.bf16.mxu0 0
        %2717 = vmatpush1.bf16.msra.mxu0 0
        %2718 = vmatprep.subr.bf16.mxu0 0
        %2719 = vmatpush1.bf16.msra.mxu0 0
        %2720 = vmatprep.subr.bf16.mxu0 0
        %2721 = vmatpush1.bf16.msra.mxu0 0
        %2722 = vmatprep.subr.bf16.mxu0 0
        %2723 = vmatpush1.bf16.msra.mxu0 0
        %2724 = vmatprep.subr.bf16.mxu0 0
        %2725 = vmatpush1.bf16.msra.mxu0 0
        %2726 = vmatprep.subr.bf16.mxu0 0
        %2727 = vmatpush1.bf16.msra.mxu0 0
        %2728 = vmatprep.mubr.bf16.mxu0 0
        %2729 = vmatmul.mubr.bf16.gmra.mrb[0].mxu0 %v2630
        %v2730 = vpop.f32.mrb[0].mxu0
        %v2731 = vadd.f32 0.0, %v2730
        %v2732 = vpop.f32.mrb[0].mxu0
        %v2733 = vpop.f32.mrb[0].mxu0
        %v2734 = vpop.f32.mrb[0].mxu0
        %2735 = vdwg.mxu0
        %v2752 = vunpack.c.l.b16 %v2612
        %v2753 = vunpack.c.l.b16 %v2613
        %v2754 = vunpack.c.l.b16 %v2614
        %v2755 = vunpack.c.l.b16 %v2615
        %v2756 = vunpack.c.l.b16 %v2616
        %v2757 = vunpack.c.l.b16 %v2617
        %v2758 = vunpack.c.l.b16 %v2618
        %v2759 = vunpack.c.l.b16 %v2619
        %v2760 = vunpack.c.l.b16 %v2620
        %v2761 = vunpack.c.l.b16 %v2621
        %v2762 = vunpack.c.l.b16 %v2622
        %v2763 = vunpack.c.l.b16 %v2623
        %v2764 = vunpack.c.l.b16 %v2624
        %v2765 = vunpack.c.l.b16 %v2625
        %v2766 = vunpack.c.l.b16 %v2626
        %v2767 = vunpack.c.l.b16 %v2627
        %v2768 = vpack.c.b16 %v2753, %v2752
        %v2769 = vpack.c.b16 %v2755, %v2754
        %v2770 = vpack.c.b16 %v2757, %v2756
        %v2771 = vpack.c.b16 %v2759, %v2758
        %v2772 = vpack.c.b16 %v2761, %v2760
        %v2773 = vpack.c.b16 %v2763, %v2762
        %v2774 = vpack.c.b16 %v2765, %v2764
        %v2775 = vpack.c.b16 %v2767, %v2766
        %2784 = vmatprep.subr.bf16.mxu0 0
        %2785 = vmatpush1.bf16.msra.mxu0 %v2768
        %2786 = vmatprep.subr.bf16.mxu0 0
        %2787 = vmatpush1.bf16.msra.mxu0 %v2769
        %2788 = vmatprep.subr.bf16.mxu0 0
        %2789 = vmatpush1.bf16.msra.mxu0 %v2770
        %2790 = vmatprep.subr.bf16.mxu0 0
        %2791 = vmatpush1.bf16.msra.mxu0 %v2771
        %2792 = vmatprep.subr.bf16.mxu0 0
        %2793 = vmatpush1.bf16.msra.mxu0 %v2772
        %2794 = vmatprep.subr.bf16.mxu0 0
        %2795 = vmatpush1.bf16.msra.mxu0 %v2773
        %2796 = vmatprep.subr.bf16.mxu0 0
        %2797 = vmatpush1.bf16.msra.mxu0 %v2774
        %2798 = vmatprep.subr.bf16.mxu0 0
        %2799 = vmatpush1.bf16.msra.mxu0 %v2775
        %2800 = vmatprep.subr.bf16.mxu0 0
        %2801 = vmatpush1.bf16.msra.mxu0 0
        %2802 = vmatprep.subr.bf16.mxu0 0
        %2803 = vmatpush1.bf16.msra.mxu0 0
        %2804 = vmatprep.subr.bf16.mxu0 0
        %2805 = vmatpush1.bf16.msra.mxu0 0
        %2806 = vmatprep.subr.bf16.mxu0 0
        %2807 = vmatpush1.bf16.msra.mxu0 0
        %2808 = vmatprep.subr.bf16.mxu0 0
        %2809 = vmatpush1.bf16.msra.mxu0 0
        %2810 = vmatprep.subr.bf16.mxu0 0
        %2811 = vmatpush1.bf16.msra.mxu0 0
        %2812 = vmatprep.subr.bf16.mxu0 0
        %2813 = vmatpush1.bf16.msra.mxu0 0
        %2814 = vmatprep.subr.bf16.mxu0 0
        %2815 = vmatpush1.bf16.msra.mxu0 0
        %2816 = vmatprep.mubr.bf16.mxu0 0
        %2817 = vmatmul.mubr.bf16.gmra.mrb[0].mxu0 %v2610
        %v2818 = vpop.f32.mrb[0].mxu0
        %v2819 = vadd.f32 %v2731, %v2818
        %v2820 = vpop.f32.mrb[0].mxu0
        %v2821 = vpop.f32.mrb[0].mxu0
        %v2822 = vpop.f32.mrb[0].mxu0
        %2823 = vdwg.mxu0
        %v2824 = vrot.slane %v2606, 7
        %v2826 = vsel %vm1389, 0, %v2824
        %v2828 = vld [vmem:[#allocation2 + $0x440] sm:$0xf]
        %v2829 = vld [vmem:[#allocation2 + $0x444] sm:$0xf]
        %v2830 = vld [vmem:[#allocation2 + $0x448] sm:$0xf]
        %v2831 = vld [vmem:[#allocation2 + $0x44c] sm:$0xf]
        %v2832 = vld [vmem:[#allocation2 + $0x450] sm:$0xf]
        %v2833 = vld [vmem:[#allocation2 + $0x454] sm:$0xf]
        %v2834 = vld [vmem:[#allocation2 + $0x458] sm:$0xf]
        %v2835 = vld [vmem:[#allocation2 + $0x45c] sm:$0xf]
        %v2836 = vld [vmem:[#allocation2 + $0x460] sm:$0xf]
        %v2837 = vld [vmem:[#allocation2 + $0x464] sm:$0xf]
        %v2838 = vld [vmem:[#allocation2 + $0x468] sm:$0xf]
        %v2839 = vld [vmem:[#allocation2 + $0x46c] sm:$0xf]
        %v2840 = vld [vmem:[#allocation2 + $0x470] sm:$0xf]
        %v2841 = vld [vmem:[#allocation2 + $0x474] sm:$0xf]
        %v2842 = vld [vmem:[#allocation2 + $0x478] sm:$0xf]
        %v2843 = vld [vmem:[#allocation2 + $0x47c] sm:$0xf]
        %v2860 = vunpack.c.l.b16 %v2828
        %v2861 = vunpack.c.l.b16 %v2829
        %v2862 = vunpack.c.l.b16 %v2830
        %v2863 = vunpack.c.l.b16 %v2831
        %v2864 = vunpack.c.l.b16 %v2832
        %v2865 = vunpack.c.l.b16 %v2833
        %v2866 = vunpack.c.l.b16 %v2834
        %v2867 = vunpack.c.l.b16 %v2835
        %v2868 = vunpack.c.l.b16 %v2836
        %v2869 = vunpack.c.l.b16 %v2837
        %v2870 = vunpack.c.l.b16 %v2838
        %v2871 = vunpack.c.l.b16 %v2839
        %v2872 = vunpack.c.l.b16 %v2840
        %v2873 = vunpack.c.l.b16 %v2841
        %v2874 = vunpack.c.l.b16 %v2842
        %v2875 = vunpack.c.l.b16 %v2843
        %v2876 = vpack.c.b16 %v2861, %v2860
        %v2877 = vpack.c.b16 %v2863, %v2862
        %v2878 = vpack.c.b16 %v2865, %v2864
        %v2879 = vpack.c.b16 %v2867, %v2866
        %v2880 = vpack.c.b16 %v2869, %v2868
        %v2881 = vpack.c.b16 %v2871, %v2870
        %v2882 = vpack.c.b16 %v2873, %v2872
        %v2883 = vpack.c.b16 %v2875, %v2874
        %2892 = vmatprep.subr.bf16.mxu0 0
        %2893 = vmatpush1.bf16.msra.mxu0 %v2876
        %2894 = vmatprep.subr.bf16.mxu0 0
        %2895 = vmatpush1.bf16.msra.mxu0 %v2877
        %2896 = vmatprep.subr.bf16.mxu0 0
        %2897 = vmatpush1.bf16.msra.mxu0 %v2878
        %2898 = vmatprep.subr.bf16.mxu0 0
        %2899 = vmatpush1.bf16.msra.mxu0 %v2879
        %2900 = vmatprep.subr.bf16.mxu0 0
        %2901 = vmatpush1.bf16.msra.mxu0 %v2880
        %2902 = vmatprep.subr.bf16.mxu0 0
        %2903 = vmatpush1.bf16.msra.mxu0 %v2881
        %2904 = vmatprep.subr.bf16.mxu0 0
        %2905 = vmatpush1.bf16.msra.mxu0 %v2882
        %2906 = vmatprep.subr.bf16.mxu0 0
        %2907 = vmatpush1.bf16.msra.mxu0 %v2883
        %2908 = vmatprep.subr.bf16.mxu0 0
        %2909 = vmatpush1.bf16.msra.mxu0 0
        %2910 = vmatprep.subr.bf16.mxu0 0
        %2911 = vmatpush1.bf16.msra.mxu0 0
        %2912 = vmatprep.subr.bf16.mxu0 0
        %2913 = vmatpush1.bf16.msra.mxu0 0
        %2914 = vmatprep.subr.bf16.mxu0 0
        %2915 = vmatpush1.bf16.msra.mxu0 0
        %2916 = vmatprep.subr.bf16.mxu0 0
        %2917 = vmatpush1.bf16.msra.mxu0 0
        %2918 = vmatprep.subr.bf16.mxu0 0
        %2919 = vmatpush1.bf16.msra.mxu0 0
        %2920 = vmatprep.subr.bf16.mxu0 0
        %2921 = vmatpush1.bf16.msra.mxu0 0
        %2922 = vmatprep.subr.bf16.mxu0 0
        %2923 = vmatpush1.bf16.msra.mxu0 0
        %2924 = vmatprep.mubr.bf16.mxu0 0
        %2925 = vmatmul.mubr.bf16.gmra.mrb[0].mxu0 %v2826
        %v2926 = vpop.f32.mrb[0].mxu0
        %v2927 = vadd.f32 0.0, %v2926
        %v2928 = vpop.f32.mrb[0].mxu0
        %v2929 = vpop.f32.mrb[0].mxu0
        %v2930 = vpop.f32.mrb[0].mxu0
        %2931 = vdwg.mxu0
        %v2932 = vadd.f32 %v2819, %v2927
        %v2933 = vld [vmem:[#allocation2 + $0x480] sm:$0xf]
        %v2934 = vld [vmem:[#allocation2 + $0x484] sm:$0xf]
        %v2935 = vld [vmem:[#allocation2 + $0x488] sm:$0xf]
        %v2936 = vld [vmem:[#allocation2 + $0x48c] sm:$0xf]
        %v2937 = vld [vmem:[#allocation2 + $0x490] sm:$0xf]
        %v2938 = vld [vmem:[#allocation2 + $0x494] sm:$0xf]
        %v2939 = vld [vmem:[#allocation2 + $0x498] sm:$0xf]
        %v2940 = vld [vmem:[#allocation2 + $0x49c] sm:$0xf]
        %v2941 = vld [vmem:[#allocation2 + $0x4a0] sm:$0xf]
        %v2942 = vld [vmem:[#allocation2 + $0x4a4] sm:$0xf]
        %v2943 = vld [vmem:[#allocation2 + $0x4a8] sm:$0xf]
        %v2944 = vld [vmem:[#allocation2 + $0x4ac] sm:$0xf]
        %v2945 = vld [vmem:[#allocation2 + $0x4b0] sm:$0xf]
        %v2946 = vld [vmem:[#allocation2 + $0x4b4] sm:$0xf]
        %v2947 = vld [vmem:[#allocation2 + $0x4b8] sm:$0xf]
        %v2948 = vld [vmem:[#allocation2 + $0x4bc] sm:$0xf]
        %v2965 = vunpack.c.l.b16 %v2933
        %v2966 = vunpack.c.l.b16 %v2934
        %v2967 = vunpack.c.l.b16 %v2935
        %v2968 = vunpack.c.l.b16 %v2936
        %v2969 = vunpack.c.l.b16 %v2937
        %v2970 = vunpack.c.l.b16 %v2938
        %v2971 = vunpack.c.l.b16 %v2939
        %v2972 = vunpack.c.l.b16 %v2940
        %v2973 = vunpack.c.l.b16 %v2941
        %v2974 = vunpack.c.l.b16 %v2942
        %v2975 = vunpack.c.l.b16 %v2943
        %v2976 = vunpack.c.l.b16 %v2944
        %v2977 = vunpack.c.l.b16 %v2945
        %v2978 = vunpack.c.l.b16 %v2946
        %v2979 = vunpack.c.l.b16 %v2947
        %v2980 = vunpack.c.l.b16 %v2948
        %v2981 = vpack.c.b16 %v2966, %v2965
        %v2982 = vpack.c.b16 %v2968, %v2967
        %v2983 = vpack.c.b16 %v2970, %v2969
        %v2984 = vpack.c.b16 %v2972, %v2971
        %v2985 = vpack.c.b16 %v2974, %v2973
        %v2986 = vpack.c.b16 %v2976, %v2975
        %v2987 = vpack.c.b16 %v2978, %v2977
        %v2988 = vpack.c.b16 %v2980, %v2979
        %2997 = vmatprep.subr.bf16.mxu0 0
        %2998 = vmatpush1.bf16.msra.mxu0 %v2981
        %2999 = vmatprep.subr.bf16.mxu0 0
        %3000 = vmatpush1.bf16.msra.mxu0 %v2982
        %3001 = vmatprep.subr.bf16.mxu0 0
        %3002 = vmatpush1.bf16.msra.mxu0 %v2983
        %3003 = vmatprep.subr.bf16.mxu0 0
        %3004 = vmatpush1.bf16.msra.mxu0 %v2984
        %3005 = vmatprep.subr.bf16.mxu0 0
        %3006 = vmatpush1.bf16.msra.mxu0 %v2985
        %3007 = vmatprep.subr.bf16.mxu0 0
        %3008 = vmatpush1.bf16.msra.mxu0 %v2986
        %3009 = vmatprep.subr.bf16.mxu0 0
        %3010 = vmatpush1.bf16.msra.mxu0 %v2987
        %3011 = vmatprep.subr.bf16.mxu0 0
        %3012 = vmatpush1.bf16.msra.mxu0 %v2988
        %3013 = vmatprep.subr.bf16.mxu0 0
        %3014 = vmatpush1.bf16.msra.mxu0 0
        %3015 = vmatprep.subr.bf16.mxu0 0
        %3016 = vmatpush1.bf16.msra.mxu0 0
        %3017 = vmatprep.subr.bf16.mxu0 0
        %3018 = vmatpush1.bf16.msra.mxu0 0
        %3019 = vmatprep.subr.bf16.mxu0 0
        %3020 = vmatpush1.bf16.msra.mxu0 0
        %3021 = vmatprep.subr.bf16.mxu0 0
        %3022 = vmatpush1.bf16.msra.mxu0 0
        %3023 = vmatprep.subr.bf16.mxu0 0
        %3024 = vmatpush1.bf16.msra.mxu0 0
        %3025 = vmatprep.subr.bf16.mxu0 0
        %3026 = vmatpush1.bf16.msra.mxu0 0
        %3027 = vmatprep.subr.bf16.mxu0 0
        %3028 = vmatpush1.bf16.msra.mxu0 0
        %3029 = vmatprep.mubr.bf16.mxu0 0
        %3030 = vmatmul.mubr.bf16.gmra.mrb[0].mxu0 %v2606
        %v3031 = vpop.f32.mrb[0].mxu0
        %v3032 = vadd.f32 0.0, %v3031
        %v3033 = vpop.f32.mrb[0].mxu0
        %v3034 = vpop.f32.mrb[0].mxu0
        %v3035 = vpop.f32.mrb[0].mxu0
        %3036 = vdwg.mxu0
        %v3037 = vadd.f32 %v2932, %v3032
        %v3038 = vld [vmem:[#allocation5 + $0x4] sm:$0x1]
        %v3039 = vlaneseq
        %v3040 = vshrl.u32 %v3039, 7
        %v3041 = vsub.s32 0, %v3040
        %v3042 = vrot.slane %v3038, %v3041
        %v3043 = vadd.f32 %v3037, %v3042
        %v3044 = vmax.f32 %v3043, 0.0
        %v3045 = vpack.c.bf16 %v3044, %v3044
        %v3047 = vrot.slane %v3045, 5
        %v3049 = vsel %vm939, 0, %v3047
        %v3051 = vld [vmem:[#allocation2 + $0x4c0] sm:$0xf]
        %v3052 = vld [vmem:[#allocation2 + $0x4c4] sm:$0xf]
        %v3053 = vld [vmem:[#allocation2 + $0x4c8] sm:$0xf]
        %v3054 = vld [vmem:[#allocation2 + $0x4cc] sm:$0xf]
        %v3055 = vld [vmem:[#allocation2 + $0x4d0] sm:$0xf]
        %v3056 = vld [vmem:[#allocation2 + $0x4d4] sm:$0xf]
        %v3057 = vld [vmem:[#allocation2 + $0x4d8] sm:$0xf]
        %v3058 = vld [vmem:[#allocation2 + $0x4dc] sm:$0xf]
        %v3059 = vld [vmem:[#allocation2 + $0x4e0] sm:$0xf]
        %v3060 = vld [vmem:[#allocation2 + $0x4e4] sm:$0xf]
        %v3061 = vld [vmem:[#allocation2 + $0x4e8] sm:$0xf]
        %v3062 = vld [vmem:[#allocation2 + $0x4ec] sm:$0xf]
        %v3063 = vld [vmem:[#allocation2 + $0x4f0] sm:$0xf]
        %v3064 = vld [vmem:[#allocation2 + $0x4f4] sm:$0xf]
        %v3065 = vld [vmem:[#allocation2 + $0x4f8] sm:$0xf]
        %v3066 = vld [vmem:[#allocation2 + $0x4fc] sm:$0xf]
        %v3067 = vrot.slane %v3045, 6
        %v3069 = vsel %vm1166, 0, %v3067
        %v3071 = vld [vmem:[#allocation2 + $0x500] sm:$0xf]
        %v3072 = vld [vmem:[#allocation2 + $0x504] sm:$0xf]
        %v3073 = vld [vmem:[#allocation2 + $0x508] sm:$0xf]
        %v3074 = vld [vmem:[#allocation2 + $0x50c] sm:$0xf]
        %v3075 = vld [vmem:[#allocation2 + $0x510] sm:$0xf]
        %v3076 = vld [vmem:[#allocation2 + $0x514] sm:$0xf]
        %v3077 = vld [vmem:[#allocation2 + $0x518] sm:$0xf]
        %v3078 = vld [vmem:[#allocation2 + $0x51c] sm:$0xf]
        %v3079 = vld [vmem:[#allocation2 + $0x520] sm:$0xf]
        %v3080 = vld [vmem:[#allocation2 + $0x524] sm:$0xf]
        %v3081 = vld [vmem:[#allocation2 + $0x528] sm:$0xf]
        %v3082 = vld [vmem:[#allocation2 + $0x52c] sm:$0xf]
        %v3083 = vld [vmem:[#allocation2 + $0x530] sm:$0xf]
        %v3084 = vld [vmem:[#allocation2 + $0x534] sm:$0xf]
        %v3085 = vld [vmem:[#allocation2 + $0x538] sm:$0xf]
        %v3086 = vld [vmem:[#allocation2 + $0x53c] sm:$0xf]
        %v3103 = vunpack.c.l.b16 %v3071
        %v3104 = vunpack.c.l.b16 %v3072
        %v3105 = vunpack.c.l.b16 %v3073
        %v3106 = vunpack.c.l.b16 %v3074
        %v3107 = vunpack.c.l.b16 %v3075
        %v3108 = vunpack.c.l.b16 %v3076
        %v3109 = vunpack.c.l.b16 %v3077
        %v3110 = vunpack.c.l.b16 %v3078
        %v3111 = vunpack.c.l.b16 %v3079
        %v3112 = vunpack.c.l.b16 %v3080
        %v3113 = vunpack.c.l.b16 %v3081
        %v3114 = vunpack.c.l.b16 %v3082
        %v3115 = vunpack.c.l.b16 %v3083
        %v3116 = vunpack.c.l.b16 %v3084
        %v3117 = vunpack.c.l.b16 %v3085
        %v3118 = vunpack.c.l.b16 %v3086
        %v3119 = vpack.c.b16 %v3104, %v3103
        %v3120 = vpack.c.b16 %v3106, %v3105
        %v3121 = vpack.c.b16 %v3108, %v3107
        %v3122 = vpack.c.b16 %v3110, %v3109
        %v3123 = vpack.c.b16 %v3112, %v3111
        %v3124 = vpack.c.b16 %v3114, %v3113
        %v3125 = vpack.c.b16 %v3116, %v3115
        %v3126 = vpack.c.b16 %v3118, %v3117
        %3135 = vmatprep.subr.bf16.mxu0 0
        %3136 = vmatpush1.bf16.msra.mxu0 %v3119
        %3137 = vmatprep.subr.bf16.mxu0 0
        %3138 = vmatpush1.bf16.msra.mxu0 %v3120
        %3139 = vmatprep.subr.bf16.mxu0 0
        %3140 = vmatpush1.bf16.msra.mxu0 %v3121
        %3141 = vmatprep.subr.bf16.mxu0 0
        %3142 = vmatpush1.bf16.msra.mxu0 %v3122
        %3143 = vmatprep.subr.bf16.mxu0 0
        %3144 = vmatpush1.bf16.msra.mxu0 %v3123
        %3145 = vmatprep.subr.bf16.mxu0 0
        %3146 = vmatpush1.bf16.msra.mxu0 %v3124
        %3147 = vmatprep.subr.bf16.mxu0 0
        %3148 = vmatpush1.bf16.msra.mxu0 %v3125
        %3149 = vmatprep.subr.bf16.mxu0 0
        %3150 = vmatpush1.bf16.msra.mxu0 %v3126
        %3151 = vmatprep.subr.bf16.mxu0 0
        %3152 = vmatpush1.bf16.msra.mxu0 0
        %3153 = vmatprep.subr.bf16.mxu0 0
        %3154 = vmatpush1.bf16.msra.mxu0 0
        %3155 = vmatprep.subr.bf16.mxu0 0
        %3156 = vmatpush1.bf16.msra.mxu0 0
        %3157 = vmatprep.subr.bf16.mxu0 0
        %3158 = vmatpush1.bf16.msra.mxu0 0
        %3159 = vmatprep.subr.bf16.mxu0 0
        %3160 = vmatpush1.bf16.msra.mxu0 0
        %3161 = vmatprep.subr.bf16.mxu0 0
        %3162 = vmatpush1.bf16.msra.mxu0 0
        %3163 = vmatprep.subr.bf16.mxu0 0
        %3164 = vmatpush1.bf16.msra.mxu0 0
        %3165 = vmatprep.subr.bf16.mxu0 0
        %3166 = vmatpush1.bf16.msra.mxu0 0
        %3167 = vmatprep.mubr.bf16.mxu0 0
        %3168 = vmatmul.mubr.bf16.gmra.mrb[0].mxu0 %v3069
        %v3169 = vpop.f32.mrb[0].mxu0
        %v3170 = vadd.f32 0.0, %v3169
        %v3171 = vpop.f32.mrb[0].mxu0
        %v3172 = vpop.f32.mrb[0].mxu0
        %v3173 = vpop.f32.mrb[0].mxu0
        %3174 = vdwg.mxu0
        %v3191 = vunpack.c.l.b16 %v3051
        %v3192 = vunpack.c.l.b16 %v3052
        %v3193 = vunpack.c.l.b16 %v3053
        %v3194 = vunpack.c.l.b16 %v3054
        %v3195 = vunpack.c.l.b16 %v3055
        %v3196 = vunpack.c.l.b16 %v3056
        %v3197 = vunpack.c.l.b16 %v3057
        %v3198 = vunpack.c.l.b16 %v3058
        %v3199 = vunpack.c.l.b16 %v3059
        %v3200 = vunpack.c.l.b16 %v3060
        %v3201 = vunpack.c.l.b16 %v3061
        %v3202 = vunpack.c.l.b16 %v3062
        %v3203 = vunpack.c.l.b16 %v3063
        %v3204 = vunpack.c.l.b16 %v3064
        %v3205 = vunpack.c.l.b16 %v3065
        %v3206 = vunpack.c.l.b16 %v3066
        %v3207 = vpack.c.b16 %v3192, %v3191
        %v3208 = vpack.c.b16 %v3194, %v3193
        %v3209 = vpack.c.b16 %v3196, %v3195
        %v3210 = vpack.c.b16 %v3198, %v3197
        %v3211 = vpack.c.b16 %v3200, %v3199
        %v3212 = vpack.c.b16 %v3202, %v3201
        %v3213 = vpack.c.b16 %v3204, %v3203
        %v3214 = vpack.c.b16 %v3206, %v3205
        %3223 = vmatprep.subr.bf16.mxu0 0
        %3224 = vmatpush1.bf16.msra.mxu0 %v3207
        %3225 = vmatprep.subr.bf16.mxu0 0
        %3226 = vmatpush1.bf16.msra.mxu0 %v3208
        %3227 = vmatprep.subr.bf16.mxu0 0
        %3228 = vmatpush1.bf16.msra.mxu0 %v3209
        %3229 = vmatprep.subr.bf16.mxu0 0
        %3230 = vmatpush1.bf16.msra.mxu0 %v3210
        %3231 = vmatprep.subr.bf16.mxu0 0
        %3232 = vmatpush1.bf16.msra.mxu0 %v3211
        %3233 = vmatprep.subr.bf16.mxu0 0
        %3234 = vmatpush1.bf16.msra.mxu0 %v3212
        %3235 = vmatprep.subr.bf16.mxu0 0
        %3236 = vmatpush1.bf16.msra.mxu0 %v3213
        %3237 = vmatprep.subr.bf16.mxu0 0
        %3238 = vmatpush1.bf16.msra.mxu0 %v3214
        %3239 = vmatprep.subr.bf16.mxu0 0
        %3240 = vmatpush1.bf16.msra.mxu0 0
        %3241 = vmatprep.subr.bf16.mxu0 0
        %3242 = vmatpush1.bf16.msra.mxu0 0
        %3243 = vmatprep.subr.bf16.mxu0 0
        %3244 = vmatpush1.bf16.msra.mxu0 0
        %3245 = vmatprep.subr.bf16.mxu0 0
        %3246 = vmatpush1.bf16.msra.mxu0 0
        %3247 = vmatprep.subr.bf16.mxu0 0
        %3248 = vmatpush1.bf16.msra.mxu0 0
        %3249 = vmatprep.subr.bf16.mxu0 0
        %3250 = vmatpush1.bf16.msra.mxu0 0
        %3251 = vmatprep.subr.bf16.mxu0 0
        %3252 = vmatpush1.bf16.msra.mxu0 0
        %3253 = vmatprep.subr.bf16.mxu0 0
        %3254 = vmatpush1.bf16.msra.mxu0 0
        %3255 = vmatprep.mubr.bf16.mxu0 0
        %3256 = vmatmul.mubr.bf16.gmra.mrb[0].mxu0 %v3049
        %v3257 = vpop.f32.mrb[0].mxu0
        %v3258 = vadd.f32 %v3170, %v3257
        %v3259 = vpop.f32.mrb[0].mxu0
        %v3260 = vpop.f32.mrb[0].mxu0
        %v3261 = vpop.f32.mrb[0].mxu0
        %3262 = vdwg.mxu0
        %v3263 = vrot.slane %v3045, 7
        %v3265 = vsel %vm1389, 0, %v3263
        %v3267 = vld [vmem:[#allocation2 + $0x540] sm:$0xf]
        %v3268 = vld [vmem:[#allocation2 + $0x544] sm:$0xf]
        %v3269 = vld [vmem:[#allocation2 + $0x548] sm:$0xf]
        %v3270 = vld [vmem:[#allocation2 + $0x54c] sm:$0xf]
        %v3271 = vld [vmem:[#allocation2 + $0x550] sm:$0xf]
        %v3272 = vld [vmem:[#allocation2 + $0x554] sm:$0xf]
        %v3273 = vld [vmem:[#allocation2 + $0x558] sm:$0xf]
        %v3274 = vld [vmem:[#allocation2 + $0x55c] sm:$0xf]
        %v3275 = vld [vmem:[#allocation2 + $0x560] sm:$0xf]
        %v3276 = vld [vmem:[#allocation2 + $0x564] sm:$0xf]
        %v3277 = vld [vmem:[#allocation2 + $0x568] sm:$0xf]
        %v3278 = vld [vmem:[#allocation2 + $0x56c] sm:$0xf]
        %v3279 = vld [vmem:[#allocation2 + $0x570] sm:$0xf]
        %v3280 = vld [vmem:[#allocation2 + $0x574] sm:$0xf]
        %v3281 = vld [vmem:[#allocation2 + $0x578] sm:$0xf]
        %v3282 = vld [vmem:[#allocation2 + $0x57c] sm:$0xf]
        %v3299 = vunpack.c.l.b16 %v3267
        %v3300 = vunpack.c.l.b16 %v3268
        %v3301 = vunpack.c.l.b16 %v3269
        %v3302 = vunpack.c.l.b16 %v3270
        %v3303 = vunpack.c.l.b16 %v3271
        %v3304 = vunpack.c.l.b16 %v3272
        %v3305 = vunpack.c.l.b16 %v3273
        %v3306 = vunpack.c.l.b16 %v3274
        %v3307 = vunpack.c.l.b16 %v3275
        %v3308 = vunpack.c.l.b16 %v3276
        %v3309 = vunpack.c.l.b16 %v3277
        %v3310 = vunpack.c.l.b16 %v3278
        %v3311 = vunpack.c.l.b16 %v3279
        %v3312 = vunpack.c.l.b16 %v3280
        %v3313 = vunpack.c.l.b16 %v3281
        %v3314 = vunpack.c.l.b16 %v3282
        %v3315 = vpack.c.b16 %v3300, %v3299
        %v3316 = vpack.c.b16 %v3302, %v3301
        %v3317 = vpack.c.b16 %v3304, %v3303
        %v3318 = vpack.c.b16 %v3306, %v3305
        %v3319 = vpack.c.b16 %v3308, %v3307
        %v3320 = vpack.c.b16 %v3310, %v3309
        %v3321 = vpack.c.b16 %v3312, %v3311
        %v3322 = vpack.c.b16 %v3314, %v3313
        %3331 = vmatprep.subr.bf16.mxu0 0
        %3332 = vmatpush1.bf16.msra.mxu0 %v3315
        %3333 = vmatprep.subr.bf16.mxu0 0
        %3334 = vmatpush1.bf16.msra.mxu0 %v3316
        %3335 = vmatprep.subr.bf16.mxu0 0
        %3336 = vmatpush1.bf16.msra.mxu0 %v3317
        %3337 = vmatprep.subr.bf16.mxu0 0
        %3338 = vmatpush1.bf16.msra.mxu0 %v3318
        %3339 = vmatprep.subr.bf16.mxu0 0
        %3340 = vmatpush1.bf16.msra.mxu0 %v3319
        %3341 = vmatprep.subr.bf16.mxu0 0
        %3342 = vmatpush1.bf16.msra.mxu0 %v3320
        %3343 = vmatprep.subr.bf16.mxu0 0
        %3344 = vmatpush1.bf16.msra.mxu0 %v3321
        %3345 = vmatprep.subr.bf16.mxu0 0
        %3346 = vmatpush1.bf16.msra.mxu0 %v3322
        %3347 = vmatprep.subr.bf16.mxu0 0
        %3348 = vmatpush1.bf16.msra.mxu0 0
        %3349 = vmatprep.subr.bf16.mxu0 0
        %3350 = vmatpush1.bf16.msra.mxu0 0
        %3351 = vmatprep.subr.bf16.mxu0 0
        %3352 = vmatpush1.bf16.msra.mxu0 0
        %3353 = vmatprep.subr.bf16.mxu0 0
        %3354 = vmatpush1.bf16.msra.mxu0 0
        %3355 = vmatprep.subr.bf16.mxu0 0
        %3356 = vmatpush1.bf16.msra.mxu0 0
        %3357 = vmatprep.subr.bf16.mxu0 0
        %3358 = vmatpush1.bf16.msra.mxu0 0
        %3359 = vmatprep.subr.bf16.mxu0 0
        %3360 = vmatpush1.bf16.msra.mxu0 0
        %3361 = vmatprep.subr.bf16.mxu0 0
        %3362 = vmatpush1.bf16.msra.mxu0 0
        %3363 = vmatprep.mubr.bf16.mxu0 0
        %3364 = vmatmul.mubr.bf16.gmra.mrb[0].mxu0 %v3265
        %v3365 = vpop.f32.mrb[0].mxu0
        %v3366 = vadd.f32 0.0, %v3365
        %v3367 = vpop.f32.mrb[0].mxu0
        %v3368 = vpop.f32.mrb[0].mxu0
        %v3369 = vpop.f32.mrb[0].mxu0
        %3370 = vdwg.mxu0
        %v3371 = vadd.f32 %v3258, %v3366
        %v3372 = vld [vmem:[#allocation2 + $0x580] sm:$0xf]
        %v3373 = vld [vmem:[#allocation2 + $0x584] sm:$0xf]
        %v3374 = vld [vmem:[#allocation2 + $0x588] sm:$0xf]
        %v3375 = vld [vmem:[#allocation2 + $0x58c] sm:$0xf]
        %v3376 = vld [vmem:[#allocation2 + $0x590] sm:$0xf]
        %v3377 = vld [vmem:[#allocation2 + $0x594] sm:$0xf]
        %v3378 = vld [vmem:[#allocation2 + $0x598] sm:$0xf]
        %v3379 = vld [vmem:[#allocation2 + $0x59c] sm:$0xf]
        %v3380 = vld [vmem:[#allocation2 + $0x5a0] sm:$0xf]
        %v3381 = vld [vmem:[#allocation2 + $0x5a4] sm:$0xf]
        %v3382 = vld [vmem:[#allocation2 + $0x5a8] sm:$0xf]
        %v3383 = vld [vmem:[#allocation2 + $0x5ac] sm:$0xf]
        %v3384 = vld [vmem:[#allocation2 + $0x5b0] sm:$0xf]
        %v3385 = vld [vmem:[#allocation2 + $0x5b4] sm:$0xf]
        %v3386 = vld [vmem:[#allocation2 + $0x5b8] sm:$0xf]
        %v3387 = vld [vmem:[#allocation2 + $0x5bc] sm:$0xf]
        %v3404 = vunpack.c.l.b16 %v3372
        %v3405 = vunpack.c.l.b16 %v3373
        %v3406 = vunpack.c.l.b16 %v3374
        %v3407 = vunpack.c.l.b16 %v3375
        %v3408 = vunpack.c.l.b16 %v3376
        %v3409 = vunpack.c.l.b16 %v3377
        %v3410 = vunpack.c.l.b16 %v3378
        %v3411 = vunpack.c.l.b16 %v3379
        %v3412 = vunpack.c.l.b16 %v3380
        %v3413 = vunpack.c.l.b16 %v3381
        %v3414 = vunpack.c.l.b16 %v3382
        %v3415 = vunpack.c.l.b16 %v3383
        %v3416 = vunpack.c.l.b16 %v3384
        %v3417 = vunpack.c.l.b16 %v3385
        %v3418 = vunpack.c.l.b16 %v3386
        %v3419 = vunpack.c.l.b16 %v3387
        %v3420 = vpack.c.b16 %v3405, %v3404
        %v3421 = vpack.c.b16 %v3407, %v3406
        %v3422 = vpack.c.b16 %v3409, %v3408
        %v3423 = vpack.c.b16 %v3411, %v3410
        %v3424 = vpack.c.b16 %v3413, %v3412
        %v3425 = vpack.c.b16 %v3415, %v3414
        %v3426 = vpack.c.b16 %v3417, %v3416
        %v3427 = vpack.c.b16 %v3419, %v3418
        %3436 = vmatprep.subr.bf16.mxu0 0
        %3437 = vmatpush1.bf16.msra.mxu0 %v3420
        %3438 = vmatprep.subr.bf16.mxu0 0
        %3439 = vmatpush1.bf16.msra.mxu0 %v3421
        %3440 = vmatprep.subr.bf16.mxu0 0
        %3441 = vmatpush1.bf16.msra.mxu0 %v3422
        %3442 = vmatprep.subr.bf16.mxu0 0
        %3443 = vmatpush1.bf16.msra.mxu0 %v3423
        %3444 = vmatprep.subr.bf16.mxu0 0
        %3445 = vmatpush1.bf16.msra.mxu0 %v3424
        %3446 = vmatprep.subr.bf16.mxu0 0
        %3447 = vmatpush1.bf16.msra.mxu0 %v3425
        %3448 = vmatprep.subr.bf16.mxu0 0
        %3449 = vmatpush1.bf16.msra.mxu0 %v3426
        %3450 = vmatprep.subr.bf16.mxu0 0
        %3451 = vmatpush1.bf16.msra.mxu0 %v3427
        %3452 = vmatprep.subr.bf16.mxu0 0
        %3453 = vmatpush1.bf16.msra.mxu0 0
        %3454 = vmatprep.subr.bf16.mxu0 0
        %3455 = vmatpush1.bf16.msra.mxu0 0
        %3456 = vmatprep.subr.bf16.mxu0 0
        %3457 = vmatpush1.bf16.msra.mxu0 0
        %3458 = vmatprep.subr.bf16.mxu0 0
        %3459 = vmatpush1.bf16.msra.mxu0 0
        %3460 = vmatprep.subr.bf16.mxu0 0
        %3461 = vmatpush1.bf16.msra.mxu0 0
        %3462 = vmatprep.subr.bf16.mxu0 0
        %3463 = vmatpush1.bf16.msra.mxu0 0
        %3464 = vmatprep.subr.bf16.mxu0 0
        %3465 = vmatpush1.bf16.msra.mxu0 0
        %3466 = vmatprep.subr.bf16.mxu0 0
        %3467 = vmatpush1.bf16.msra.mxu0 0
        %3468 = vmatprep.mubr.bf16.mxu0 0
        %3469 = vmatmul.mubr.bf16.gmra.mrb[0].mxu0 %v3045
        %v3470 = vpop.f32.mrb[0].mxu0
        %v3471 = vadd.f32 0.0, %v3470
        %v3472 = vpop.f32.mrb[0].mxu0
        %v3473 = vpop.f32.mrb[0].mxu0
        %v3474 = vpop.f32.mrb[0].mxu0
        %3475 = vdwg.mxu0
        %v3476 = vadd.f32 %v3371, %v3471
        %v3477 = vld [vmem:[#allocation5 + $0x5] sm:$0x1]
        %v3478 = vlaneseq
        %v3479 = vshrl.u32 %v3478, 7
        %v3480 = vsub.s32 0, %v3479
        %v3481 = vrot.slane %v3477, %v3480
        %v3482 = vadd.f32 %v3476, %v3481
        %v3483 = vmax.f32 %v3482, 0.0
        %v3484 = vunpack.c.l.bf16 %v2606
        %v3485 = vadd.f32 %v3483, %v3484
        %v3486 = vmax.f32 %v3485, 0.0
        %v3487 = vpack.c.bf16 %v3486, %v3486
        %v3489 = vrot.slane %v3487, 6
        %v3491 = vsel %vm1166, 0, %v3489
        %v3493 = vld [vmem:[#allocation2 + $0x5c0] sm:$0xf]
        %v3494 = vld [vmem:[#allocation2 + $0x5c4] sm:$0xf]
        %v3495 = vld [vmem:[#allocation2 + $0x5c8] sm:$0xf]
        %v3496 = vld [vmem:[#allocation2 + $0x5cc] sm:$0xf]
        %v3497 = vld [vmem:[#allocation2 + $0x5d0] sm:$0xf]
        %v3498 = vld [vmem:[#allocation2 + $0x5d4] sm:$0xf]
        %v3499 = vld [vmem:[#allocation2 + $0x5d8] sm:$0xf]
        %v3500 = vld [vmem:[#allocation2 + $0x5dc] sm:$0xf]
        %v3501 = vld [vmem:[#allocation2 + $0x5e0] sm:$0xf]
        %v3502 = vld [vmem:[#allocation2 + $0x5e4] sm:$0xf]
        %v3503 = vld [vmem:[#allocation2 + $0x5e8] sm:$0xf]
        %v3504 = vld [vmem:[#allocation2 + $0x5ec] sm:$0xf]
        %v3505 = vld [vmem:[#allocation2 + $0x5f0] sm:$0xf]
        %v3506 = vld [vmem:[#allocation2 + $0x5f4] sm:$0xf]
        %v3507 = vld [vmem:[#allocation2 + $0x5f8] sm:$0xf]
        %v3508 = vld [vmem:[#allocation2 + $0x5fc] sm:$0xf]
        %v3509 = vld [vmem:[#allocation2 + $0x600] sm:$0xf]
        %v3510 = vld [vmem:[#allocation2 + $0x604] sm:$0xf]
        %v3511 = vld [vmem:[#allocation2 + $0x608] sm:$0xf]
        %v3512 = vld [vmem:[#allocation2 + $0x60c] sm:$0xf]
        %v3513 = vld [vmem:[#allocation2 + $0x610] sm:$0xf]
        %v3514 = vld [vmem:[#allocation2 + $0x614] sm:$0xf]
        %v3515 = vld [vmem:[#allocation2 + $0x618] sm:$0xf]
        %v3516 = vld [vmem:[#allocation2 + $0x61c] sm:$0xf]
        %v3517 = vld [vmem:[#allocation2 + $0x620] sm:$0xf]
        %v3518 = vld [vmem:[#allocation2 + $0x624] sm:$0xf]
        %v3519 = vld [vmem:[#allocation2 + $0x628] sm:$0xf]
        %v3520 = vld [vmem:[#allocation2 + $0x62c] sm:$0xf]
        %v3521 = vld [vmem:[#allocation2 + $0x630] sm:$0xf]
        %v3522 = vld [vmem:[#allocation2 + $0x634] sm:$0xf]
        %v3523 = vld [vmem:[#allocation2 + $0x638] sm:$0xf]
        %v3524 = vld [vmem:[#allocation2 + $0x63c] sm:$0xf]
        %v3541 = vunpack.c.l.b16 %v3509
        %v3542 = vunpack.c.l.b16 %v3510
        %v3543 = vunpack.c.l.b16 %v3511
        %v3544 = vunpack.c.l.b16 %v3512
        %v3545 = vunpack.c.l.b16 %v3513
        %v3546 = vunpack.c.l.b16 %v3514
        %v3547 = vunpack.c.l.b16 %v3515
        %v3548 = vunpack.c.l.b16 %v3516
        %v3549 = vunpack.c.l.b16 %v3517
        %v3550 = vunpack.c.l.b16 %v3518
        %v3551 = vunpack.c.l.b16 %v3519
        %v3552 = vunpack.c.l.b16 %v3520
        %v3553 = vunpack.c.l.b16 %v3521
        %v3554 = vunpack.c.l.b16 %v3522
        %v3555 = vunpack.c.l.b16 %v3523
        %v3556 = vunpack.c.l.b16 %v3524
        %v3557 = vpack.c.b16 %v3542, %v3541
        %v3558 = vpack.c.b16 %v3544, %v3543
        %v3559 = vpack.c.b16 %v3546, %v3545
        %v3560 = vpack.c.b16 %v3548, %v3547
        %v3561 = vpack.c.b16 %v3550, %v3549
        %v3562 = vpack.c.b16 %v3552, %v3551
        %v3563 = vpack.c.b16 %v3554, %v3553
        %v3564 = vpack.c.b16 %v3556, %v3555
        %3573 = vmatprep.subr.bf16.mxu0 0
        %3574 = vmatpush1.bf16.msra.mxu0 %v3557
        %3575 = vmatprep.subr.bf16.mxu0 0
        %3576 = vmatpush1.bf16.msra.mxu0 %v3558
        %3577 = vmatprep.subr.bf16.mxu0 0
        %3578 = vmatpush1.bf16.msra.mxu0 %v3559
        %3579 = vmatprep.subr.bf16.mxu0 0
        %3580 = vmatpush1.bf16.msra.mxu0 %v3560
        %3581 = vmatprep.subr.bf16.mxu0 0
        %3582 = vmatpush1.bf16.msra.mxu0 %v3561
        %3583 = vmatprep.subr.bf16.mxu0 0
        %3584 = vmatpush1.bf16.msra.mxu0 %v3562
        %3585 = vmatprep.subr.bf16.mxu0 0
        %3586 = vmatpush1.bf16.msra.mxu0 %v3563
        %3587 = vmatprep.subr.bf16.mxu0 0
        %3588 = vmatpush1.bf16.msra.mxu0 %v3564
        %3589 = vmatprep.subr.bf16.mxu0 0
        %3590 = vmatpush1.bf16.msra.mxu0 0
        %3591 = vmatprep.subr.bf16.mxu0 0
        %3592 = vmatpush1.bf16.msra.mxu0 0
        %3593 = vmatprep.subr.bf16.mxu0 0
        %3594 = vmatpush1.bf16.msra.mxu0 0
        %3595 = vmatprep.subr.bf16.mxu0 0
        %3596 = vmatpush1.bf16.msra.mxu0 0
        %3597 = vmatprep.subr.bf16.mxu0 0
        %3598 = vmatpush1.bf16.msra.mxu0 0
        %3599 = vmatprep.subr.bf16.mxu0 0
        %3600 = vmatpush1.bf16.msra.mxu0 0
        %3601 = vmatprep.subr.bf16.mxu0 0
        %3602 = vmatpush1.bf16.msra.mxu0 0
        %3603 = vmatprep.subr.bf16.mxu0 0
        %3604 = vmatpush1.bf16.msra.mxu0 0
        %3605 = vmatprep.mubr.bf16.mxu0 0
        %3606 = vmatmul.mubr.bf16.gmra.mrb[0].mxu0 %v3487
        %v3607 = vpop.f32.mrb[0].mxu0
        %v3608 = vadd.f32 0.0, %v3607
        %v3609 = vpop.f32.mrb[0].mxu0
        %v3610 = vpop.f32.mrb[0].mxu0
        %v3611 = vpop.f32.mrb[0].mxu0
        %3612 = vdwg.mxu0
        %v3629 = vunpack.c.l.b16 %v3493
        %v3630 = vunpack.c.l.b16 %v3494
        %v3631 = vunpack.c.l.b16 %v3495
        %v3632 = vunpack.c.l.b16 %v3496
        %v3633 = vunpack.c.l.b16 %v3497
        %v3634 = vunpack.c.l.b16 %v3498
        %v3635 = vunpack.c.l.b16 %v3499
        %v3636 = vunpack.c.l.b16 %v3500
        %v3637 = vunpack.c.l.b16 %v3501
        %v3638 = vunpack.c.l.b16 %v3502
        %v3639 = vunpack.c.l.b16 %v3503
        %v3640 = vunpack.c.l.b16 %v3504
        %v3641 = vunpack.c.l.b16 %v3505
        %v3642 = vunpack.c.l.b16 %v3506
        %v3643 = vunpack.c.l.b16 %v3507
        %v3644 = vunpack.c.l.b16 %v3508
        %v3645 = vpack.c.b16 %v3630, %v3629
        %v3646 = vpack.c.b16 %v3632, %v3631
        %v3647 = vpack.c.b16 %v3634, %v3633
        %v3648 = vpack.c.b16 %v3636, %v3635
        %v3649 = vpack.c.b16 %v3638, %v3637
        %v3650 = vpack.c.b16 %v3640, %v3639
        %v3651 = vpack.c.b16 %v3642, %v3641
        %v3652 = vpack.c.b16 %v3644, %v3643
        %3661 = vmatprep.subr.bf16.mxu0 0
        %3662 = vmatpush1.bf16.msra.mxu0 %v3645
        %3663 = vmatprep.subr.bf16.mxu0 0
        %3664 = vmatpush1.bf16.msra.mxu0 %v3646
        %3665 = vmatprep.subr.bf16.mxu0 0
        %3666 = vmatpush1.bf16.msra.mxu0 %v3647
        %3667 = vmatprep.subr.bf16.mxu0 0
        %3668 = vmatpush1.bf16.msra.mxu0 %v3648
        %3669 = vmatprep.subr.bf16.mxu0 0
        %3670 = vmatpush1.bf16.msra.mxu0 %v3649
        %3671 = vmatprep.subr.bf16.mxu0 0
        %3672 = vmatpush1.bf16.msra.mxu0 %v3650
        %3673 = vmatprep.subr.bf16.mxu0 0
        %3674 = vmatpush1.bf16.msra.mxu0 %v3651
        %3675 = vmatprep.subr.bf16.mxu0 0
        %3676 = vmatpush1.bf16.msra.mxu0 %v3652
        %3677 = vmatprep.subr.bf16.mxu0 0
        %3678 = vmatpush1.bf16.msra.mxu0 0
        %3679 = vmatprep.subr.bf16.mxu0 0
        %3680 = vmatpush1.bf16.msra.mxu0 0
        %3681 = vmatprep.subr.bf16.mxu0 0
        %3682 = vmatpush1.bf16.msra.mxu0 0
        %3683 = vmatprep.subr.bf16.mxu0 0
        %3684 = vmatpush1.bf16.msra.mxu0 0
        %3685 = vmatprep.subr.bf16.mxu0 0
        %3686 = vmatpush1.bf16.msra.mxu0 0
        %3687 = vmatprep.subr.bf16.mxu0 0
        %3688 = vmatpush1.bf16.msra.mxu0 0
        %3689 = vmatprep.subr.bf16.mxu0 0
        %3690 = vmatpush1.bf16.msra.mxu0 0
        %3691 = vmatprep.subr.bf16.mxu0 0
        %3692 = vmatpush1.bf16.msra.mxu0 0
        %3693 = vmatprep.mubr.bf16.mxu0 0
        %3694 = vmatmul.mubr.bf16.gmra.mrb[0].mxu0 %v3491
        %v3695 = vpop.f32.mrb[0].mxu0
        %v3696 = vadd.f32 %v3608, %v3695
        %v3697 = vpop.f32.mrb[0].mxu0
        %v3698 = vpop.f32.mrb[0].mxu0
        %v3699 = vpop.f32.mrb[0].mxu0
        %3700 = vdwg.mxu0
        %v3701 = vld [vmem:[#allocation5 + $0x6] sm:$0x1]
        %v3702 = vlaneseq
        %v3703 = vshrl.u32 %v3702, 7
        %v3704 = vsub.s32 0, %v3703
        %v3705 = vrot.slane %v3701, %v3704
        %v3706 = vadd.f32 %v3696, %v3705
        %v3707 = vmax.f32 %v3706, 0.0
        %v3708 = vpack.c.bf16 %v3707, %v3707
        %v3710 = vrot.slane %v3708, 6
        %v3712 = vsel %vm1166, 0, %v3710
        %v3714 = vld [vmem:[#allocation2 + $0x640] sm:$0xf]
        %v3715 = vld [vmem:[#allocation2 + $0x644] sm:$0xf]
        %v3716 = vld [vmem:[#allocation2 + $0x648] sm:$0xf]
        %v3717 = vld [vmem:[#allocation2 + $0x64c] sm:$0xf]
        %v3718 = vld [vmem:[#allocation2 + $0x650] sm:$0xf]
        %v3719 = vld [vmem:[#allocation2 + $0x654] sm:$0xf]
        %v3720 = vld [vmem:[#allocation2 + $0x658] sm:$0xf]
        %v3721 = vld [vmem:[#allocation2 + $0x65c] sm:$0xf]
        %v3722 = vld [vmem:[#allocation2 + $0x660] sm:$0xf]
        %v3723 = vld [vmem:[#allocation2 + $0x664] sm:$0xf]
        %v3724 = vld [vmem:[#allocation2 + $0x668] sm:$0xf]
        %v3725 = vld [vmem:[#allocation2 + $0x66c] sm:$0xf]
        %v3726 = vld [vmem:[#allocation2 + $0x670] sm:$0xf]
        %v3727 = vld [vmem:[#allocation2 + $0x674] sm:$0xf]
        %v3728 = vld [vmem:[#allocation2 + $0x678] sm:$0xf]
        %v3729 = vld [vmem:[#allocation2 + $0x67c] sm:$0xf]
        %v3730 = vld [vmem:[#allocation2 + $0x680] sm:$0xf]
        %v3731 = vld [vmem:[#allocation2 + $0x684] sm:$0xf]
        %v3732 = vld [vmem:[#allocation2 + $0x688] sm:$0xf]
        %v3733 = vld [vmem:[#allocation2 + $0x68c] sm:$0xf]
        %v3734 = vld [vmem:[#allocation2 + $0x690] sm:$0xf]
        %v3735 = vld [vmem:[#allocation2 + $0x694] sm:$0xf]
        %v3736 = vld [vmem:[#allocation2 + $0x698] sm:$0xf]
        %v3737 = vld [vmem:[#allocation2 + $0x69c] sm:$0xf]
        %v3738 = vld [vmem:[#allocation2 + $0x6a0] sm:$0xf]
        %v3739 = vld [vmem:[#allocation2 + $0x6a4] sm:$0xf]
        %v3740 = vld [vmem:[#allocation2 + $0x6a8] sm:$0xf]
        %v3741 = vld [vmem:[#allocation2 + $0x6ac] sm:$0xf]
        %v3742 = vld [vmem:[#allocation2 + $0x6b0] sm:$0xf]
        %v3743 = vld [vmem:[#allocation2 + $0x6b4] sm:$0xf]
        %v3744 = vld [vmem:[#allocation2 + $0x6b8] sm:$0xf]
        %v3745 = vld [vmem:[#allocation2 + $0x6bc] sm:$0xf]
        %v3762 = vunpack.c.l.b16 %v3730
        %v3763 = vunpack.c.l.b16 %v3731
        %v3764 = vunpack.c.l.b16 %v3732
        %v3765 = vunpack.c.l.b16 %v3733
        %v3766 = vunpack.c.l.b16 %v3734
        %v3767 = vunpack.c.l.b16 %v3735
        %v3768 = vunpack.c.l.b16 %v3736
        %v3769 = vunpack.c.l.b16 %v3737
        %v3770 = vunpack.c.l.b16 %v3738
        %v3771 = vunpack.c.l.b16 %v3739
        %v3772 = vunpack.c.l.b16 %v3740
        %v3773 = vunpack.c.l.b16 %v3741
        %v3774 = vunpack.c.l.b16 %v3742
        %v3775 = vunpack.c.l.b16 %v3743
        %v3776 = vunpack.c.l.b16 %v3744
        %v3777 = vunpack.c.l.b16 %v3745
        %v3778 = vpack.c.b16 %v3763, %v3762
        %v3779 = vpack.c.b16 %v3765, %v3764
        %v3780 = vpack.c.b16 %v3767, %v3766
        %v3781 = vpack.c.b16 %v3769, %v3768
        %v3782 = vpack.c.b16 %v3771, %v3770
        %v3783 = vpack.c.b16 %v3773, %v3772
        %v3784 = vpack.c.b16 %v3775, %v3774
        %v3785 = vpack.c.b16 %v3777, %v3776
        %3794 = vmatprep.subr.bf16.mxu0 0
        %3795 = vmatpush1.bf16.msra.mxu0 %v3778
        %3796 = vmatprep.subr.bf16.mxu0 0
        %3797 = vmatpush1.bf16.msra.mxu0 %v3779
        %3798 = vmatprep.subr.bf16.mxu0 0
        %3799 = vmatpush1.bf16.msra.mxu0 %v3780
        %3800 = vmatprep.subr.bf16.mxu0 0
        %3801 = vmatpush1.bf16.msra.mxu0 %v3781
        %3802 = vmatprep.subr.bf16.mxu0 0
        %3803 = vmatpush1.bf16.msra.mxu0 %v3782
        %3804 = vmatprep.subr.bf16.mxu0 0
        %3805 = vmatpush1.bf16.msra.mxu0 %v3783
        %3806 = vmatprep.subr.bf16.mxu0 0
        %3807 = vmatpush1.bf16.msra.mxu0 %v3784
        %3808 = vmatprep.subr.bf16.mxu0 0
        %3809 = vmatpush1.bf16.msra.mxu0 %v3785
        %3810 = vmatprep.subr.bf16.mxu0 0
        %3811 = vmatpush1.bf16.msra.mxu0 0
        %3812 = vmatprep.subr.bf16.mxu0 0
        %3813 = vmatpush1.bf16.msra.mxu0 0
        %3814 = vmatprep.subr.bf16.mxu0 0
        %3815 = vmatpush1.bf16.msra.mxu0 0
        %3816 = vmatprep.subr.bf16.mxu0 0
        %3817 = vmatpush1.bf16.msra.mxu0 0
        %3818 = vmatprep.subr.bf16.mxu0 0
        %3819 = vmatpush1.bf16.msra.mxu0 0
        %3820 = vmatprep.subr.bf16.mxu0 0
        %3821 = vmatpush1.bf16.msra.mxu0 0
        %3822 = vmatprep.subr.bf16.mxu0 0
        %3823 = vmatpush1.bf16.msra.mxu0 0
        %3824 = vmatprep.subr.bf16.mxu0 0
        %3825 = vmatpush1.bf16.msra.mxu0 0
        %3826 = vmatprep.mubr.bf16.mxu0 0
        %3827 = vmatmul.mubr.bf16.gmra.mrb[0].mxu0 %v3708
        %v3828 = vpop.f32.mrb[0].mxu0
        %v3829 = vadd.f32 0.0, %v3828
        %v3830 = vpop.f32.mrb[0].mxu0
        %v3831 = vpop.f32.mrb[0].mxu0
        %v3832 = vpop.f32.mrb[0].mxu0
        %3833 = vdwg.mxu0
        %v3850 = vunpack.c.l.b16 %v3714
        %v3851 = vunpack.c.l.b16 %v3715
        %v3852 = vunpack.c.l.b16 %v3716
        %v3853 = vunpack.c.l.b16 %v3717
        %v3854 = vunpack.c.l.b16 %v3718
        %v3855 = vunpack.c.l.b16 %v3719
        %v3856 = vunpack.c.l.b16 %v3720
        %v3857 = vunpack.c.l.b16 %v3721
        %v3858 = vunpack.c.l.b16 %v3722
        %v3859 = vunpack.c.l.b16 %v3723
        %v3860 = vunpack.c.l.b16 %v3724
        %v3861 = vunpack.c.l.b16 %v3725
        %v3862 = vunpack.c.l.b16 %v3726
        %v3863 = vunpack.c.l.b16 %v3727
        %v3864 = vunpack.c.l.b16 %v3728
        %v3865 = vunpack.c.l.b16 %v3729
        %v3866 = vpack.c.b16 %v3851, %v3850
        %v3867 = vpack.c.b16 %v3853, %v3852
        %v3868 = vpack.c.b16 %v3855, %v3854
        %v3869 = vpack.c.b16 %v3857, %v3856
        %v3870 = vpack.c.b16 %v3859, %v3858
        %v3871 = vpack.c.b16 %v3861, %v3860
        %v3872 = vpack.c.b16 %v3863, %v3862
        %v3873 = vpack.c.b16 %v3865, %v3864
        %3882 = vmatprep.subr.bf16.mxu0 0
        %3883 = vmatpush1.bf16.msra.mxu0 %v3866
        %3884 = vmatprep.subr.bf16.mxu0 0
        %3885 = vmatpush1.bf16.msra.mxu0 %v3867
        %3886 = vmatprep.subr.bf16.mxu0 0
        %3887 = vmatpush1.bf16.msra.mxu0 %v3868
        %3888 = vmatprep.subr.bf16.mxu0 0
        %3889 = vmatpush1.bf16.msra.mxu0 %v3869
        %3890 = vmatprep.subr.bf16.mxu0 0
        %3891 = vmatpush1.bf16.msra.mxu0 %v3870
        %3892 = vmatprep.subr.bf16.mxu0 0
        %3893 = vmatpush1.bf16.msra.mxu0 %v3871
        %3894 = vmatprep.subr.bf16.mxu0 0
        %3895 = vmatpush1.bf16.msra.mxu0 %v3872
        %3896 = vmatprep.subr.bf16.mxu0 0
        %3897 = vmatpush1.bf16.msra.mxu0 %v3873
        %3898 = vmatprep.subr.bf16.mxu0 0
        %3899 = vmatpush1.bf16.msra.mxu0 0
        %3900 = vmatprep.subr.bf16.mxu0 0
        %3901 = vmatpush1.bf16.msra.mxu0 0
        %3902 = vmatprep.subr.bf16.mxu0 0
        %3903 = vmatpush1.bf16.msra.mxu0 0
        %3904 = vmatprep.subr.bf16.mxu0 0
        %3905 = vmatpush1.bf16.msra.mxu0 0
        %3906 = vmatprep.subr.bf16.mxu0 0
        %3907 = vmatpush1.bf16.msra.mxu0 0
        %3908 = vmatprep.subr.bf16.mxu0 0
        %3909 = vmatpush1.bf16.msra.mxu0 0
        %3910 = vmatprep.subr.bf16.mxu0 0
        %3911 = vmatpush1.bf16.msra.mxu0 0
        %3912 = vmatprep.subr.bf16.mxu0 0
        %3913 = vmatpush1.bf16.msra.mxu0 0
        %3914 = vmatprep.mubr.bf16.mxu0 0
        %3915 = vmatmul.mubr.bf16.gmra.mrb[0].mxu0 %v3712
        %v3916 = vpop.f32.mrb[0].mxu0
        %v3917 = vadd.f32 %v3829, %v3916
        %v3918 = vpop.f32.mrb[0].mxu0
        %v3919 = vpop.f32.mrb[0].mxu0
        %v3920 = vpop.f32.mrb[0].mxu0
        %3921 = vdwg.mxu0
        %v3922 = vld [vmem:[#allocation5 + $0x7] sm:$0x1]
        %v3923 = vlaneseq
        %v3924 = vshrl.u32 %v3923, 7
        %v3925 = vsub.s32 0, %v3924
        %v3926 = vrot.slane %v3922, %v3925
        %v3927 = vadd.f32 %v3917, %v3926
        %v3928 = vmax.f32 %v3927, 0.0
        %v3929 = vunpack.c.l.bf16 %v3487
        %v3930 = vadd.f32 %v3928, %v3929
        %v3931 = vmax.f32 %v3930, 0.0
        %v3932 = vpack.c.bf16 %v3931, %v3931
        %v3933 = vld [vmem:[#allocation2 + $0x6c0] sm:$0xf]
        %v3934 = vld [vmem:[#allocation2 + $0x6c4] sm:$0xf]
        %v3935 = vld [vmem:[#allocation2 + $0x6c8] sm:$0xf]
        %v3936 = vld [vmem:[#allocation2 + $0x6cc] sm:$0xf]
        %v3937 = vld [vmem:[#allocation2 + $0x6d0] sm:$0xf]
        %v3938 = vld [vmem:[#allocation2 + $0x6d4] sm:$0xf]
        %v3939 = vld [vmem:[#allocation2 + $0x6d8] sm:$0xf]
        %v3940 = vld [vmem:[#allocation2 + $0x6dc] sm:$0xf]
        %v3941 = vld [vmem:[#allocation2 + $0x6e0] sm:$0xf]
        %v3942 = vld [vmem:[#allocation2 + $0x6e4] sm:$0xf]
        %v3943 = vld [vmem:[#allocation2 + $0x6e8] sm:$0xf]
        %v3944 = vld [vmem:[#allocation2 + $0x6ec] sm:$0xf]
        %v3945 = vld [vmem:[#allocation2 + $0x6f0] sm:$0xf]
        %v3946 = vld [vmem:[#allocation2 + $0x6f4] sm:$0xf]
        %v3947 = vld [vmem:[#allocation2 + $0x6f8] sm:$0xf]
        %v3948 = vld [vmem:[#allocation2 + $0x6fc] sm:$0xf]
        %v3949 = vld [vmem:[#allocation5 + $0x8] sm:$0x1]
        %v3950 = vlaneseq
        %v3951 = vshrl.u32 %v3950, 7
        %v3952 = vsub.s32 0, %v3951
        %v3953 = vrot.slane %v3949, %v3952
        %v3970 = vunpack.c.l.b16 %v3933
        %v3971 = vunpack.c.l.b16 %v3934
        %v3972 = vunpack.c.l.b16 %v3935
        %v3973 = vunpack.c.l.b16 %v3936
        %v3974 = vunpack.c.l.b16 %v3937
        %v3975 = vunpack.c.l.b16 %v3938
        %v3976 = vunpack.c.l.b16 %v3939
        %v3977 = vunpack.c.l.b16 %v3940
        %v3978 = vunpack.c.l.b16 %v3941
        %v3979 = vunpack.c.l.b16 %v3942
        %v3980 = vunpack.c.l.b16 %v3943
        %v3981 = vunpack.c.l.b16 %v3944
        %v3982 = vunpack.c.l.b16 %v3945
        %v3983 = vunpack.c.l.b16 %v3946
        %v3984 = vunpack.c.l.b16 %v3947
        %v3985 = vunpack.c.l.b16 %v3948
        %v3986 = vpack.c.b16 %v3971, %v3970
        %v3987 = vpack.c.b16 %v3973, %v3972
        %v3988 = vpack.c.b16 %v3975, %v3974
        %v3989 = vpack.c.b16 %v3977, %v3976
        %v3990 = vpack.c.b16 %v3979, %v3978
        %v3991 = vpack.c.b16 %v3981, %v3980
        %v3992 = vpack.c.b16 %v3983, %v3982
        %v3993 = vpack.c.b16 %v3985, %v3984
        %4002 = vmatprep.subr.bf16.mxu0 0
        %4003 = vmatpush1.bf16.msra.mxu0 %v3986
        %4004 = vmatprep.subr.bf16.mxu0 0
        %4005 = vmatpush1.bf16.msra.mxu0 %v3987
        %4006 = vmatprep.subr.bf16.mxu0 0
        %4007 = vmatpush1.bf16.msra.mxu0 %v3988
        %4008 = vmatprep.subr.bf16.mxu0 0
        %4009 = vmatpush1.bf16.msra.mxu0 %v3989
        %4010 = vmatprep.subr.bf16.mxu0 0
        %4011 = vmatpush1.bf16.msra.mxu0 %v3990
        %4012 = vmatprep.subr.bf16.mxu0 0
        %4013 = vmatpush1.bf16.msra.mxu0 %v3991
        %4014 = vmatprep.subr.bf16.mxu0 0
        %4015 = vmatpush1.bf16.msra.mxu0 %v3992
        %4016 = vmatprep.subr.bf16.mxu0 0
        %4017 = vmatpush1.bf16.msra.mxu0 %v3993
        %4018 = vmatprep.subr.bf16.mxu0 0
        %4019 = vmatpush1.bf16.msra.mxu0 0
        %4020 = vmatprep.subr.bf16.mxu0 0
        %4021 = vmatpush1.bf16.msra.mxu0 0
        %4022 = vmatprep.subr.bf16.mxu0 0
        %4023 = vmatpush1.bf16.msra.mxu0 0
        %4024 = vmatprep.subr.bf16.mxu0 0
        %4025 = vmatpush1.bf16.msra.mxu0 0
        %4026 = vmatprep.subr.bf16.mxu0 0
        %4027 = vmatpush1.bf16.msra.mxu0 0
        %4028 = vmatprep.subr.bf16.mxu0 0
        %4029 = vmatpush1.bf16.msra.mxu0 0
        %4030 = vmatprep.subr.bf16.mxu0 0
        %4031 = vmatpush1.bf16.msra.mxu0 0
        %4032 = vmatprep.subr.bf16.mxu0 0
        %4033 = vmatpush1.bf16.msra.mxu0 0
        %4034 = vmatprep.mubr.bf16.mxu0 0
        %4035 = vmatmul.mubr.bf16.gmra.mrb[0].mxu0 %v3932
        %v4036 = vpop.f32.mrb[0].mxu0
        %v4037 = vadd.f32 %v3953, %v4036
        %v4038 = vpop.f32.mrb[0].mxu0
        %v4039 = vpop.f32.mrb[0].mxu0
        %v4040 = vpop.f32.mrb[0].mxu0
        %4041 = vdwg.mxu0
        %v4042 = vmax.f32 %v4037, 0.0
        %v4043 = vpack.c.bf16 %v4042, %v4042
        %v4044 = vld [vmem:[#allocation2 + $0x700] sm:$0xf]
        %v4045 = vld [vmem:[#allocation2 + $0x704] sm:$0xf]
        %v4046 = vld [vmem:[#allocation2 + $0x708] sm:$0xf]
        %v4047 = vld [vmem:[#allocation2 + $0x70c] sm:$0xf]
        %v4048 = vld [vmem:[#allocation2 + $0x710] sm:$0xf]
        %v4049 = vld [vmem:[#allocation2 + $0x714] sm:$0xf]
        %v4050 = vld [vmem:[#allocation2 + $0x718] sm:$0xf]
        %v4051 = vld [vmem:[#allocation2 + $0x71c] sm:$0xf]
        %v4052 = vld [vmem:[#allocation2 + $0x720] sm:$0xf]
        %v4053 = vld [vmem:[#allocation2 + $0x724] sm:$0xf]
        %v4054 = vld [vmem:[#allocation2 + $0x728] sm:$0xf]
        %v4055 = vld [vmem:[#allocation2 + $0x72c] sm:$0xf]
        %v4056 = vld [vmem:[#allocation2 + $0x730] sm:$0xf]
        %v4057 = vld [vmem:[#allocation2 + $0x734] sm:$0xf]
        %v4058 = vld [vmem:[#allocation2 + $0x738] sm:$0xf]
        %v4059 = vld [vmem:[#allocation2 + $0x73c] sm:$0xf]
        %v4060 = vld [vmem:[#allocation5 + $0x9] sm:$0x1]
        %v4061 = vlaneseq
        %v4062 = vshrl.u32 %v4061, 7
        %v4063 = vsub.s32 0, %v4062
        %v4064 = vrot.slane %v4060, %v4063
        %v4081 = vunpack.c.l.b16 %v4044
        %v4082 = vunpack.c.l.b16 %v4045
        %v4083 = vunpack.c.l.b16 %v4046
        %v4084 = vunpack.c.l.b16 %v4047
        %v4085 = vunpack.c.l.b16 %v4048
        %v4086 = vunpack.c.l.b16 %v4049
        %v4087 = vunpack.c.l.b16 %v4050
        %v4088 = vunpack.c.l.b16 %v4051
        %v4089 = vunpack.c.l.b16 %v4052
        %v4090 = vunpack.c.l.b16 %v4053
        %v4091 = vunpack.c.l.b16 %v4054
        %v4092 = vunpack.c.l.b16 %v4055
        %v4093 = vunpack.c.l.b16 %v4056
        %v4094 = vunpack.c.l.b16 %v4057
        %v4095 = vunpack.c.l.b16 %v4058
        %v4096 = vunpack.c.l.b16 %v4059
        %v4097 = vpack.c.b16 %v4082, %v4081
        %v4098 = vpack.c.b16 %v4084, %v4083
        %v4099 = vpack.c.b16 %v4086, %v4085
        %v4100 = vpack.c.b16 %v4088, %v4087
        %v4101 = vpack.c.b16 %v4090, %v4089
        %v4102 = vpack.c.b16 %v4092, %v4091
        %v4103 = vpack.c.b16 %v4094, %v4093
        %v4104 = vpack.c.b16 %v4096, %v4095
        %4113 = vmatprep.subr.bf16.mxu0 0
        %4114 = vmatpush1.bf16.msra.mxu0 %v4097
        %4115 = vmatprep.subr.bf16.mxu0 0
        %4116 = vmatpush1.bf16.msra.mxu0 %v4098
        %4117 = vmatprep.subr.bf16.mxu0 0
        %4118 = vmatpush1.bf16.msra.mxu0 %v4099
        %4119 = vmatprep.subr.bf16.mxu0 0
        %4120 = vmatpush1.bf16.msra.mxu0 %v4100
        %4121 = vmatprep.subr.bf16.mxu0 0
        %4122 = vmatpush1.bf16.msra.mxu0 %v4101
        %4123 = vmatprep.subr.bf16.mxu0 0
        %4124 = vmatpush1.bf16.msra.mxu0 %v4102
        %4125 = vmatprep.subr.bf16.mxu0 0
        %4126 = vmatpush1.bf16.msra.mxu0 %v4103
        %4127 = vmatprep.subr.bf16.mxu0 0
        %4128 = vmatpush1.bf16.msra.mxu0 %v4104
        %4129 = vmatprep.subr.bf16.mxu0 0
        %4130 = vmatpush1.bf16.msra.mxu0 0
        %4131 = vmatprep.subr.bf16.mxu0 0
        %4132 = vmatpush1.bf16.msra.mxu0 0
        %4133 = vmatprep.subr.bf16.mxu0 0
        %4134 = vmatpush1.bf16.msra.mxu0 0
        %4135 = vmatprep.subr.bf16.mxu0 0
        %4136 = vmatpush1.bf16.msra.mxu0 0
        %4137 = vmatprep.subr.bf16.mxu0 0
        %4138 = vmatpush1.bf16.msra.mxu0 0
        %4139 = vmatprep.subr.bf16.mxu0 0
        %4140 = vmatpush1.bf16.msra.mxu0 0
        %4141 = vmatprep.subr.bf16.mxu0 0
        %4142 = vmatpush1.bf16.msra.mxu0 0
        %4143 = vmatprep.subr.bf16.mxu0 0
        %4144 = vmatpush1.bf16.msra.mxu0 0
        %4145 = vmatprep.mubr.bf16.mxu0 0
        %4146 = vmatmul.mubr.bf16.gmra.mrb[0].mxu0 %v4043
        %v4147 = vpop.f32.mrb[0].mxu0
        %v4148 = vadd.f32 %v4064, %v4147
        %v4149 = vpop.f32.mrb[0].mxu0
        %v4150 = vpop.f32.mrb[0].mxu0
        %v4151 = vpop.f32.mrb[0].mxu0
        %4152 = vdwg.mxu0
        %v4153 = vmax.f32 %v4148, 0.0
        %v4154 = vunpack.c.l.bf16 %v3932
        %v4155 = vadd.f32 %v4153, %v4154
        %v4156 = vmax.f32 %v4155, 0.0
        %v4157 = vpack.c.bf16 %v4156, %v4156
        %v4158 = vld [vmem:[#allocation2 + $0x740] sm:$0xf]
        %v4159 = vld [vmem:[#allocation2 + $0x744] sm:$0xf]
        %v4160 = vld [vmem:[#allocation2 + $0x748] sm:$0xf]
        %v4161 = vld [vmem:[#allocation2 + $0x74c] sm:$0xf]
        %v4162 = vld [vmem:[#allocation2 + $0x750] sm:$0xf]
        %v4163 = vld [vmem:[#allocation2 + $0x754] sm:$0xf]
        %v4164 = vld [vmem:[#allocation2 + $0x758] sm:$0xf]
        %v4165 = vld [vmem:[#allocation2 + $0x75c] sm:$0xf]
        %v4166 = vld [vmem:[#allocation2 + $0x760] sm:$0xf]
        %v4167 = vld [vmem:[#allocation2 + $0x764] sm:$0xf]
        %v4168 = vld [vmem:[#allocation2 + $0x768] sm:$0xf]
        %v4169 = vld [vmem:[#allocation2 + $0x76c] sm:$0xf]
        %v4170 = vld [vmem:[#allocation2 + $0x770] sm:$0xf]
        %v4171 = vld [vmem:[#allocation2 + $0x774] sm:$0xf]
        %v4172 = vld [vmem:[#allocation2 + $0x778] sm:$0xf]
        %v4173 = vld [vmem:[#allocation2 + $0x77c] sm:$0xf]
        %v4174 = vld [vmem:[#allocation5 + $0xa] sm:$0x1]
        %v4175 = vlaneseq
        %v4176 = vshrl.u32 %v4175, 7
        %v4177 = vsub.s32 0, %v4176
        %v4178 = vrot.slane %v4174, %v4177
        %v4195 = vunpack.c.l.b16 %v4158
        %v4196 = vunpack.c.l.b16 %v4159
        %v4197 = vunpack.c.l.b16 %v4160
        %v4198 = vunpack.c.l.b16 %v4161
        %v4199 = vunpack.c.l.b16 %v4162
        %v4200 = vunpack.c.l.b16 %v4163
        %v4201 = vunpack.c.l.b16 %v4164
        %v4202 = vunpack.c.l.b16 %v4165
        %v4203 = vunpack.c.l.b16 %v4166
        %v4204 = vunpack.c.l.b16 %v4167
        %v4205 = vunpack.c.l.b16 %v4168
        %v4206 = vunpack.c.l.b16 %v4169
        %v4207 = vunpack.c.l.b16 %v4170
        %v4208 = vunpack.c.l.b16 %v4171
        %v4209 = vunpack.c.l.b16 %v4172
        %v4210 = vunpack.c.l.b16 %v4173
        %v4211 = vpack.c.b16 %v4196, %v4195
        %v4212 = vpack.c.b16 %v4198, %v4197
        %v4213 = vpack.c.b16 %v4200, %v4199
        %v4214 = vpack.c.b16 %v4202, %v4201
        %v4215 = vpack.c.b16 %v4204, %v4203
        %v4216 = vpack.c.b16 %v4206, %v4205
        %v4217 = vpack.c.b16 %v4208, %v4207
        %v4218 = vpack.c.b16 %v4210, %v4209
        %4227 = vmatprep.subr.bf16.mxu0 0
        %4228 = vmatpush1.bf16.msra.mxu0 %v4211
        %4229 = vmatprep.subr.bf16.mxu0 0
        %4230 = vmatpush1.bf16.msra.mxu0 %v4212
        %4231 = vmatprep.subr.bf16.mxu0 0
        %4232 = vmatpush1.bf16.msra.mxu0 %v4213
        %4233 = vmatprep.subr.bf16.mxu0 0
        %4234 = vmatpush1.bf16.msra.mxu0 %v4214
        %4235 = vmatprep.subr.bf16.mxu0 0
        %4236 = vmatpush1.bf16.msra.mxu0 %v4215
        %4237 = vmatprep.subr.bf16.mxu0 0
        %4238 = vmatpush1.bf16.msra.mxu0 %v4216
        %4239 = vmatprep.subr.bf16.mxu0 0
        %4240 = vmatpush1.bf16.msra.mxu0 %v4217
        %4241 = vmatprep.subr.bf16.mxu0 0
        %4242 = vmatpush1.bf16.msra.mxu0 %v4218
        %4243 = vmatprep.subr.bf16.mxu0 0
        %4244 = vmatpush1.bf16.msra.mxu0 0
        %4245 = vmatprep.subr.bf16.mxu0 0
        %4246 = vmatpush1.bf16.msra.mxu0 0
        %4247 = vmatprep.subr.bf16.mxu0 0
        %4248 = vmatpush1.bf16.msra.mxu0 0
        %4249 = vmatprep.subr.bf16.mxu0 0
        %4250 = vmatpush1.bf16.msra.mxu0 0
        %4251 = vmatprep.subr.bf16.mxu0 0
        %4252 = vmatpush1.bf16.msra.mxu0 0
        %4253 = vmatprep.subr.bf16.mxu0 0
        %4254 = vmatpush1.bf16.msra.mxu0 0
        %4255 = vmatprep.subr.bf16.mxu0 0
        %4256 = vmatpush1.bf16.msra.mxu0 0
        %4257 = vmatprep.subr.bf16.mxu0 0
        %4258 = vmatpush1.bf16.msra.mxu0 0
        %4259 = vmatprep.mubr.bf16.mxu0 0
        %4260 = vmatmul.mubr.bf16.gmra.mrb[0].mxu0 %v4157
        %v4261 = vpop.f32.mrb[0].mxu0
        %v4262 = vadd.f32 %v4178, %v4261
        %v4263 = vpop.f32.mrb[0].mxu0
        %v4264 = vpop.f32.mrb[0].mxu0
        %v4265 = vpop.f32.mrb[0].mxu0
        %4266 = vdwg.mxu0
        %v4267 = vmax.f32 %v4262, 0.0
        %v4268 = vpack.c.bf16 %v4267, %v4267
        %v4269 = vld [vmem:[#allocation2 + $0x780] sm:$0xf]
        %v4270 = vld [vmem:[#allocation2 + $0x784] sm:$0xf]
        %v4271 = vld [vmem:[#allocation2 + $0x788] sm:$0xf]
        %v4272 = vld [vmem:[#allocation2 + $0x78c] sm:$0xf]
        %v4273 = vld [vmem:[#allocation2 + $0x790] sm:$0xf]
        %v4274 = vld [vmem:[#allocation2 + $0x794] sm:$0xf]
        %v4275 = vld [vmem:[#allocation2 + $0x798] sm:$0xf]
        %v4276 = vld [vmem:[#allocation2 + $0x79c] sm:$0xf]
        %v4277 = vld [vmem:[#allocation2 + $0x7a0] sm:$0xf]
        %v4278 = vld [vmem:[#allocation2 + $0x7a4] sm:$0xf]
        %v4279 = vld [vmem:[#allocation2 + $0x7a8] sm:$0xf]
        %v4280 = vld [vmem:[#allocation2 + $0x7ac] sm:$0xf]
        %v4281 = vld [vmem:[#allocation2 + $0x7b0] sm:$0xf]
        %v4282 = vld [vmem:[#allocation2 + $0x7b4] sm:$0xf]
        %v4283 = vld [vmem:[#allocation2 + $0x7b8] sm:$0xf]
        %v4284 = vld [vmem:[#allocation2 + $0x7bc] sm:$0xf]
        %v4285 = vld [vmem:[#allocation5 + $0xb] sm:$0x1]
        %v4286 = vlaneseq
        %v4287 = vshrl.u32 %v4286, 7
        %v4288 = vsub.s32 0, %v4287
        %v4289 = vrot.slane %v4285, %v4288
        %v4306 = vunpack.c.l.b16 %v4269
        %v4307 = vunpack.c.l.b16 %v4270
        %v4308 = vunpack.c.l.b16 %v4271
        %v4309 = vunpack.c.l.b16 %v4272
        %v4310 = vunpack.c.l.b16 %v4273
        %v4311 = vunpack.c.l.b16 %v4274
        %v4312 = vunpack.c.l.b16 %v4275
        %v4313 = vunpack.c.l.b16 %v4276
        %v4314 = vunpack.c.l.b16 %v4277
        %v4315 = vunpack.c.l.b16 %v4278
        %v4316 = vunpack.c.l.b16 %v4279
        %v4317 = vunpack.c.l.b16 %v4280
        %v4318 = vunpack.c.l.b16 %v4281
        %v4319 = vunpack.c.l.b16 %v4282
        %v4320 = vunpack.c.l.b16 %v4283
        %v4321 = vunpack.c.l.b16 %v4284
        %v4322 = vpack.c.b16 %v4307, %v4306
        %v4323 = vpack.c.b16 %v4309, %v4308
        %v4324 = vpack.c.b16 %v4311, %v4310
        %v4325 = vpack.c.b16 %v4313, %v4312
        %v4326 = vpack.c.b16 %v4315, %v4314
        %v4327 = vpack.c.b16 %v4317, %v4316
        %v4328 = vpack.c.b16 %v4319, %v4318
        %v4329 = vpack.c.b16 %v4321, %v4320
        %4338 = vmatprep.subr.bf16.mxu0 0
        %4339 = vmatpush1.bf16.msra.mxu0 %v4322
        %4340 = vmatprep.subr.bf16.mxu0 0
        %4341 = vmatpush1.bf16.msra.mxu0 %v4323
        %4342 = vmatprep.subr.bf16.mxu0 0
        %4343 = vmatpush1.bf16.msra.mxu0 %v4324
        %4344 = vmatprep.subr.bf16.mxu0 0
        %4345 = vmatpush1.bf16.msra.mxu0 %v4325
        %4346 = vmatprep.subr.bf16.mxu0 0
        %4347 = vmatpush1.bf16.msra.mxu0 %v4326
        %4348 = vmatprep.subr.bf16.mxu0 0
        %4349 = vmatpush1.bf16.msra.mxu0 %v4327
        %4350 = vmatprep.subr.bf16.mxu0 0
        %4351 = vmatpush1.bf16.msra.mxu0 %v4328
        %4352 = vmatprep.subr.bf16.mxu0 0
        %4353 = vmatpush1.bf16.msra.mxu0 %v4329
        %4354 = vmatprep.subr.bf16.mxu0 0
        %4355 = vmatpush1.bf16.msra.mxu0 0
        %4356 = vmatprep.subr.bf16.mxu0 0
        %4357 = vmatpush1.bf16.msra.mxu0 0
        %4358 = vmatprep.subr.bf16.mxu0 0
        %4359 = vmatpush1.bf16.msra.mxu0 0
        %4360 = vmatprep.subr.bf16.mxu0 0
        %4361 = vmatpush1.bf16.msra.mxu0 0
        %4362 = vmatprep.subr.bf16.mxu0 0
        %4363 = vmatpush1.bf16.msra.mxu0 0
        %4364 = vmatprep.subr.bf16.mxu0 0
        %4365 = vmatpush1.bf16.msra.mxu0 0
        %4366 = vmatprep.subr.bf16.mxu0 0
        %4367 = vmatpush1.bf16.msra.mxu0 0
        %4368 = vmatprep.subr.bf16.mxu0 0
        %4369 = vmatpush1.bf16.msra.mxu0 0
        %4370 = vmatprep.mubr.bf16.mxu0 0
        %4371 = vmatmul.mubr.bf16.gmra.mrb[0].mxu0 %v4268
        %v4372 = vpop.f32.mrb[0].mxu0
        %v4373 = vadd.f32 %v4289, %v4372
        %v4374 = vpop.f32.mrb[0].mxu0
        %v4375 = vpop.f32.mrb[0].mxu0
        %v4376 = vpop.f32.mrb[0].mxu0
        %4377 = vdwg.mxu0
        %v4378 = vmax.f32 %v4373, 0.0
        %v4379 = vunpack.c.l.bf16 %v4157
        %v4380 = vadd.f32 %v4378, %v4379
        %v4381 = vmax.f32 %v4380, 0.0
        %v4382 = vpack.c.bf16 %v4381, %v4381
        %v4383 = vld [vmem:[#allocation2 + $0x7c0] sm:$0xf]
        %v4384 = vld [vmem:[#allocation2 + $0x7c4] sm:$0xf]
        %v4385 = vld [vmem:[#allocation2 + $0x7c8] sm:$0xf]
        %v4386 = vld [vmem:[#allocation2 + $0x7cc] sm:$0xf]
        %v4387 = vld [vmem:[#allocation2 + $0x7d0] sm:$0xf]
        %v4388 = vld [vmem:[#allocation2 + $0x7d4] sm:$0xf]
        %v4389 = vld [vmem:[#allocation2 + $0x7d8] sm:$0xf]
        %v4390 = vld [vmem:[#allocation2 + $0x7dc] sm:$0xf]
        %v4391 = vld [vmem:[#allocation2 + $0x7e0] sm:$0xf]
        %v4392 = vld [vmem:[#allocation2 + $0x7e4] sm:$0xf]
        %v4393 = vld [vmem:[#allocation2 + $0x7e8] sm:$0xf]
        %v4394 = vld [vmem:[#allocation2 + $0x7ec] sm:$0xf]
        %v4395 = vld [vmem:[#allocation2 + $0x7f0] sm:$0xf]
        %v4396 = vld [vmem:[#allocation2 + $0x7f4] sm:$0xf]
        %v4397 = vld [vmem:[#allocation2 + $0x7f8] sm:$0xf]
        %v4398 = vld [vmem:[#allocation2 + $0x7fc] sm:$0xf]
        %v4399 = vld [vmem:[#allocation5 + $0xc] sm:$0x1]
        %v4400 = vlaneseq
        %v4401 = vshrl.u32 %v4400, 7
        %v4402 = vsub.s32 0, %v4401
        %v4403 = vrot.slane %v4399, %v4402
        %v4420 = vunpack.c.l.b16 %v4383
        %v4421 = vunpack.c.l.b16 %v4384
        %v4422 = vunpack.c.l.b16 %v4385
        %v4423 = vunpack.c.l.b16 %v4386
        %v4424 = vunpack.c.l.b16 %v4387
        %v4425 = vunpack.c.l.b16 %v4388
        %v4426 = vunpack.c.l.b16 %v4389
        %v4427 = vunpack.c.l.b16 %v4390
        %v4428 = vunpack.c.l.b16 %v4391
        %v4429 = vunpack.c.l.b16 %v4392
        %v4430 = vunpack.c.l.b16 %v4393
        %v4431 = vunpack.c.l.b16 %v4394
        %v4432 = vunpack.c.l.b16 %v4395
        %v4433 = vunpack.c.l.b16 %v4396
        %v4434 = vunpack.c.l.b16 %v4397
        %v4435 = vunpack.c.l.b16 %v4398
        %v4436 = vpack.c.b16 %v4421, %v4420
        %v4437 = vpack.c.b16 %v4423, %v4422
        %v4438 = vpack.c.b16 %v4425, %v4424
        %v4439 = vpack.c.b16 %v4427, %v4426
        %v4440 = vpack.c.b16 %v4429, %v4428
        %v4441 = vpack.c.b16 %v4431, %v4430
        %v4442 = vpack.c.b16 %v4433, %v4432
        %v4443 = vpack.c.b16 %v4435, %v4434
        %4452 = vmatprep.subr.bf16.mxu0 0
        %4453 = vmatpush1.bf16.msra.mxu0 %v4436
        %4454 = vmatprep.subr.bf16.mxu0 0
        %4455 = vmatpush1.bf16.msra.mxu0 %v4437
        %4456 = vmatprep.subr.bf16.mxu0 0
        %4457 = vmatpush1.bf16.msra.mxu0 %v4438
        %4458 = vmatprep.subr.bf16.mxu0 0
        %4459 = vmatpush1.bf16.msra.mxu0 %v4439
        %4460 = vmatprep.subr.bf16.mxu0 0
        %4461 = vmatpush1.bf16.msra.mxu0 %v4440
        %4462 = vmatprep.subr.bf16.mxu0 0
        %4463 = vmatpush1.bf16.msra.mxu0 %v4441
        %4464 = vmatprep.subr.bf16.mxu0 0
        %4465 = vmatpush1.bf16.msra.mxu0 %v4442
        %4466 = vmatprep.subr.bf16.mxu0 0
        %4467 = vmatpush1.bf16.msra.mxu0 %v4443
        %4468 = vmatprep.subr.bf16.mxu0 0
        %4469 = vmatpush1.bf16.msra.mxu0 0
        %4470 = vmatprep.subr.bf16.mxu0 0
        %4471 = vmatpush1.bf16.msra.mxu0 0
        %4472 = vmatprep.subr.bf16.mxu0 0
        %4473 = vmatpush1.bf16.msra.mxu0 0
        %4474 = vmatprep.subr.bf16.mxu0 0
        %4475 = vmatpush1.bf16.msra.mxu0 0
        %4476 = vmatprep.subr.bf16.mxu0 0
        %4477 = vmatpush1.bf16.msra.mxu0 0
        %4478 = vmatprep.subr.bf16.mxu0 0
        %4479 = vmatpush1.bf16.msra.mxu0 0
        %4480 = vmatprep.subr.bf16.mxu0 0
        %4481 = vmatpush1.bf16.msra.mxu0 0
        %4482 = vmatprep.subr.bf16.mxu0 0
        %4483 = vmatpush1.bf16.msra.mxu0 0
        %4484 = vmatprep.mubr.bf16.mxu0 0
        %4485 = vmatmul.mubr.bf16.gmra.mrb[0].mxu0 %v4382
        %v4486 = vpop.f32.mrb[0].mxu0
        %v4487 = vadd.f32 %v4403, %v4486
        %v4488 = vpop.f32.mrb[0].mxu0
        %v4489 = vpop.f32.mrb[0].mxu0
        %v4490 = vpop.f32.mrb[0].mxu0
        %4491 = vdwg.mxu0
        %v4492 = vmax.f32 %v4487, 0.0
        %v4493 = vpack.c.bf16 %v4492, %v4492
        %v4494 = vld [vmem:[#allocation2 + $0x800] sm:$0xf]
        %v4495 = vld [vmem:[#allocation2 + $0x804] sm:$0xf]
        %v4496 = vld [vmem:[#allocation2 + $0x808] sm:$0xf]
        %v4497 = vld [vmem:[#allocation2 + $0x80c] sm:$0xf]
        %v4498 = vld [vmem:[#allocation2 + $0x810] sm:$0xf]
        %v4499 = vld [vmem:[#allocation2 + $0x814] sm:$0xf]
        %v4500 = vld [vmem:[#allocation2 + $0x818] sm:$0xf]
        %v4501 = vld [vmem:[#allocation2 + $0x81c] sm:$0xf]
        %v4502 = vld [vmem:[#allocation2 + $0x820] sm:$0xf]
        %v4503 = vld [vmem:[#allocation2 + $0x824] sm:$0xf]
        %v4504 = vld [vmem:[#allocation2 + $0x828] sm:$0xf]
        %v4505 = vld [vmem:[#allocation2 + $0x82c] sm:$0xf]
        %v4506 = vld [vmem:[#allocation2 + $0x830] sm:$0xf]
        %v4507 = vld [vmem:[#allocation2 + $0x834] sm:$0xf]
        %v4508 = vld [vmem:[#allocation2 + $0x838] sm:$0xf]
        %v4509 = vld [vmem:[#allocation2 + $0x83c] sm:$0xf]
        %v4510 = vld [vmem:[#allocation5 + $0xd] sm:$0x1]
        %v4511 = vlaneseq
        %v4512 = vshrl.u32 %v4511, 7
        %v4513 = vsub.s32 0, %v4512
        %v4514 = vrot.slane %v4510, %v4513
        %v4531 = vunpack.c.l.b16 %v4494
        %v4532 = vunpack.c.l.b16 %v4495
        %v4533 = vunpack.c.l.b16 %v4496
        %v4534 = vunpack.c.l.b16 %v4497
        %v4535 = vunpack.c.l.b16 %v4498
        %v4536 = vunpack.c.l.b16 %v4499
        %v4537 = vunpack.c.l.b16 %v4500
        %v4538 = vunpack.c.l.b16 %v4501
        %v4539 = vunpack.c.l.b16 %v4502
        %v4540 = vunpack.c.l.b16 %v4503
        %v4541 = vunpack.c.l.b16 %v4504
        %v4542 = vunpack.c.l.b16 %v4505
        %v4543 = vunpack.c.l.b16 %v4506
        %v4544 = vunpack.c.l.b16 %v4507
        %v4545 = vunpack.c.l.b16 %v4508
        %v4546 = vunpack.c.l.b16 %v4509
        %v4547 = vpack.c.b16 %v4532, %v4531
        %v4548 = vpack.c.b16 %v4534, %v4533
        %v4549 = vpack.c.b16 %v4536, %v4535
        %v4550 = vpack.c.b16 %v4538, %v4537
        %v4551 = vpack.c.b16 %v4540, %v4539
        %v4552 = vpack.c.b16 %v4542, %v4541
        %v4553 = vpack.c.b16 %v4544, %v4543
        %v4554 = vpack.c.b16 %v4546, %v4545
        %4563 = vmatprep.subr.bf16.mxu0 0
        %4564 = vmatpush1.bf16.msra.mxu0 %v4547
        %4565 = vmatprep.subr.bf16.mxu0 0
        %4566 = vmatpush1.bf16.msra.mxu0 %v4548
        %4567 = vmatprep.subr.bf16.mxu0 0
        %4568 = vmatpush1.bf16.msra.mxu0 %v4549
        %4569 = vmatprep.subr.bf16.mxu0 0
        %4570 = vmatpush1.bf16.msra.mxu0 %v4550
        %4571 = vmatprep.subr.bf16.mxu0 0
        %4572 = vmatpush1.bf16.msra.mxu0 %v4551
        %4573 = vmatprep.subr.bf16.mxu0 0
        %4574 = vmatpush1.bf16.msra.mxu0 %v4552
        %4575 = vmatprep.subr.bf16.mxu0 0
        %4576 = vmatpush1.bf16.msra.mxu0 %v4553
        %4577 = vmatprep.subr.bf16.mxu0 0
        %4578 = vmatpush1.bf16.msra.mxu0 %v4554
        %4579 = vmatprep.subr.bf16.mxu0 0
        %4580 = vmatpush1.bf16.msra.mxu0 0
        %4581 = vmatprep.subr.bf16.mxu0 0
        %4582 = vmatpush1.bf16.msra.mxu0 0
        %4583 = vmatprep.subr.bf16.mxu0 0
        %4584 = vmatpush1.bf16.msra.mxu0 0
        %4585 = vmatprep.subr.bf16.mxu0 0
        %4586 = vmatpush1.bf16.msra.mxu0 0
        %4587 = vmatprep.subr.bf16.mxu0 0
        %4588 = vmatpush1.bf16.msra.mxu0 0
        %4589 = vmatprep.subr.bf16.mxu0 0
        %4590 = vmatpush1.bf16.msra.mxu0 0
        %4591 = vmatprep.subr.bf16.mxu0 0
        %4592 = vmatpush1.bf16.msra.mxu0 0
        %4593 = vmatprep.subr.bf16.mxu0 0
        %4594 = vmatpush1.bf16.msra.mxu0 0
        %4595 = vmatprep.mubr.bf16.mxu0 0
        %4596 = vmatmul.mubr.bf16.gmra.mrb[0].mxu0 %v4493
        %v4597 = vpop.f32.mrb[0].mxu0
        %v4598 = vadd.f32 %v4514, %v4597
        %v4599 = vpop.f32.mrb[0].mxu0
        %v4600 = vpop.f32.mrb[0].mxu0
        %v4601 = vpop.f32.mrb[0].mxu0
        %4602 = vdwg.mxu0
        %v4603 = vmax.f32 %v4598, 0.0
        %v4604 = vunpack.c.l.bf16 %v4382
        %v4605 = vadd.f32 %v4603, %v4604
        %v4606 = vmax.f32 %v4605, 0.0
        %v4607 = vpack.c.bf16 %v4606, %v4606
        %v4608 = vld [vmem:[#allocation2 + $0x840] sm:$0xf]
        %v4609 = vld [vmem:[#allocation2 + $0x844] sm:$0xf]
        %v4610 = vld [vmem:[#allocation2 + $0x848] sm:$0xf]
        %v4611 = vld [vmem:[#allocation2 + $0x84c] sm:$0xf]
        %v4612 = vld [vmem:[#allocation2 + $0x850] sm:$0xf]
        %v4613 = vld [vmem:[#allocation2 + $0x854] sm:$0xf]
        %v4614 = vld [vmem:[#allocation2 + $0x858] sm:$0xf]
        %v4615 = vld [vmem:[#allocation2 + $0x85c] sm:$0xf]
        %v4616 = vld [vmem:[#allocation2 + $0x860] sm:$0xf]
        %v4617 = vld [vmem:[#allocation2 + $0x864] sm:$0xf]
        %v4618 = vld [vmem:[#allocation2 + $0x868] sm:$0xf]
        %v4619 = vld [vmem:[#allocation2 + $0x86c] sm:$0xf]
        %v4620 = vld [vmem:[#allocation2 + $0x870] sm:$0xf]
        %v4621 = vld [vmem:[#allocation2 + $0x874] sm:$0xf]
        %v4622 = vld [vmem:[#allocation2 + $0x878] sm:$0xf]
        %v4623 = vld [vmem:[#allocation2 + $0x87c] sm:$0xf]
        %v4624 = vld [vmem:[#allocation5 + $0xe] sm:$0x1]
        %v4625 = vlaneseq
        %v4626 = vshrl.u32 %v4625, 7
        %v4627 = vsub.s32 0, %v4626
        %v4628 = vrot.slane %v4624, %v4627
        %v4645 = vunpack.c.l.b16 %v4608
        %v4646 = vunpack.c.l.b16 %v4609
        %v4647 = vunpack.c.l.b16 %v4610
        %v4648 = vunpack.c.l.b16 %v4611
        %v4649 = vunpack.c.l.b16 %v4612
        %v4650 = vunpack.c.l.b16 %v4613
        %v4651 = vunpack.c.l.b16 %v4614
        %v4652 = vunpack.c.l.b16 %v4615
        %v4653 = vunpack.c.l.b16 %v4616
        %v4654 = vunpack.c.l.b16 %v4617
        %v4655 = vunpack.c.l.b16 %v4618
        %v4656 = vunpack.c.l.b16 %v4619
        %v4657 = vunpack.c.l.b16 %v4620
        %v4658 = vunpack.c.l.b16 %v4621
        %v4659 = vunpack.c.l.b16 %v4622
        %v4660 = vunpack.c.l.b16 %v4623
        %v4661 = vpack.c.b16 %v4646, %v4645
        %v4662 = vpack.c.b16 %v4648, %v4647
        %v4663 = vpack.c.b16 %v4650, %v4649
        %v4664 = vpack.c.b16 %v4652, %v4651
        %v4665 = vpack.c.b16 %v4654, %v4653
        %v4666 = vpack.c.b16 %v4656, %v4655
        %v4667 = vpack.c.b16 %v4658, %v4657
        %v4668 = vpack.c.b16 %v4660, %v4659
        %4677 = vmatprep.subr.bf16.mxu0 0
        %4678 = vmatpush1.bf16.msra.mxu0 %v4661
        %4679 = vmatprep.subr.bf16.mxu0 0
        %4680 = vmatpush1.bf16.msra.mxu0 %v4662
        %4681 = vmatprep.subr.bf16.mxu0 0
        %4682 = vmatpush1.bf16.msra.mxu0 %v4663
        %4683 = vmatprep.subr.bf16.mxu0 0
        %4684 = vmatpush1.bf16.msra.mxu0 %v4664
        %4685 = vmatprep.subr.bf16.mxu0 0
        %4686 = vmatpush1.bf16.msra.mxu0 %v4665
        %4687 = vmatprep.subr.bf16.mxu0 0
        %4688 = vmatpush1.bf16.msra.mxu0 %v4666
        %4689 = vmatprep.subr.bf16.mxu0 0
        %4690 = vmatpush1.bf16.msra.mxu0 %v4667
        %4691 = vmatprep.subr.bf16.mxu0 0
        %4692 = vmatpush1.bf16.msra.mxu0 %v4668
        %4693 = vmatprep.subr.bf16.mxu0 0
        %4694 = vmatpush1.bf16.msra.mxu0 0
        %4695 = vmatprep.subr.bf16.mxu0 0
        %4696 = vmatpush1.bf16.msra.mxu0 0
        %4697 = vmatprep.subr.bf16.mxu0 0
        %4698 = vmatpush1.bf16.msra.mxu0 0
        %4699 = vmatprep.subr.bf16.mxu0 0
        %4700 = vmatpush1.bf16.msra.mxu0 0
        %4701 = vmatprep.subr.bf16.mxu0 0
        %4702 = vmatpush1.bf16.msra.mxu0 0
        %4703 = vmatprep.subr.bf16.mxu0 0
        %4704 = vmatpush1.bf16.msra.mxu0 0
        %4705 = vmatprep.subr.bf16.mxu0 0
        %4706 = vmatpush1.bf16.msra.mxu0 0
        %4707 = vmatprep.subr.bf16.mxu0 0
        %4708 = vmatpush1.bf16.msra.mxu0 0
        %4709 = vmatprep.mubr.bf16.mxu0 0
        %4710 = vmatmul.mubr.bf16.gmra.mrb[0].mxu0 %v4607
        %v4711 = vpop.f32.mrb[0].mxu0
        %v4712 = vadd.f32 %v4628, %v4711
        %v4713 = vpop.f32.mrb[0].mxu0
        %v4714 = vpop.f32.mrb[0].mxu0
        %v4715 = vpop.f32.mrb[0].mxu0
        %4716 = vdwg.mxu0
        %v4717 = vmax.f32 %v4712, 0.0
        %v4718 = vpack.c.bf16 %v4717, %v4717
        %v4719 = vld [vmem:[#allocation2 + $0x880] sm:$0xf]
        %v4720 = vld [vmem:[#allocation2 + $0x884] sm:$0xf]
        %v4721 = vld [vmem:[#allocation2 + $0x888] sm:$0xf]
        %v4722 = vld [vmem:[#allocation2 + $0x88c] sm:$0xf]
        %v4723 = vld [vmem:[#allocation2 + $0x890] sm:$0xf]
        %v4724 = vld [vmem:[#allocation2 + $0x894] sm:$0xf]
        %v4725 = vld [vmem:[#allocation2 + $0x898] sm:$0xf]
        %v4726 = vld [vmem:[#allocation2 + $0x89c] sm:$0xf]
        %v4727 = vld [vmem:[#allocation2 + $0x8a0] sm:$0xf]
        %v4728 = vld [vmem:[#allocation2 + $0x8a4] sm:$0xf]
        %v4729 = vld [vmem:[#allocation2 + $0x8a8] sm:$0xf]
        %v4730 = vld [vmem:[#allocation2 + $0x8ac] sm:$0xf]
        %v4731 = vld [vmem:[#allocation2 + $0x8b0] sm:$0xf]
        %v4732 = vld [vmem:[#allocation2 + $0x8b4] sm:$0xf]
        %v4733 = vld [vmem:[#allocation2 + $0x8b8] sm:$0xf]
        %v4734 = vld [vmem:[#allocation2 + $0x8bc] sm:$0xf]
        %v4735 = vld [vmem:[#allocation5 + $0xf] sm:$0x1]
        %v4736 = vlaneseq
        %v4737 = vshrl.u32 %v4736, 7
        %v4738 = vsub.s32 0, %v4737
        %v4739 = vrot.slane %v4735, %v4738
        %v4756 = vunpack.c.l.b16 %v4719
        %v4757 = vunpack.c.l.b16 %v4720
        %v4758 = vunpack.c.l.b16 %v4721
        %v4759 = vunpack.c.l.b16 %v4722
        %v4760 = vunpack.c.l.b16 %v4723
        %v4761 = vunpack.c.l.b16 %v4724
        %v4762 = vunpack.c.l.b16 %v4725
        %v4763 = vunpack.c.l.b16 %v4726
        %v4764 = vunpack.c.l.b16 %v4727
        %v4765 = vunpack.c.l.b16 %v4728
        %v4766 = vunpack.c.l.b16 %v4729
        %v4767 = vunpack.c.l.b16 %v4730
        %v4768 = vunpack.c.l.b16 %v4731
        %v4769 = vunpack.c.l.b16 %v4732
        %v4770 = vunpack.c.l.b16 %v4733
        %v4771 = vunpack.c.l.b16 %v4734
        %v4772 = vpack.c.b16 %v4757, %v4756
        %v4773 = vpack.c.b16 %v4759, %v4758
        %v4774 = vpack.c.b16 %v4761, %v4760
        %v4775 = vpack.c.b16 %v4763, %v4762
        %v4776 = vpack.c.b16 %v4765, %v4764
        %v4777 = vpack.c.b16 %v4767, %v4766
        %v4778 = vpack.c.b16 %v4769, %v4768
        %v4779 = vpack.c.b16 %v4771, %v4770
        %4788 = vmatprep.subr.bf16.mxu0 0
        %4789 = vmatpush1.bf16.msra.mxu0 %v4772
        %4790 = vmatprep.subr.bf16.mxu0 0
        %4791 = vmatpush1.bf16.msra.mxu0 %v4773
        %4792 = vmatprep.subr.bf16.mxu0 0
        %4793 = vmatpush1.bf16.msra.mxu0 %v4774
        %4794 = vmatprep.subr.bf16.mxu0 0
        %4795 = vmatpush1.bf16.msra.mxu0 %v4775
        %4796 = vmatprep.subr.bf16.mxu0 0
        %4797 = vmatpush1.bf16.msra.mxu0 %v4776
        %4798 = vmatprep.subr.bf16.mxu0 0
        %4799 = vmatpush1.bf16.msra.mxu0 %v4777
        %4800 = vmatprep.subr.bf16.mxu0 0
        %4801 = vmatpush1.bf16.msra.mxu0 %v4778
        %4802 = vmatprep.subr.bf16.mxu0 0
        %4803 = vmatpush1.bf16.msra.mxu0 %v4779
        %4804 = vmatprep.subr.bf16.mxu0 0
        %4805 = vmatpush1.bf16.msra.mxu0 0
        %4806 = vmatprep.subr.bf16.mxu0 0
        %4807 = vmatpush1.bf16.msra.mxu0 0
        %4808 = vmatprep.subr.bf16.mxu0 0
        %4809 = vmatpush1.bf16.msra.mxu0 0
        %4810 = vmatprep.subr.bf16.mxu0 0
        %4811 = vmatpush1.bf16.msra.mxu0 0
        %4812 = vmatprep.subr.bf16.mxu0 0
        %4813 = vmatpush1.bf16.msra.mxu0 0
        %4814 = vmatprep.subr.bf16.mxu0 0
        %4815 = vmatpush1.bf16.msra.mxu0 0
        %4816 = vmatprep.subr.bf16.mxu0 0
        %4817 = vmatpush1.bf16.msra.mxu0 0
        %4818 = vmatprep.subr.bf16.mxu0 0
        %4819 = vmatpush1.bf16.msra.mxu0 0
        %4820 = vmatprep.mubr.bf16.mxu0 0
        %4821 = vmatmul.mubr.bf16.gmra.mrb[0].mxu0 %v4718
        %v4822 = vpop.f32.mrb[0].mxu0
        %v4823 = vadd.f32 %v4739, %v4822
        %v4824 = vpop.f32.mrb[0].mxu0
        %v4825 = vpop.f32.mrb[0].mxu0
        %v4826 = vpop.f32.mrb[0].mxu0
        %4827 = vdwg.mxu0
        %v4828 = vmax.f32 %v4823, 0.0
        %v4829 = vunpack.c.l.bf16 %v4607
        %v4830 = vadd.f32 %v4828, %v4829
        %v4831 = vmax.f32 %v4830, 0.0
        %v4832 = vpack.c.bf16 %v4831, %v4831
        %v4833 = vld [vmem:[#allocation2 + $0x8c0] sm:$0xf]
        %v4834 = vld [vmem:[#allocation2 + $0x8c4] sm:$0xf]
        %v4835 = vld [vmem:[#allocation2 + $0x8c8] sm:$0xf]
        %v4836 = vld [vmem:[#allocation2 + $0x8cc] sm:$0xf]
        %v4837 = vld [vmem:[#allocation2 + $0x8d0] sm:$0xf]
        %v4838 = vld [vmem:[#allocation2 + $0x8d4] sm:$0xf]
        %v4839 = vld [vmem:[#allocation2 + $0x8d8] sm:$0xf]
        %v4840 = vld [vmem:[#allocation2 + $0x8dc] sm:$0xf]
        %v4841 = vld [vmem:[#allocation2 + $0x8e0] sm:$0xf]
        %v4842 = vld [vmem:[#allocation2 + $0x8e4] sm:$0xf]
        %v4843 = vld [vmem:[#allocation2 + $0x8e8] sm:$0xf]
        %v4844 = vld [vmem:[#allocation2 + $0x8ec] sm:$0xf]
        %v4845 = vld [vmem:[#allocation2 + $0x8f0] sm:$0xf]
        %v4846 = vld [vmem:[#allocation2 + $0x8f4] sm:$0xf]
        %v4847 = vld [vmem:[#allocation2 + $0x8f8] sm:$0xf]
        %v4848 = vld [vmem:[#allocation2 + $0x8fc] sm:$0xf]
        %v4849 = vld [vmem:[#allocation5 + $0x10] sm:$0x1]
        %v4850 = vlaneseq
        %v4851 = vshrl.u32 %v4850, 7
        %v4852 = vsub.s32 0, %v4851
        %v4853 = vrot.slane %v4849, %v4852
        %v4870 = vunpack.c.l.b16 %v4833
        %v4871 = vunpack.c.l.b16 %v4834
        %v4872 = vunpack.c.l.b16 %v4835
        %v4873 = vunpack.c.l.b16 %v4836
        %v4874 = vunpack.c.l.b16 %v4837
        %v4875 = vunpack.c.l.b16 %v4838
        %v4876 = vunpack.c.l.b16 %v4839
        %v4877 = vunpack.c.l.b16 %v4840
        %v4878 = vunpack.c.l.b16 %v4841
        %v4879 = vunpack.c.l.b16 %v4842
        %v4880 = vunpack.c.l.b16 %v4843
        %v4881 = vunpack.c.l.b16 %v4844
        %v4882 = vunpack.c.l.b16 %v4845
        %v4883 = vunpack.c.l.b16 %v4846
        %v4884 = vunpack.c.l.b16 %v4847
        %v4885 = vunpack.c.l.b16 %v4848
        %v4886 = vpack.c.b16 %v4871, %v4870
        %v4887 = vpack.c.b16 %v4873, %v4872
        %v4888 = vpack.c.b16 %v4875, %v4874
        %v4889 = vpack.c.b16 %v4877, %v4876
        %v4890 = vpack.c.b16 %v4879, %v4878
        %v4891 = vpack.c.b16 %v4881, %v4880
        %v4892 = vpack.c.b16 %v4883, %v4882
        %v4893 = vpack.c.b16 %v4885, %v4884
        %4902 = vmatprep.subr.bf16.mxu0 0
        %4903 = vmatpush1.bf16.msra.mxu0 %v4886
        %4904 = vmatprep.subr.bf16.mxu0 0
        %4905 = vmatpush1.bf16.msra.mxu0 %v4887
        %4906 = vmatprep.subr.bf16.mxu0 0
        %4907 = vmatpush1.bf16.msra.mxu0 %v4888
        %4908 = vmatprep.subr.bf16.mxu0 0
        %4909 = vmatpush1.bf16.msra.mxu0 %v4889
        %4910 = vmatprep.subr.bf16.mxu0 0
        %4911 = vmatpush1.bf16.msra.mxu0 %v4890
        %4912 = vmatprep.subr.bf16.mxu0 0
        %4913 = vmatpush1.bf16.msra.mxu0 %v4891
        %4914 = vmatprep.subr.bf16.mxu0 0
        %4915 = vmatpush1.bf16.msra.mxu0 %v4892
        %4916 = vmatprep.subr.bf16.mxu0 0
        %4917 = vmatpush1.bf16.msra.mxu0 %v4893
        %4918 = vmatprep.subr.bf16.mxu0 0
        %4919 = vmatpush1.bf16.msra.mxu0 0
        %4920 = vmatprep.subr.bf16.mxu0 0
        %4921 = vmatpush1.bf16.msra.mxu0 0
        %4922 = vmatprep.subr.bf16.mxu0 0
        %4923 = vmatpush1.bf16.msra.mxu0 0
        %4924 = vmatprep.subr.bf16.mxu0 0
        %4925 = vmatpush1.bf16.msra.mxu0 0
        %4926 = vmatprep.subr.bf16.mxu0 0
        %4927 = vmatpush1.bf16.msra.mxu0 0
        %4928 = vmatprep.subr.bf16.mxu0 0
        %4929 = vmatpush1.bf16.msra.mxu0 0
        %4930 = vmatprep.subr.bf16.mxu0 0
        %4931 = vmatpush1.bf16.msra.mxu0 0
        %4932 = vmatprep.subr.bf16.mxu0 0
        %4933 = vmatpush1.bf16.msra.mxu0 0
        %4934 = vmatprep.mubr.bf16.mxu0 0
        %4935 = vmatmul.mubr.bf16.gmra.mrb[0].mxu0 %v4832
        %v4936 = vpop.f32.mrb[0].mxu0
        %v4937 = vadd.f32 %v4853, %v4936
        %v4938 = vpop.f32.mrb[0].mxu0
        %v4939 = vpop.f32.mrb[0].mxu0
        %v4940 = vpop.f32.mrb[0].mxu0
        %4941 = vdwg.mxu0
        %v4942 = vmax.f32 %v4937, 0.0
        %v4943 = vpack.c.bf16 %v4942, %v4942
        %v4944 = vld [vmem:[#allocation2 + $0x900] sm:$0xf]
        %v4945 = vld [vmem:[#allocation2 + $0x904] sm:$0xf]
        %v4946 = vld [vmem:[#allocation2 + $0x908] sm:$0xf]
        %v4947 = vld [vmem:[#allocation2 + $0x90c] sm:$0xf]
        %v4948 = vld [vmem:[#allocation2 + $0x910] sm:$0xf]
        %v4949 = vld [vmem:[#allocation2 + $0x914] sm:$0xf]
        %v4950 = vld [vmem:[#allocation2 + $0x918] sm:$0xf]
        %v4951 = vld [vmem:[#allocation2 + $0x91c] sm:$0xf]
        %v4952 = vld [vmem:[#allocation2 + $0x920] sm:$0xf]
        %v4953 = vld [vmem:[#allocation2 + $0x924] sm:$0xf]
        %v4954 = vld [vmem:[#allocation2 + $0x928] sm:$0xf]
        %v4955 = vld [vmem:[#allocation2 + $0x92c] sm:$0xf]
        %v4956 = vld [vmem:[#allocation2 + $0x930] sm:$0xf]
        %v4957 = vld [vmem:[#allocation2 + $0x934] sm:$0xf]
        %v4958 = vld [vmem:[#allocation2 + $0x938] sm:$0xf]
        %v4959 = vld [vmem:[#allocation2 + $0x93c] sm:$0xf]
        %v4960 = vld [vmem:[#allocation5 + $0x11] sm:$0x1]
        %v4961 = vlaneseq
        %v4962 = vshrl.u32 %v4961, 7
        %v4963 = vsub.s32 0, %v4962
        %v4964 = vrot.slane %v4960, %v4963
        %v4981 = vunpack.c.l.b16 %v4944
        %v4982 = vunpack.c.l.b16 %v4945
        %v4983 = vunpack.c.l.b16 %v4946
        %v4984 = vunpack.c.l.b16 %v4947
        %v4985 = vunpack.c.l.b16 %v4948
        %v4986 = vunpack.c.l.b16 %v4949
        %v4987 = vunpack.c.l.b16 %v4950
        %v4988 = vunpack.c.l.b16 %v4951
        %v4989 = vunpack.c.l.b16 %v4952
        %v4990 = vunpack.c.l.b16 %v4953
        %v4991 = vunpack.c.l.b16 %v4954
        %v4992 = vunpack.c.l.b16 %v4955
        %v4993 = vunpack.c.l.b16 %v4956
        %v4994 = vunpack.c.l.b16 %v4957
        %v4995 = vunpack.c.l.b16 %v4958
        %v4996 = vunpack.c.l.b16 %v4959
        %v4997 = vpack.c.b16 %v4982, %v4981
        %v4998 = vpack.c.b16 %v4984, %v4983
        %v4999 = vpack.c.b16 %v4986, %v4985
        %v5000 = vpack.c.b16 %v4988, %v4987
        %v5001 = vpack.c.b16 %v4990, %v4989
        %v5002 = vpack.c.b16 %v4992, %v4991
        %v5003 = vpack.c.b16 %v4994, %v4993
        %v5004 = vpack.c.b16 %v4996, %v4995
        %5013 = vmatprep.subr.bf16.mxu0 0
        %5014 = vmatpush1.bf16.msra.mxu0 %v4997
        %5015 = vmatprep.subr.bf16.mxu0 0
        %5016 = vmatpush1.bf16.msra.mxu0 %v4998
        %5017 = vmatprep.subr.bf16.mxu0 0
        %5018 = vmatpush1.bf16.msra.mxu0 %v4999
        %5019 = vmatprep.subr.bf16.mxu0 0
        %5020 = vmatpush1.bf16.msra.mxu0 %v5000
        %5021 = vmatprep.subr.bf16.mxu0 0
        %5022 = vmatpush1.bf16.msra.mxu0 %v5001
        %5023 = vmatprep.subr.bf16.mxu0 0
        %5024 = vmatpush1.bf16.msra.mxu0 %v5002
        %5025 = vmatprep.subr.bf16.mxu0 0
        %5026 = vmatpush1.bf16.msra.mxu0 %v5003
        %5027 = vmatprep.subr.bf16.mxu0 0
        %5028 = vmatpush1.bf16.msra.mxu0 %v5004
        %5029 = vmatprep.subr.bf16.mxu0 0
        %5030 = vmatpush1.bf16.msra.mxu0 0
        %5031 = vmatprep.subr.bf16.mxu0 0
        %5032 = vmatpush1.bf16.msra.mxu0 0
        %5033 = vmatprep.subr.bf16.mxu0 0
        %5034 = vmatpush1.bf16.msra.mxu0 0
        %5035 = vmatprep.subr.bf16.mxu0 0
        %5036 = vmatpush1.bf16.msra.mxu0 0
        %5037 = vmatprep.subr.bf16.mxu0 0
        %5038 = vmatpush1.bf16.msra.mxu0 0
        %5039 = vmatprep.subr.bf16.mxu0 0
        %5040 = vmatpush1.bf16.msra.mxu0 0
        %5041 = vmatprep.subr.bf16.mxu0 0
        %5042 = vmatpush1.bf16.msra.mxu0 0
        %5043 = vmatprep.subr.bf16.mxu0 0
        %5044 = vmatpush1.bf16.msra.mxu0 0
        %5045 = vmatprep.mubr.bf16.mxu0 0
        %5046 = vmatmul.mubr.bf16.gmra.mrb[0].mxu0 %v4943
        %v5047 = vpop.f32.mrb[0].mxu0
        %v5048 = vadd.f32 %v4964, %v5047
        %v5049 = vpop.f32.mrb[0].mxu0
        %v5050 = vpop.f32.mrb[0].mxu0
        %v5051 = vpop.f32.mrb[0].mxu0
        %5052 = vdwg.mxu0
        %v5053 = vmax.f32 %v5048, 0.0
        %v5054 = vunpack.c.l.bf16 %v4832
        %v5055 = vadd.f32 %v5053, %v5054
        %v5056 = vmax.f32 %v5055, 0.0
        %v5057 = vrot.slane %v5056, 4
        %v5058 = vadd.f32 %v5056, %v5057
        %v5059 = vrot.slane %v5058, 2
        %v5060 = vadd.f32 %v5058, %v5059
        %v5061 = vrot.slane %v5060, 1
        %v5062 = vadd.f32 %v5060, %v5061
        %v5063 = vpack.c.bf16 %v5062, %v5062
        %v5064 = vld [vmem:[#allocation2 + $0x940] sm:$0xf]
        %v5065 = vld [vmem:[#allocation2 + $0x944] sm:$0xf]
        %v5066 = vld [vmem:[#allocation2 + $0x948] sm:$0xf]
        %v5067 = vld [vmem:[#allocation2 + $0x94c] sm:$0xf]
        %v5068 = vld [vmem:[#allocation2 + $0x950] sm:$0xf]
        %v5069 = vld [vmem:[#allocation2 + $0x954] sm:$0xf]
        %v5070 = vld [vmem:[#allocation2 + $0x958] sm:$0xf]
        %v5071 = vld [vmem:[#allocation2 + $0x95c] sm:$0xf]
        %v5072 = vld [vmem:[#allocation2 + $0x960] sm:$0xf]
        %v5073 = vld [vmem:[#allocation2 + $0x964] sm:$0xf]
        %v5074 = vld [vmem:[#allocation2 + $0x968] sm:$0xf]
        %v5075 = vld [vmem:[#allocation2 + $0x96c] sm:$0xf]
        %v5076 = vld [vmem:[#allocation2 + $0x970] sm:$0xf]
        %v5077 = vld [vmem:[#allocation2 + $0x974] sm:$0xf]
        %v5078 = vld [vmem:[#allocation2 + $0x978] sm:$0xf]
        %v5079 = vld [vmem:[#allocation2 + $0x97c] sm:$0xf]
        %v5080 = vld [vmem:[#allocation5 + $0x12] sm:$0x1]
        %v5097 = vunpack.c.l.b16 %v5064
        %v5098 = vunpack.c.l.b16 %v5065
        %v5099 = vunpack.c.l.b16 %v5066
        %v5100 = vunpack.c.l.b16 %v5067
        %v5101 = vunpack.c.l.b16 %v5068
        %v5102 = vunpack.c.l.b16 %v5069
        %v5103 = vunpack.c.l.b16 %v5070
        %v5104 = vunpack.c.l.b16 %v5071
        %v5105 = vunpack.c.l.b16 %v5072
        %v5106 = vunpack.c.l.b16 %v5073
        %v5107 = vunpack.c.l.b16 %v5074
        %v5108 = vunpack.c.l.b16 %v5075
        %v5109 = vunpack.c.l.b16 %v5076
        %v5110 = vunpack.c.l.b16 %v5077
        %v5111 = vunpack.c.l.b16 %v5078
        %v5112 = vunpack.c.l.b16 %v5079
        %v5113 = vpack.c.b16 %v5098, %v5097
        %v5114 = vpack.c.b16 %v5100, %v5099
        %v5115 = vpack.c.b16 %v5102, %v5101
        %v5116 = vpack.c.b16 %v5104, %v5103
        %v5117 = vpack.c.b16 %v5106, %v5105
        %v5118 = vpack.c.b16 %v5108, %v5107
        %v5119 = vpack.c.b16 %v5110, %v5109
        %v5120 = vpack.c.b16 %v5112, %v5111
        %5129 = vmatprep.subr.bf16.mxu0 0
        %5130 = vmatpush1.bf16.msra.mxu0 %v5113
        %5131 = vmatprep.subr.bf16.mxu0 0
        %5132 = vmatpush1.bf16.msra.mxu0 %v5114
        %5133 = vmatprep.subr.bf16.mxu0 0
        %5134 = vmatpush1.bf16.msra.mxu0 %v5115
        %5135 = vmatprep.subr.bf16.mxu0 0
        %5136 = vmatpush1.bf16.msra.mxu0 %v5116
        %5137 = vmatprep.subr.bf16.mxu0 0
        %5138 = vmatpush1.bf16.msra.mxu0 %v5117
        %5139 = vmatprep.subr.bf16.mxu0 0
        %5140 = vmatpush1.bf16.msra.mxu0 %v5118
        %5141 = vmatprep.subr.bf16.mxu0 0
        %5142 = vmatpush1.bf16.msra.mxu0 %v5119
        %5143 = vmatprep.subr.bf16.mxu0 0
        %5144 = vmatpush1.bf16.msra.mxu0 %v5120
        %5145 = vmatprep.subr.bf16.mxu0 0
        %5146 = vmatpush1.bf16.msra.mxu0 0
        %5147 = vmatprep.subr.bf16.mxu0 0
        %5148 = vmatpush1.bf16.msra.mxu0 0
        %5149 = vmatprep.subr.bf16.mxu0 0
        %5150 = vmatpush1.bf16.msra.mxu0 0
        %5151 = vmatprep.subr.bf16.mxu0 0
        %5152 = vmatpush1.bf16.msra.mxu0 0
        %5153 = vmatprep.subr.bf16.mxu0 0
        %5154 = vmatpush1.bf16.msra.mxu0 0
        %5155 = vmatprep.subr.bf16.mxu0 0
        %5156 = vmatpush1.bf16.msra.mxu0 0
        %5157 = vmatprep.subr.bf16.mxu0 0
        %5158 = vmatpush1.bf16.msra.mxu0 0
        %5159 = vmatprep.subr.bf16.mxu0 0
        %5160 = vmatpush1.bf16.msra.mxu0 0
        %5161 = vmatprep.mubr.bf16.mxu0 0
        %5162 = vmatmul.mubr.bf16.gmra.mrb[0].mxu0 %v5063
        %v5163 = vpop.f32.mrb[0].mxu0
        %v5164 = vadd.f32 %v5080, %v5163
        %v5165 = vpop.f32.mrb[0].mxu0
        %v5166 = vpop.f32.mrb[0].mxu0
        %v5167 = vpop.f32.mrb[0].mxu0
        %5168 = vdwg.mxu0
        %5169 = vst [vmem:[%s219] sm:$0x1] %v5164
        %s5170 = sand.u32 %s117, 1
        %s5171 = scalar_lea.sflag [#allocation4], %s5170
        %s5172 = sand.u32 %s117, 1
        %s5173 = scalar_lea.vmem [#allocation7], %s5172
        // Predicated region
        $region45: #{_forward_impl.1} parent=35 // pred_check
          %p5174 = pneg %p127
        $region46: #{_forward_impl.1} parent=35 // pred_check_branch
          %5176 = sbr.rel (%p5174) target = $region48
        $region47: #{_forward_impl.1} parent=35 // pred_region
          %s5178 = ssub.s32 16, 16
          %5179 = vsyncadd %s5171, %s5178
          %s5180 = smul.addr %s20, 16
          %s5181 = scalar_lea.hbm %s4, %s5180
          %s5183 = sshll.u32 %s5173, 4
          %s5184 = int_to_ptr.vmem [resolvable:$true] %s5183
          %5186 = dma.vmem_to_hbm [thread:$0]  %s5184, 16, %s5181, %s5171
        $region48: #{_forward_impl.1} parent=35 // pred_fallthru
          _
      $region36: #{_forward_impl.1} parent=5 // pred_fallthru
        _
      %p5187 = scmp.le.s32.totalorder 2, %s15
      // Predicated region
      $region49: #{_forward_impl.1} parent=5 // pred_check
        %p5188 = pneg %p5187
      $region50: #{_forward_impl.1} parent=5 // pred_check_branch
        %5190 = sbr.rel (%p5188) target = $region52
      $region51: #{_forward_impl.1} parent=5 // pred_region
        %s5191 = ssub.s32 %s15, 2
        // Predicated region
        $region53: #{_forward_impl.1} parent=51 // pred_check
          %p5192 = pneg %p133
        $region54: #{_forward_impl.1} parent=51 // pred_check_branch
          %5194 = sbr.rel (%p5192) target = $region56
        $region55: #{_forward_impl.1} parent=51 // pred_region
          %s5195 = sand.u32 %s118, 1
          %s5196 = scalar_lea.sflag [#allocation4], %s5195
          %s5197 = sand.u32 %s118, 1
          %s5198 = scalar_lea.vmem [#allocation7], %s5197
          %5199 = dma.done %s5196, 16
        $region56: #{_forward_impl.1} parent=51 // pred_fallthru
          _
      $region52: #{_forward_impl.1} parent=5 // pred_fallthru
        _
    $region6: #{_forward_impl.1} parent=1 // loop_footer
      %s19 = sadd.s32 1, %s15
    $region7: #{_forward_impl.1} parent=1 // loop_footer_branch
      %14 = sbr.rel target = $region3
    $region8: #{_forward_impl.1} parent=1 // loop_exit
      _
    %5200 = vsyncpa [#allocation3], 1
    %s5201 = scalar_lea.sflag [#allocation3], 1
    %5202 = vsyncpa %s5201, 1
    %5203 = vsyncpa [#allocation6], 1
    %5204 = vsyncpa [#allocation4], 1
    %s5205 = scalar_lea.sflag [#allocation4], 1
    %5206 = vsyncpa %s5205, 1

</llo_original>
